<compile_context>
chip_gen: v7x
topology: tpu7x:2x2x1
jax: 0.10.0
libtpu: 0.0.40
codegen_flags: <defaults>
</compile_context>

<pallas_src>
import jax
import jax.numpy as jnp
from jax.experimental import pallas as pl
from jax.experimental.pallas import tpu as pltpu

LANE = 128


def _basic_block_kernel(xpad_ref, w1_ref, s1_ref, b1_ref,
                        w2_ref, s2_ref, b2_ref,
                        out_ref, stage_ref):
    # xpad_ref : (1, H+4, W+2, Cp) bf16  spatially padded (2-row / 1-col halo) and
    #            channel-padded input; its block index depends only on the batch
    #            axis, so it stays resident in VMEM across the H tiles of an image.
    # w1/w2    : (9, Cp, Cp) bf16        conv weights, tap-major (kh*3 + kw)
    # s1/b1,s2/b2 : (1, Cp) f32          folded BN scale / bias
    # out_ref  : (1, Ht, W, Cp) f32      output tile
    # stage_ref: VMEM (Ht+2, W+32, Cp) bf16  conv2 input staging: interior at cols
    #            [16, 16+W) (bf16 sublane-tile aligned), 1-px W halo at cols 15, W+16.
    Ht = out_ref.shape[1]
    W = out_ref.shape[2]
    Cp = out_ref.shape[3]
    He = Ht + 2                                # conv1 rows incl. conv2 row halo
    H = Ht * pl.num_programs(1)                # full output height

    ht = pl.program_id(1)
    r0 = pl.multiple_of(ht * Ht, Ht)           # first output row of this tile

    # ---- conv1 + BN1 + ReLU on Ht+2 rows: 9 accumulated MXU dots ------------
    xw = xpad_ref[0, pl.ds(r0, Ht + 4), :, :]              # (Ht+4, W+2, Cp) bf16
    acc1 = jnp.zeros((He * W, Cp), jnp.float32)
    for kw in range(3):
        slab = xw[:, kw:kw + W, :]                         # (Ht+4, W, Cp) bf16
        for kh in range(3):
            lhs = slab[kh:kh + He].reshape(He * W, Cp)
            acc1 = acc1 + jnp.dot(lhs, w1_ref[3 * kh + kw],
                                  preferred_element_type=jnp.float32)
    out1 = jnp.maximum(acc1 * s1_ref[...] + b1_ref[...], 0.0).reshape(He, W, Cp)

    # Rows outside the image are conv2's SAME padding -> force to zero
    # (conv1 of zero input would be relu(bn1 bias), which is not zero).
    row = jax.lax.broadcasted_iota(jnp.int32, (He, 1, 1), 0) + (r0 - 1)
    out1 = jnp.where((row >= 0) & (row < H), out1, 0.0)

    # ---- stage conv2 input: bf16, aligned interior, zeroed 1-px W halo -----
    stage_ref[:, 15:16, :] = jnp.zeros((He, 1, Cp), jnp.bfloat16)
    stage_ref[:, W + 16:W + 17, :] = jnp.zeros((He, 1, Cp), jnp.bfloat16)
    stage_ref[:, 16:16 + W, :] = out1.astype(jnp.bfloat16)

    # ---- conv2: 9 accumulated MXU dots --------------------------------------
    acc2 = jnp.zeros((Ht * W, Cp), jnp.float32)
    for kw in range(3):
        slab = stage_ref[:, 15 + kw:15 + kw + W, :]        # (Ht+2, W, Cp) bf16
        for kh in range(3):
            lhs = slab[kh:kh + Ht].reshape(Ht * W, Cp)
            acc2 = acc2 + jnp.dot(lhs, w2_ref[3 * kh + kw],
                                  preferred_element_type=jnp.float32)

    # ---- BN2 + residual add + final ReLU (identity read at point of use) ----
    ident = xpad_ref[0, pl.ds(r0 + 2, Ht), :, :][:, 1:1 + W, :]
    ident = ident.astype(jnp.float32).reshape(Ht * W, Cp)
    res = jnp.maximum(acc2 * s2_ref[...] + b2_ref[...] + ident, 0.0)
    out_ref[...] = res.reshape(1, Ht, W, Cp).astype(out_ref.dtype)


def _conv_weight_taps(w, cin, cout, cp):
    # PyTorch (Cout, Cin, 3, 3) -> (kh, kw, Cin, Cout) -> (9, Cin, Cout) -> pad -> bf16
    wk = jnp.transpose(w, (2, 3, 1, 0)).reshape(9, cin, cout)
    wk = jnp.pad(wk, ((0, 0), (0, cp - cin), (0, cp - cout)))
    return wk.astype(jnp.bfloat16)


def _fold_bn(gamma, beta, mean, var, cout, cp, eps):
    inv = gamma / jnp.sqrt(var + eps)
    scale = jnp.pad(inv, (0, cp - cout)).reshape(1, cp).astype(jnp.float32)
    bias = jnp.pad(beta - mean * inv, (0, cp - cout)).reshape(1, cp).astype(jnp.float32)
    return scale, bias


def _pick_tile_h(h):
    for cand in (8, 16, 4, 2, 1):
        if h % cand == 0:
            return cand
    return h


def basic_block(x_nchw, params, eps=1e-5, tile_h=None):
    """BasicBlock forward (inference-mode BN). x_nchw: (N, C, H, W) float32.

    TODO(synk): when chaining blocks, keep channel-padded NHWC bf16 activations in
    HBM between blocks and drop the per-block NCHW<->NHWC transposes, channel
    pad/slice and f32<->bf16 casts below (they are memory-bound wrapper passes).
    """
    w1, g1, be1, m1, v1 = (params[k] for k in ("w1", "gamma1", "beta1", "mean1", "var1"))
    w2, g2, be2, m2, v2 = (params[k] for k in ("w2", "gamma2", "beta2", "mean2", "var2"))

    x = jnp.transpose(x_nchw, (0, 2, 3, 1))                # NCHW -> NHWC
    N, H, W, Cin = x.shape
    Cout = w1.shape[0]
    assert Cin == Cout, "BasicBlock with stride=1 / no downsample needs inplanes == planes"

    Cp = ((max(Cin, Cout) + LANE - 1) // LANE) * LANE      # lane-dense channel pad
    Ht = tile_h if tile_h is not None else _pick_tile_h(H)
    assert H % Ht == 0

    # 2-row / 1-col spatial halo + channel pad + bf16 cast in one wrapper pass.
    xpad = jnp.pad(x, ((0, 0), (2, 2), (1, 1), (0, Cp - Cin))).astype(jnp.bfloat16)

    w1k = _conv_weight_taps(w1, Cin, Cout, Cp)
    w2k = _conv_weight_taps(w2, Cout, Cout, Cp)
    s1, b1 = _fold_bn(g1, be1, m1, v1, Cout, Cp, eps)
    s2, b2 = _fold_bn(g2, be2, m2, v2, Cout, Cp, eps)

    out_nhwc = pl.pallas_call(
        _basic_block_kernel,
        out_shape=jax.ShapeDtypeStruct((N, H, W, Cp), jnp.float32),
        grid_spec=pltpu.PrefetchScalarGridSpec(
            num_scalar_prefetch=0,
            grid=(N, H // Ht),
            in_specs=[
                pl.BlockSpec((1, H + 4, W + 2, Cp), lambda n, h: (n, 0, 0, 0)),
                pl.BlockSpec((9, Cp, Cp), lambda n, h: (0, 0, 0)),
                pl.BlockSpec((1, Cp), lambda n, h: (0, 0)),
                pl.BlockSpec((1, Cp), lambda n, h: (0, 0)),
                pl.BlockSpec((9, Cp, Cp), lambda n, h: (0, 0, 0)),
                pl.BlockSpec((1, Cp), lambda n, h: (0, 0)),
                pl.BlockSpec((1, Cp), lambda n, h: (0, 0)),
            ],
            out_specs=pl.BlockSpec((1, Ht, W, Cp), lambda n, h: (n, h, 0, 0)),
            scratch_shapes=[pltpu.VMEM((Ht + 2, W + 32, Cp), jnp.bfloat16)],
        ),
        compiler_params=pltpu.CompilerParams(
            dimension_semantics=("parallel", "parallel"),
            # After H-tiling the live set is a few MB; 32 MiB fits the scoped
            # headroom of every generation (incl. v7x's 64 MiB physical VMEM).
            vmem_limit_bytes=32 * 1024 * 1024),
    )(xpad, w1k, s1, b1, w2k, s2, b2)

    # drop channel padding, NHWC -> NCHW
    return jnp.transpose(out_nhwc[..., :Cout], (0, 3, 1, 2))


def _reference_basic_block(x, params, eps=1e-5):
    """Pure-JAX reference mirroring the PyTorch forward (inference-mode BN)."""
    def bn(y, g, b, m, v):
        sh = (1, -1, 1, 1)
        return (y - m.reshape(sh)) / jnp.sqrt(v.reshape(sh) + eps) * g.reshape(sh) + b.reshape(sh)

    def conv(y, w):
        return jax.lax.conv_general_dilated(
            y, w, window_strides=(1, 1), padding="SAME",
            dimension_numbers=("NCHW", "OIHW", "NCHW"))

    out = jax.nn.relu(bn(conv(x, params["w1"]),
                         params["gamma1"], params["beta1"], params["mean1"], params["var1"]))
    out = bn(conv(out, params["w2"]),
             params["gamma2"], params["beta2"], params["mean2"], params["var2"]) + x
    return jax.nn.relu(out)


def _init_params(key, planes):
    ks = jax.random.split(key, 8)
    fan_in = planes * 9
    std = (2.0 / fan_in) ** 0.5
    return {
        "w1": std * jax.random.normal(ks[0], (planes, planes, 3, 3), jnp.float32),
        "gamma1": 1.0 + 0.1 * jax.random.normal(ks[1], (planes,), jnp.float32),
        "beta1": 0.1 * jax.random.normal(ks[2], (planes,), jnp.float32),
        "mean1": 0.1 * jax.random.normal(ks[3], (planes,), jnp.float32),
        "var1": 1.0 + 0.1 * jax.random.uniform(ks[4], (planes,), jnp.float32),
        "w2": std * jax.random.normal(ks[5], (planes, planes, 3, 3), jnp.float32),
        "gamma2": 1.0 + 0.1 * jax.random.normal(ks[6], (planes,), jnp.float32),
        "beta2": 0.1 * jax.random.normal(ks[7], (planes,), jnp.float32),
        "mean2": 0.05 * jnp.ones((planes,), jnp.float32),
        "var2": 0.9 * jnp.ones((planes,), jnp.float32),
    }


if __name__ == "__main__":
    key = jax.random.PRNGKey(0)
    k_x, k_p = jax.random.split(key)

    N, C, H, W = 2, 8, 16, 16          # small shapes: batch=2, channels=8, spatial=16
    x = jax.random.normal(k_x, (N, C, H, W), jnp.float32)
    params = _init_params(k_p, C)

    out = jax.block_until_ready(basic_block(x, params))   # H=16 -> Ht=8, 2 H-tiles
    ref = _reference_basic_block(x, params)

    assert out.shape == ref.shape == (N, C, H, W)
    max_err = float(jnp.max(jnp.abs(out - ref)))
    # bf16 activations/weights on the MXU with f32 accumulation (and a bf16-rounded
    # residual identity) -> allow a few 1e-2 absolute error vs the f32 reference.
    assert max_err < 5e-2, f"mismatch vs reference: max abs err = {max_err}"

    print("KERNEL_OK")
</pallas_src>

<mosaic_0001>
module attributes {stable_mosaic.version = 11 : i64} {
  func.func @_basic_block_kernel(%arg0: i32, %arg1: i32, %arg2: memref<1x20x18x128xbf16, #tpu.memory_space<vmem>>, %arg3: memref<9x128x128xbf16, #tpu.memory_space<vmem>>, %arg4: memref<1x128xf32, #tpu.memory_space<vmem>>, %arg5: memref<1x128xf32, #tpu.memory_space<vmem>>, %arg6: memref<9x128x128xbf16, #tpu.memory_space<vmem>>, %arg7: memref<1x128xf32, #tpu.memory_space<vmem>>, %arg8: memref<1x128xf32, #tpu.memory_space<vmem>>, %arg9: memref<1x8x16x128xf32, #tpu.memory_space<vmem>>, %arg10: memref<10x48x128xbf16, #tpu.memory_space<vmem>>) attributes {dimension_semantics = [#tpu.dimension_semantics<parallel>, #tpu.dimension_semantics<parallel>], iteration_bounds = array<i64: 2, 2>, scalar_prefetch = 0 : i64, scratch_operands = 1 : i64, tpu.core_type = #tpu.core_type<tc>, window_params = [{transform_indices = @transform_0, window_bounds = array<i64: 1, 20, 18, 128>}, {pipeline_mode = #tpu.pipeline_mode<synchronous>, transform_indices = @transform_1, window_bounds = array<i64: 9, 128, 128>}, {pipeline_mode = #tpu.pipeline_mode<synchronous>, transform_indices = @transform_2, window_bounds = array<i64: 1, 128>}, {pipeline_mode = #tpu.pipeline_mode<synchronous>, transform_indices = @transform_3, window_bounds = array<i64: 1, 128>}, {pipeline_mode = #tpu.pipeline_mode<synchronous>, transform_indices = @transform_4, window_bounds = array<i64: 9, 128, 128>}, {pipeline_mode = #tpu.pipeline_mode<synchronous>, transform_indices = @transform_5, window_bounds = array<i64: 1, 128>}, {pipeline_mode = #tpu.pipeline_mode<synchronous>, transform_indices = @transform_6, window_bounds = array<i64: 1, 128>}, {transform_indices = @transform_7, window_bounds = array<i64: 1, 8, 16, 128>}]} {
    %c8_i32 = arith.constant 8 : i32
    %0 = arith.muli %arg1, %c8_i32 : i32
    %1 = tpu.assume_multiple %0, 8 : i32
    %c0 = arith.constant 0 : index
    %2 = arith.index_cast %1 : i32 to index
    %c0_0 = arith.constant 0 : index
    %c0_1 = arith.constant 0 : index
    %3 = vector.load %arg2[%c0, %2, %c0_0, %c0_1] : memref<1x20x18x128xbf16, #tpu.memory_space<vmem>>, vector<1x12x18x128xbf16>
    %4 = vector.shape_cast %3 : vector<1x12x18x128xbf16> to vector<12x18x128xbf16>
    %cst = arith.constant 0.000000e+00 : f32
    %5 = vector.broadcast %cst : f32 to vector<160x128xf32>
    %6 = vector.extract_strided_slice %4 {offsets = [0, 0, 0], sizes = [12, 16, 128], strides = [1, 1, 1]} : vector<12x18x128xbf16> to vector<12x16x128xbf16>
    %7 = vector.extract_strided_slice %6 {offsets = [0, 0, 0], sizes = [10, 16, 128], strides = [1, 1, 1]} : vector<12x16x128xbf16> to vector<10x16x128xbf16>
    %8 = vector.shape_cast %7 : vector<10x16x128xbf16> to vector<160x128xbf16>
    %c0_2 = arith.constant 0 : index
    %c0_3 = arith.constant 0 : index
    %c0_4 = arith.constant 0 : index
    %9 = vector.load %arg3[%c0_2, %c0_3, %c0_4] : memref<9x128x128xbf16, #tpu.memory_space<vmem>>, vector<1x128x128xbf16>
    %10 = vector.shape_cast %9 : vector<1x128x128xbf16> to vector<128x128xbf16>
    %cst_5 = arith.constant dense<0.000000e+00> : vector<160x128xf32>
    %11 = tpu.matmul %8, %10, %cst_5 {dimension_numbers = #tpu.dot_dimension_numbers<[1], [0], [0], [1], [0, 0, 1, 1], [], []>} : vector<160x128xbf16>, vector<128x128xbf16>, vector<160x128xf32> -> vector<160x128xf32>
    %12 = arith.addf %5, %11 : vector<160x128xf32>
    %13 = vector.extract_strided_slice %6 {offsets = [1, 0, 0], sizes = [10, 16, 128], strides = [1, 1, 1]} : vector<12x16x128xbf16> to vector<10x16x128xbf16>
    %14 = vector.shape_cast %13 : vector<10x16x128xbf16> to vector<160x128xbf16>
    %c3 = arith.constant 3 : index
    %c0_6 = arith.constant 0 : index
    %c0_7 = arith.constant 0 : index
    %15 = vector.load %arg3[%c3, %c0_6, %c0_7] : memref<9x128x128xbf16, #tpu.memory_space<vmem>>, vector<1x128x128xbf16>
    %16 = vector.shape_cast %15 : vector<1x128x128xbf16> to vector<128x128xbf16>
    %cst_8 = arith.constant dense<0.000000e+00> : vector<160x128xf32>
    %17 = tpu.matmul %14, %16, %cst_8 {dimension_numbers = #tpu.dot_dimension_numbers<[1], [0], [0], [1], [0, 0, 1, 1], [], []>} : vector<160x128xbf16>, vector<128x128xbf16>, vector<160x128xf32> -> vector<160x128xf32>
    %18 = arith.addf %12, %17 : vector<160x128xf32>
    %19 = vector.extract_strided_slice %6 {offsets = [2, 0, 0], sizes = [10, 16, 128], strides = [1, 1, 1]} : vector<12x16x128xbf16> to vector<10x16x128xbf16>
    %20 = vector.shape_cast %19 : vector<10x16x128xbf16> to vector<160x128xbf16>
    %c6 = arith.constant 6 : index
    %c0_9 = arith.constant 0 : index
    %c0_10 = arith.constant 0 : index
    %21 = vector.load %arg3[%c6, %c0_9, %c0_10] : memref<9x128x128xbf16, #tpu.memory_space<vmem>>, vector<1x128x128xbf16>
    %22 = vector.shape_cast %21 : vector<1x128x128xbf16> to vector<128x128xbf16>
    %cst_11 = arith.constant dense<0.000000e+00> : vector<160x128xf32>
    %23 = tpu.matmul %20, %22, %cst_11 {dimension_numbers = #tpu.dot_dimension_numbers<[1], [0], [0], [1], [0, 0, 1, 1], [], []>} : vector<160x128xbf16>, vector<128x128xbf16>, vector<160x128xf32> -> vector<160x128xf32>
    %24 = arith.addf %18, %23 : vector<160x128xf32>
    %25 = vector.extract_strided_slice %4 {offsets = [0, 1, 0], sizes = [12, 16, 128], strides = [1, 1, 1]} : vector<12x18x128xbf16> to vector<12x16x128xbf16>
    %26 = vector.extract_strided_slice %25 {offsets = [0, 0, 0], sizes = [10, 16, 128], strides = [1, 1, 1]} : vector<12x16x128xbf16> to vector<10x16x128xbf16>
    %27 = vector.shape_cast %26 : vector<10x16x128xbf16> to vector<160x128xbf16>
    %c1 = arith.constant 1 : index
    %c0_12 = arith.constant 0 : index
    %c0_13 = arith.constant 0 : index
    %28 = vector.load %arg3[%c1, %c0_12, %c0_13] : memref<9x128x128xbf16, #tpu.memory_space<vmem>>, vector<1x128x128xbf16>
    %29 = vector.shape_cast %28 : vector<1x128x128xbf16> to vector<128x128xbf16>
    %cst_14 = arith.constant dense<0.000000e+00> : vector<160x128xf32>
    %30 = tpu.matmul %27, %29, %cst_14 {dimension_numbers = #tpu.dot_dimension_numbers<[1], [0], [0], [1], [0, 0, 1, 1], [], []>} : vector<160x128xbf16>, vector<128x128xbf16>, vector<160x128xf32> -> vector<160x128xf32>
    %31 = arith.addf %24, %30 : vector<160x128xf32>
    %32 = vector.extract_strided_slice %25 {offsets = [1, 0, 0], sizes = [10, 16, 128], strides = [1, 1, 1]} : vector<12x16x128xbf16> to vector<10x16x128xbf16>
    %33 = vector.shape_cast %32 : vector<10x16x128xbf16> to vector<160x128xbf16>
    %c4 = arith.constant 4 : index
    %c0_15 = arith.constant 0 : index
    %c0_16 = arith.constant 0 : index
    %34 = vector.load %arg3[%c4, %c0_15, %c0_16] : memref<9x128x128xbf16, #tpu.memory_space<vmem>>, vector<1x128x128xbf16>
    %35 = vector.shape_cast %34 : vector<1x128x128xbf16> to vector<128x128xbf16>
    %cst_17 = arith.constant dense<0.000000e+00> : vector<160x128xf32>
    %36 = tpu.matmul %33, %35, %cst_17 {dimension_numbers = #tpu.dot_dimension_numbers<[1], [0], [0], [1], [0, 0, 1, 1], [], []>} : vector<160x128xbf16>, vector<128x128xbf16>, vector<160x128xf32> -> vector<160x128xf32>
    %37 = arith.addf %31, %36 : vector<160x128xf32>
    %38 = vector.extract_strided_slice %25 {offsets = [2, 0, 0], sizes = [10, 16, 128], strides = [1, 1, 1]} : vector<12x16x128xbf16> to vector<10x16x128xbf16>
    %39 = vector.shape_cast %38 : vector<10x16x128xbf16> to vector<160x128xbf16>
    %c7 = arith.constant 7 : index
    %c0_18 = arith.constant 0 : index
    %c0_19 = arith.constant 0 : index
    %40 = vector.load %arg3[%c7, %c0_18, %c0_19] : memref<9x128x128xbf16, #tpu.memory_space<vmem>>, vector<1x128x128xbf16>
    %41 = vector.shape_cast %40 : vector<1x128x128xbf16> to vector<128x128xbf16>
    %cst_20 = arith.constant dense<0.000000e+00> : vector<160x128xf32>
    %42 = tpu.matmul %39, %41, %cst_20 {dimension_numbers = #tpu.dot_dimension_numbers<[1], [0], [0], [1], [0, 0, 1, 1], [], []>} : vector<160x128xbf16>, vector<128x128xbf16>, vector<160x128xf32> -> vector<160x128xf32>
    %43 = arith.addf %37, %42 : vector<160x128xf32>
    %44 = vector.extract_strided_slice %4 {offsets = [0, 2, 0], sizes = [12, 16, 128], strides = [1, 1, 1]} : vector<12x18x128xbf16> to vector<12x16x128xbf16>
    %45 = vector.extract_strided_slice %44 {offsets = [0, 0, 0], sizes = [10, 16, 128], strides = [1, 1, 1]} : vector<12x16x128xbf16> to vector<10x16x128xbf16>
    %46 = vector.shape_cast %45 : vector<10x16x128xbf16> to vector<160x128xbf16>
    %c2 = arith.constant 2 : index
    %c0_21 = arith.constant 0 : index
    %c0_22 = arith.constant 0 : index
    %47 = vector.load %arg3[%c2, %c0_21, %c0_22] : memref<9x128x128xbf16, #tpu.memory_space<vmem>>, vector<1x128x128xbf16>
    %48 = vector.shape_cast %47 : vector<1x128x128xbf16> to vector<128x128xbf16>
    %cst_23 = arith.constant dense<0.000000e+00> : vector<160x128xf32>
    %49 = tpu.matmul %46, %48, %cst_23 {dimension_numbers = #tpu.dot_dimension_numbers<[1], [0], [0], [1], [0, 0, 1, 1], [], []>} : vector<160x128xbf16>, vector<128x128xbf16>, vector<160x128xf32> -> vector<160x128xf32>
    %50 = arith.addf %43, %49 : vector<160x128xf32>
    %51 = vector.extract_strided_slice %44 {offsets = [1, 0, 0], sizes = [10, 16, 128], strides = [1, 1, 1]} : vector<12x16x128xbf16> to vector<10x16x128xbf16>
    %52 = vector.shape_cast %51 : vector<10x16x128xbf16> to vector<160x128xbf16>
    %c5 = arith.constant 5 : index
    %c0_24 = arith.constant 0 : index
    %c0_25 = arith.constant 0 : index
    %53 = vector.load %arg3[%c5, %c0_24, %c0_25] : memref<9x128x128xbf16, #tpu.memory_space<vmem>>, vector<1x128x128xbf16>
    %54 = vector.shape_cast %53 : vector<1x128x128xbf16> to vector<128x128xbf16>
    %cst_26 = arith.constant dense<0.000000e+00> : vector<160x128xf32>
    %55 = tpu.matmul %52, %54, %cst_26 {dimension_numbers = #tpu.dot_dimension_numbers<[1], [0], [0], [1], [0, 0, 1, 1], [], []>} : vector<160x128xbf16>, vector<128x128xbf16>, vector<160x128xf32> -> vector<160x128xf32>
    %56 = arith.addf %50, %55 : vector<160x128xf32>
    %57 = vector.extract_strided_slice %44 {offsets = [2, 0, 0], sizes = [10, 16, 128], strides = [1, 1, 1]} : vector<12x16x128xbf16> to vector<10x16x128xbf16>
    %58 = vector.shape_cast %57 : vector<10x16x128xbf16> to vector<160x128xbf16>
    %c8 = arith.constant 8 : index
    %c0_27 = arith.constant 0 : index
    %c0_28 = arith.constant 0 : index
    %59 = vector.load %arg3[%c8, %c0_27, %c0_28] : memref<9x128x128xbf16, #tpu.memory_space<vmem>>, vector<1x128x128xbf16>
    %60 = vector.shape_cast %59 : vector<1x128x128xbf16> to vector<128x128xbf16>
    %cst_29 = arith.constant dense<0.000000e+00> : vector<160x128xf32>
    %61 = tpu.matmul %58, %60, %cst_29 {dimension_numbers = #tpu.dot_dimension_numbers<[1], [0], [0], [1], [0, 0, 1, 1], [], []>} : vector<160x128xbf16>, vector<128x128xbf16>, vector<160x128xf32> -> vector<160x128xf32>
    %62 = arith.addf %56, %61 : vector<160x128xf32>
    %c0_30 = arith.constant 0 : index
    %c0_31 = arith.constant 0 : index
    %63 = vector.load %arg4[%c0_30, %c0_31] : memref<1x128xf32, #tpu.memory_space<vmem>>, vector<1x128xf32>
    %64 = vector.broadcast %63 : vector<1x128xf32> to vector<160x128xf32>
    %65 = arith.mulf %62, %64 : vector<160x128xf32>
    %c0_32 = arith.constant 0 : index
    %c0_33 = arith.constant 0 : index
    %66 = vector.load %arg5[%c0_32, %c0_33] : memref<1x128xf32, #tpu.memory_space<vmem>>, vector<1x128xf32>
    %67 = vector.broadcast %66 : vector<1x128xf32> to vector<160x128xf32>
    %68 = arith.addf %65, %67 : vector<160x128xf32>
    %cst_34 = arith.constant 0.000000e+00 : f32
    %69 = vector.broadcast %cst_34 : f32 to vector<160x128xf32>
    %70 = arith.maximumf %68, %69 : vector<160x128xf32>
    %71 = vector.shape_cast %70 : vector<160x128xf32> to vector<10x16x128xf32>
    %72 = tpu.iota {dimensions = array<i32: 0>} : vector<10x1x1xi32>
    %c1_i32 = arith.constant 1 : i32
    %73 = arith.subi %1, %c1_i32 : i32
    %74 = vector.broadcast %73 : i32 to vector<10x1x1xi32>
    %75 = arith.addi %72, %74 : vector<10x1x1xi32>
    %c0_i32 = arith.constant 0 : i32
    %76 = vector.broadcast %c0_i32 : i32 to vector<10x1x1xi32>
    %77 = arith.cmpi sge, %75, %76 : vector<10x1x1xi32>
    %c16_i32 = arith.constant 16 : i32
    %78 = vector.broadcast %c16_i32 : i32 to vector<10x1x1xi32>
    %79 = arith.cmpi slt, %75, %78 : vector<10x1x1xi32>
    %80 = arith.andi %77, %79 : vector<10x1x1xi1>
    %cst_35 = arith.constant 0.000000e+00 : f32
    %81 = vector.shape_cast %80 : vector<10x1x1xi1> to vector<10x1x1xi1>
    %82 = vector.broadcast %81 : vector<10x1x1xi1> to vector<10x16x128xi1>
    %83 = vector.broadcast %cst_35 : f32 to vector<10x16x128xf32>
    %84 = arith.select %82, %71, %83 : vector<10x16x128xi1>, vector<10x16x128xf32>
    %cst_36 = arith.constant 0.000000e+00 : bf16
    %85 = vector.broadcast %cst_36 : bf16 to vector<10x1x128xbf16>
    %c0_37 = arith.constant 0 : index
    %c15 = arith.constant 15 : index
    %c0_38 = arith.constant 0 : index
    %86 = vector.load %arg10[%c0_37, %c15, %c0_38] : memref<10x48x128xbf16, #tpu.memory_space<vmem>>, vector<10x1x128xbf16>
    tpu.vector_store %arg10[%c0_37, %c15, %c0_38], %85 {strides = array<i32>} : memref<10x48x128xbf16, #tpu.memory_space<vmem>>, vector<10x1x128xbf16>,
    %cst_39 = arith.constant 0.000000e+00 : bf16
    %87 = vector.broadcast %cst_39 : bf16 to vector<10x1x128xbf16>
    %c0_40 = arith.constant 0 : index
    %c32 = arith.constant 32 : index
    %c0_41 = arith.constant 0 : index
    %88 = vector.load %arg10[%c0_40, %c32, %c0_41] : memref<10x48x128xbf16, #tpu.memory_space<vmem>>, vector<10x1x128xbf16>
    tpu.vector_store %arg10[%c0_40, %c32, %c0_41], %87 {strides = array<i32>} : memref<10x48x128xbf16, #tpu.memory_space<vmem>>, vector<10x1x128xbf16>,
    %89 = arith.truncf %84 : vector<10x16x128xf32> to vector<10x16x128xbf16>
    %c0_42 = arith.constant 0 : index
    %c16 = arith.constant 16 : index
    %c0_43 = arith.constant 0 : index
    %90 = vector.load %arg10[%c0_42, %c16, %c0_43] : memref<10x48x128xbf16, #tpu.memory_space<vmem>>, vector<10x16x128xbf16>
    tpu.vector_store %arg10[%c0_42, %c16, %c0_43], %89 {strides = array<i32>} : memref<10x48x128xbf16, #tpu.memory_space<vmem>>, vector<10x16x128xbf16>,
    %cst_44 = arith.constant 0.000000e+00 : f32
    %91 = vector.broadcast %cst_44 : f32 to vector<128x128xf32>
    %c0_45 = arith.constant 0 : index
    %c15_46 = arith.constant 15 : index
    %c0_47 = arith.constant 0 : index
    %92 = vector.load %arg10[%c0_45, %c15_46, %c0_47] : memref<10x48x128xbf16, #tpu.memory_space<vmem>>, vector<10x16x128xbf16>
    %93 = vector.extract_strided_slice %92 {offsets = [0, 0, 0], sizes = [8, 16, 128], strides = [1, 1, 1]} : vector<10x16x128xbf16> to vector<8x16x128xbf16>
    %94 = vector.shape_cast %93 : vector<8x16x128xbf16> to vector<128x128xbf16>
    %c0_48 = arith.constant 0 : index
    %c0_49 = arith.constant 0 : index
    %c0_50 = arith.constant 0 : index
    %95 = vector.load %arg6[%c0_48, %c0_49, %c0_50] : memref<9x128x128xbf16, #tpu.memory_space<vmem>>, vector<1x128x128xbf16>
    %96 = vector.shape_cast %95 : vector<1x128x128xbf16> to vector<128x128xbf16>
    %cst_51 = arith.constant dense<0.000000e+00> : vector<128x128xf32>
    %97 = tpu.matmul %94, %96, %cst_51 {dimension_numbers = #tpu.dot_dimension_numbers<[1], [0], [0], [1], [0, 0, 1, 1], [], []>} : vector<128x128xbf16>, vector<128x128xbf16>, vector<128x128xf32> -> vector<128x128xf32>
    %98 = arith.addf %91, %97 : vector<128x128xf32>
    %99 = vector.extract_strided_slice %92 {offsets = [1, 0, 0], sizes = [8, 16, 128], strides = [1, 1, 1]} : vector<10x16x128xbf16> to vector<8x16x128xbf16>
    %100 = vector.shape_cast %99 : vector<8x16x128xbf16> to vector<128x128xbf16>
    %c3_52 = arith.constant 3 : index
    %c0_53 = arith.constant 0 : index
    %c0_54 = arith.constant 0 : index
    %101 = vector.load %arg6[%c3_52, %c0_53, %c0_54] : memref<9x128x128xbf16, #tpu.memory_space<vmem>>, vector<1x128x128xbf16>
    %102 = vector.shape_cast %101 : vector<1x128x128xbf16> to vector<128x128xbf16>
    %cst_55 = arith.constant dense<0.000000e+00> : vector<128x128xf32>
    %103 = tpu.matmul %100, %102, %cst_55 {dimension_numbers = #tpu.dot_dimension_numbers<[1], [0], [0], [1], [0, 0, 1, 1], [], []>} : vector<128x128xbf16>, vector<128x128xbf16>, vector<128x128xf32> -> vector<128x128xf32>
    %104 = arith.addf %98, %103 : vector<128x128xf32>
    %105 = vector.extract_strided_slice %92 {offsets = [2, 0, 0], sizes = [8, 16, 128], strides = [1, 1, 1]} : vector<10x16x128xbf16> to vector<8x16x128xbf16>
    %106 = vector.shape_cast %105 : vector<8x16x128xbf16> to vector<128x128xbf16>
    %c6_56 = arith.constant 6 : index
    %c0_57 = arith.constant 0 : index
    %c0_58 = arith.constant 0 : index
    %107 = vector.load %arg6[%c6_56, %c0_57, %c0_58] : memref<9x128x128xbf16, #tpu.memory_space<vmem>>, vector<1x128x128xbf16>
    %108 = vector.shape_cast %107 : vector<1x128x128xbf16> to vector<128x128xbf16>
    %cst_59 = arith.constant dense<0.000000e+00> : vector<128x128xf32>
    %109 = tpu.matmul %106, %108, %cst_59 {dimension_numbers = #tpu.dot_dimension_numbers<[1], [0], [0], [1], [0, 0, 1, 1], [], []>} : vector<128x128xbf16>, vector<128x128xbf16>, vector<128x128xf32> -> vector<128x128xf32>
    %110 = arith.addf %104, %109 : vector<128x128xf32>
    %c0_60 = arith.constant 0 : index
    %c16_61 = arith.constant 16 : index
    %c0_62 = arith.constant 0 : index
    %111 = vector.load %arg10[%c0_60, %c16_61, %c0_62] : memref<10x48x128xbf16, #tpu.memory_space<vmem>>, vector<10x16x128xbf16>
    %112 = vector.extract_strided_slice %111 {offsets = [0, 0, 0], sizes = [8, 16, 128], strides = [1, 1, 1]} : vector<10x16x128xbf16> to vector<8x16x128xbf16>
    %113 = vector.shape_cast %112 : vector<8x16x128xbf16> to vector<128x128xbf16>
    %c1_63 = arith.constant 1 : index
    %c0_64 = arith.constant 0 : index
    %c0_65 = arith.constant 0 : index
    %114 = vector.load %arg6[%c1_63, %c0_64, %c0_65] : memref<9x128x128xbf16, #tpu.memory_space<vmem>>, vector<1x128x128xbf16>
    %115 = vector.shape_cast %114 : vector<1x128x128xbf16> to vector<128x128xbf16>
    %cst_66 = arith.constant dense<0.000000e+00> : vector<128x128xf32>
    %116 = tpu.matmul %113, %115, %cst_66 {dimension_numbers = #tpu.dot_dimension_numbers<[1], [0], [0], [1], [0, 0, 1, 1], [], []>} : vector<128x128xbf16>, vector<128x128xbf16>, vector<128x128xf32> -> vector<128x128xf32>
    %117 = arith.addf %110, %116 : vector<128x128xf32>
    %118 = vector.extract_strided_slice %111 {offsets = [1, 0, 0], sizes = [8, 16, 128], strides = [1, 1, 1]} : vector<10x16x128xbf16> to vector<8x16x128xbf16>
    %119 = vector.shape_cast %118 : vector<8x16x128xbf16> to vector<128x128xbf16>
    %c4_67 = arith.constant 4 : index
    %c0_68 = arith.constant 0 : index
    %c0_69 = arith.constant 0 : index
    %120 = vector.load %arg6[%c4_67, %c0_68, %c0_69] : memref<9x128x128xbf16, #tpu.memory_space<vmem>>, vector<1x128x128xbf16>
    %121 = vector.shape_cast %120 : vector<1x128x128xbf16> to vector<128x128xbf16>
    %cst_70 = arith.constant dense<0.000000e+00> : vector<128x128xf32>
    %122 = tpu.matmul %119, %121, %cst_70 {dimension_numbers = #tpu.dot_dimension_numbers<[1], [0], [0], [1], [0, 0, 1, 1], [], []>} : vector<128x128xbf16>, vector<128x128xbf16>, vector<128x128xf32> -> vector<128x128xf32>
    %123 = arith.addf %117, %122 : vector<128x128xf32>
    %124 = vector.extract_strided_slice %111 {offsets = [2, 0, 0], sizes = [8, 16, 128], strides = [1, 1, 1]} : vector<10x16x128xbf16> to vector<8x16x128xbf16>
    %125 = vector.shape_cast %124 : vector<8x16x128xbf16> to vector<128x128xbf16>
    %c7_71 = arith.constant 7 : index
    %c0_72 = arith.constant 0 : index
    %c0_73 = arith.constant 0 : index
    %126 = vector.load %arg6[%c7_71, %c0_72, %c0_73] : memref<9x128x128xbf16, #tpu.memory_space<vmem>>, vector<1x128x128xbf16>
    %127 = vector.shape_cast %126 : vector<1x128x128xbf16> to vector<128x128xbf16>
    %cst_74 = arith.constant dense<0.000000e+00> : vector<128x128xf32>
    %128 = tpu.matmul %125, %127, %cst_74 {dimension_numbers = #tpu.dot_dimension_numbers<[1], [0], [0], [1], [0, 0, 1, 1], [], []>} : vector<128x128xbf16>, vector<128x128xbf16>, vector<128x128xf32> -> vector<128x128xf32>
    %129 = arith.addf %123, %128 : vector<128x128xf32>
    %c0_75 = arith.constant 0 : index
    %c17 = arith.constant 17 : index
    %c0_76 = arith.constant 0 : index
    %130 = vector.load %arg10[%c0_75, %c17, %c0_76] : memref<10x48x128xbf16, #tpu.memory_space<vmem>>, vector<10x16x128xbf16>
    %131 = vector.extract_strided_slice %130 {offsets = [0, 0, 0], sizes = [8, 16, 128], strides = [1, 1, 1]} : vector<10x16x128xbf16> to vector<8x16x128xbf16>
    %132 = vector.shape_cast %131 : vector<8x16x128xbf16> to vector<128x128xbf16>
    %c2_77 = arith.constant 2 : index
    %c0_78 = arith.constant 0 : index
    %c0_79 = arith.constant 0 : index
    %133 = vector.load %arg6[%c2_77, %c0_78, %c0_79] : memref<9x128x128xbf16, #tpu.memory_space<vmem>>, vector<1x128x128xbf16>
    %134 = vector.shape_cast %133 : vector<1x128x128xbf16> to vector<128x128xbf16>
    %cst_80 = arith.constant dense<0.000000e+00> : vector<128x128xf32>
    %135 = tpu.matmul %132, %134, %cst_80 {dimension_numbers = #tpu.dot_dimension_numbers<[1], [0], [0], [1], [0, 0, 1, 1], [], []>} : vector<128x128xbf16>, vector<128x128xbf16>, vector<128x128xf32> -> vector<128x128xf32>
    %136 = arith.addf %129, %135 : vector<128x128xf32>
    %137 = vector.extract_strided_slice %130 {offsets = [1, 0, 0], sizes = [8, 16, 128], strides = [1, 1, 1]} : vector<10x16x128xbf16> to vector<8x16x128xbf16>
    %138 = vector.shape_cast %137 : vector<8x16x128xbf16> to vector<128x128xbf16>
    %c5_81 = arith.constant 5 : index
    %c0_82 = arith.constant 0 : index
    %c0_83 = arith.constant 0 : index
    %139 = vector.load %arg6[%c5_81, %c0_82, %c0_83] : memref<9x128x128xbf16, #tpu.memory_space<vmem>>, vector<1x128x128xbf16>
    %140 = vector.shape_cast %139 : vector<1x128x128xbf16> to vector<128x128xbf16>
    %cst_84 = arith.constant dense<0.000000e+00> : vector<128x128xf32>
    %141 = tpu.matmul %138, %140, %cst_84 {dimension_numbers = #tpu.dot_dimension_numbers<[1], [0], [0], [1], [0, 0, 1, 1], [], []>} : vector<128x128xbf16>, vector<128x128xbf16>, vector<128x128xf32> -> vector<128x128xf32>
    %142 = arith.addf %136, %141 : vector<128x128xf32>
    %143 = vector.extract_strided_slice %130 {offsets = [2, 0, 0], sizes = [8, 16, 128], strides = [1, 1, 1]} : vector<10x16x128xbf16> to vector<8x16x128xbf16>
    %144 = vector.shape_cast %143 : vector<8x16x128xbf16> to vector<128x128xbf16>
    %c8_85 = arith.constant 8 : index
    %c0_86 = arith.constant 0 : index
    %c0_87 = arith.constant 0 : index
    %145 = vector.load %arg6[%c8_85, %c0_86, %c0_87] : memref<9x128x128xbf16, #tpu.memory_space<vmem>>, vector<1x128x128xbf16>
    %146 = vector.shape_cast %145 : vector<1x128x128xbf16> to vector<128x128xbf16>
    %cst_88 = arith.constant dense<0.000000e+00> : vector<128x128xf32>
    %147 = tpu.matmul %144, %146, %cst_88 {dimension_numbers = #tpu.dot_dimension_numbers<[1], [0], [0], [1], [0, 0, 1, 1], [], []>} : vector<128x128xbf16>, vector<128x128xbf16>, vector<128x128xf32> -> vector<128x128xf32>
    %148 = arith.addf %142, %147 : vector<128x128xf32>
    %c2_i32 = arith.constant 2 : i32
    %149 = arith.addi %1, %c2_i32 : i32
    %c0_89 = arith.constant 0 : index
    %150 = arith.index_cast %149 : i32 to index
    %c0_90 = arith.constant 0 : index
    %c0_91 = arith.constant 0 : index
    %151 = vector.load %arg2[%c0_89, %150, %c0_90, %c0_91] : memref<1x20x18x128xbf16, #tpu.memory_space<vmem>>, vector<1x8x18x128xbf16>
    %152 = vector.shape_cast %151 : vector<1x8x18x128xbf16> to vector<8x18x128xbf16>
    %153 = vector.extract_strided_slice %152 {offsets = [0, 1, 0], sizes = [8, 16, 128], strides = [1, 1, 1]} : vector<8x18x128xbf16> to vector<8x16x128xbf16>
    %154 = arith.extf %153 : vector<8x16x128xbf16> to vector<8x16x128xf32>
    %155 = vector.shape_cast %154 : vector<8x16x128xf32> to vector<128x128xf32>
    %c0_92 = arith.constant 0 : index
    %c0_93 = arith.constant 0 : index
    %156 = vector.load %arg7[%c0_92, %c0_93] : memref<1x128xf32, #tpu.memory_space<vmem>>, vector<1x128xf32>
    %157 = vector.broadcast %156 : vector<1x128xf32> to vector<128x128xf32>
    %158 = arith.mulf %148, %157 : vector<128x128xf32>
    %c0_94 = arith.constant 0 : index
    %c0_95 = arith.constant 0 : index
    %159 = vector.load %arg8[%c0_94, %c0_95] : memref<1x128xf32, #tpu.memory_space<vmem>>, vector<1x128xf32>
    %160 = vector.broadcast %159 : vector<1x128xf32> to vector<128x128xf32>
    %161 = arith.addf %158, %160 : vector<128x128xf32>
    %162 = arith.addf %161, %155 : vector<128x128xf32>
    %cst_96 = arith.constant 0.000000e+00 : f32
    %163 = vector.broadcast %cst_96 : f32 to vector<128x128xf32>
    %164 = arith.maximumf %162, %163 : vector<128x128xf32>
    %165 = vector.shape_cast %164 : vector<128x128xf32> to vector<1x8x16x128xf32>
    %c0_97 = arith.constant 0 : index
    %c0_98 = arith.constant 0 : index
    %c0_99 = arith.constant 0 : index
    %c0_100 = arith.constant 0 : index
    %166 = vector.load %arg9[%c0_97, %c0_98, %c0_99, %c0_100] : memref<1x8x16x128xf32, #tpu.memory_space<vmem>>, vector<1x8x16x128xf32>
    tpu.vector_store %arg9[%c0_97, %c0_98, %c0_99, %c0_100], %165 {strides = array<i32>} : memref<1x8x16x128xf32, #tpu.memory_space<vmem>>, vector<1x8x16x128xf32>,
    return
  }
  func.func @transform_0(%arg0: i32, %arg1: i32) -> (i32, i32, i32, i32) {
    %c0_i32 = arith.constant 0 : i32
    %c0_i32_0 = arith.constant 0 : i32
    %c0_i32_1 = arith.constant 0 : i32
    %c0_i32_2 = arith.constant 0 : i32
    return %arg0, %c0_i32, %c0_i32_0, %c0_i32_1 : i32, i32, i32, i32
  }
  func.func @transform_1(%arg0: i32, %arg1: i32) -> (i32, i32, i32) {
    %c0_i32 = arith.constant 0 : i32
    %c0_i32_0 = arith.constant 0 : i32
    %c0_i32_1 = arith.constant 0 : i32
    %c0_i32_2 = arith.constant 0 : i32
    return %c0_i32, %c0_i32_0, %c0_i32_1 : i32, i32, i32
  }
  func.func @transform_2(%arg0: i32, %arg1: i32) -> (i32, i32) {
    %c0_i32 = arith.constant 0 : i32
    %c0_i32_0 = arith.constant 0 : i32
    %c0_i32_1 = arith.constant 0 : i32
    return %c0_i32, %c0_i32_0 : i32, i32
  }
  func.func @transform_3(%arg0: i32, %arg1: i32) -> (i32, i32) {
    %c0_i32 = arith.constant 0 : i32
    %c0_i32_0 = arith.constant 0 : i32
    %c0_i32_1 = arith.constant 0 : i32
    return %c0_i32, %c0_i32_0 : i32, i32
  }
  func.func @transform_4(%arg0: i32, %arg1: i32) -> (i32, i32, i32) {
    %c0_i32 = arith.constant 0 : i32
    %c0_i32_0 = arith.constant 0 : i32
    %c0_i32_1 = arith.constant 0 : i32
    %c0_i32_2 = arith.constant 0 : i32
    return %c0_i32, %c0_i32_0, %c0_i32_1 : i32, i32, i32
  }
  func.func @transform_5(%arg0: i32, %arg1: i32) -> (i32, i32) {
    %c0_i32 = arith.constant 0 : i32
    %c0_i32_0 = arith.constant 0 : i32
    %c0_i32_1 = arith.constant 0 : i32
    return %c0_i32, %c0_i32_0 : i32, i32
  }
  func.func @transform_6(%arg0: i32, %arg1: i32) -> (i32, i32) {
    %c0_i32 = arith.constant 0 : i32
    %c0_i32_0 = arith.constant 0 : i32
    %c0_i32_1 = arith.constant 0 : i32
    return %c0_i32, %c0_i32_0 : i32, i32
  }
  func.func @transform_7(%arg0: i32, %arg1: i32) -> (i32, i32, i32, i32) {
    %c0_i32 = arith.constant 0 : i32
    %c0_i32_0 = arith.constant 0 : i32
    %c0_i32_1 = arith.constant 0 : i32
    return %arg0, %arg1, %c0_i32, %c0_i32_0 : i32, i32, i32, i32
  }
}

</mosaic_0001>

<llo_original>
// kernel: tpu_custom_call.1
$region0: #{tpu_custom_call.1}
  #allocation0 [shape = 'u32[]', space=smem, size = 0x4, offset = 0x4, fixed_abs, tag = 'smem constant byte address 0x4 - core index']
  #allocation1 [shape = 'u32[144,128]{1,0:T(1,128)}', space=vmem, size = 0x12000, scoped, tag = 'internal scratch']
  #allocation2 [shape = 'bf16[10,48,128]{2,1,0:T(16,128)(2,1)}', space=vmem, size = 0x1e000, scoped, tag = 'scratch operand']
  %s0 = inlined_call_operand.vmem [shape: bf16[2,20,18,128], index: 0, kind: input, shape index: {}]
  %s1 = inlined_call_operand.vmem [shape: bf16[9,128,128], index: 1, kind: input, shape index: {}]
  %s2 = inlined_call_operand.vmem [shape: f32[1,128], index: 2, kind: input, shape index: {}]
  %s3 = inlined_call_operand.vmem [shape: f32[1,128], index: 3, kind: input, shape index: {}]
  %s4 = inlined_call_operand.hbm [shape: bf16[9,128,128], index: 4, kind: input, shape index: {}]
  %s5 = inlined_call_operand.vmem [shape: f32[1,128], index: 5, kind: input, shape index: {}]
  %s6 = inlined_call_operand.vmem [shape: f32[1,128], index: 6, kind: input, shape index: {}]
  %s7 = inlined_call_operand.hbm [shape: f32[2,16,16,128], index: 7, kind: output, shape index: {}]
  %s8 = sld [smem:[#allocation0]]
  $region65: #{tpu_custom_call.1} parent=0
    _
  %s10 = ssub.s32 1, %s8
  %s11 = scalar_select 0, %s10, %s8
  $region1: #{tpu_custom_call.1} parent=0
    #allocation3 [shape = 'u8[294912]{0}', space=vmem, size = 0x48000, scoped, tag = 'input window, operand 4, single buffered']
    #allocation4 [shape = 's32[2]{0}', space=sflag, size = 0x8, scoped, tag = 'scoped memory for tpu_custom_call.1']
    #allocation5 [shape = 's32[2]{0}', space=sflag, size = 0x8, scoped, tag = 'scoped memory for tpu_custom_call.1']
    #allocation6 [shape = 'u8[131072]{0}', space=vmem, size = 0x20000, scoped, tag = 'output window, operand 0']
    %12 = vsyncpa [#allocation4], 0
    %13 = vsyncpa [#allocation5], 0
    %s14 = scalar_lea.sflag [#allocation5], 1
    %15 = vsyncpa %s14, 0
    loop: start=0, step=1, limit=6
    $region2: #{tpu_custom_call.1} parent=1 // loop_pre_header
      _
    $region3: #{tpu_custom_call.1} parent=1 // loop_header
      %s17 = sphi 0, %s21
      %p18 = scmp.ge.s32.totalorder %s17, 6
      %s24 = sphi 0, %s36
      %s25 = sphi 0, %s32
      %s26 = sphi 0, %s24
      %s27 = sphi 0, %s25
      %s28 = sphi 0, %s26
      %s29 = sphi 0, %s27
      %s39 = sphi 0, %s41
      %s42 = sphi 0, %s39
      %s43 = sphi 0, %s42
      %s59 = sphi 0, %s43
      %s63 = sphi 0, %s63
      %s65 = sphi 0, %s63
      %s66 = sphi 0, %s65
      %s80 = sphi 0, %s66
      %s84 = sphi 0, %s84
      %s86 = sphi 0, %s84
      %s87 = sphi 0, %s86
      %s101 = sphi 0, %s87
      %s105 = sphi 0, %s105
      %s107 = sphi 0, %s105
      %s108 = sphi 0, %s107
      %s122 = sphi 0, %s108
      %s126 = sphi 0, %s126
      %s128 = sphi 0, %s126
      %s129 = sphi 0, %s128
      %s143 = sphi 0, %s129
      %s147 = sphi 0, %s147
      %s149 = sphi 0, %s147
      %s150 = sphi 0, %s149
      %s164 = sphi 0, %s150
      %s168 = sphi 0, %s168
      %s170 = sphi 0, %s168
      %s171 = sphi 0, %s170
      %s185 = sphi 0, %s171
      %s193 = sphi 0, %s195
      %s196 = sphi 0, %s193
      %s197 = sphi 0, %s196
      %s213 = sphi 0, %s197
    $region4: #{tpu_custom_call.1} parent=1 // loop_header_branch
      %20 = sbr.rel (%p18) target = $region8
    $region5: #{tpu_custom_call.1} parent=1 // loop_body
      %s22 = ssub.s32 %s17, 1
      %s23 = ssub.s32 %s17, 2
      %s30 = sadd.s32 1, %s25
      %p31 = scmp.ge.s32.totalorder %s30, 2
      %s32 = scalar_select %p31, 0, %s30
      %s33 = sadd.s32 1, %s24
      %s34 = scalar_select %p31, %s33, %s24
      %p35 = scmp.ge.s32.totalorder %s34, 2
      %s36 = scalar_select %p35, 0, %s34
      %s37 = ssub.s32 %s24, %s36
      %p38 = scmp.eq.s32.totalorder %s37, 0
      %s40 = sadd.s32 %s39, 1
      %s41 = scalar_select %p38, %s39, %s40
      %p44 = pneg %p38
      %p45 = scmp.eq.s32.totalorder %s17, 3
      %p46 = por %p44, %p45
      %p47 = scmp.ne.s32.totalorder %s39, %s42
      %p48 = scmp.eq.s32.totalorder %s17, 0
      %p49 = por %p47, %p48
      %p50 = scmp.ne.s32.totalorder %s39, %s42
      %p51 = scmp.eq.s32.totalorder %s22, 3
      %p52 = por %p50, %p51
      %p53 = scmp.ne.s32.totalorder %s42, %s43
      %p54 = scmp.eq.s32.totalorder %s22, 0
      %p55 = por %p53, %p54
      %p56 = scmp.ne.s32.totalorder %s42, %s43
      %p57 = scmp.eq.s32.totalorder %s23, 3
      %p58 = por %p56, %p57
      %p60 = scmp.ne.s32.totalorder %s43, %s59
      %p61 = scmp.eq.s32.totalorder %s23, 0
      %p62 = por %p60, %p61
      %s64 = sadd.s32 %s63, 1
      %p67 = scmp.eq.s32.totalorder %s17, 3
      %p68 = scmp.ne.s32.totalorder %s63, %s65
      %p69 = scmp.eq.s32.totalorder %s17, 0
      %p70 = por %p68, %p69
      %p71 = scmp.ne.s32.totalorder %s63, %s65
      %p72 = scmp.eq.s32.totalorder %s22, 3
      %p73 = por %p71, %p72
      %p74 = scmp.ne.s32.totalorder %s65, %s66
      %p75 = scmp.eq.s32.totalorder %s22, 0
      %p76 = por %p74, %p75
      %p77 = scmp.ne.s32.totalorder %s65, %s66
      %p78 = scmp.eq.s32.totalorder %s23, 3
      %p79 = por %p77, %p78
      %p81 = scmp.ne.s32.totalorder %s66, %s80
      %p82 = scmp.eq.s32.totalorder %s23, 0
      %p83 = por %p81, %p82
      %s85 = sadd.s32 %s84, 1
      %p88 = scmp.eq.s32.totalorder %s17, 3
      %p89 = scmp.ne.s32.totalorder %s84, %s86
      %p90 = scmp.eq.s32.totalorder %s17, 0
      %p91 = por %p89, %p90
      %p92 = scmp.ne.s32.totalorder %s84, %s86
      %p93 = scmp.eq.s32.totalorder %s22, 3
      %p94 = por %p92, %p93
      %p95 = scmp.ne.s32.totalorder %s86, %s87
      %p96 = scmp.eq.s32.totalorder %s22, 0
      %p97 = por %p95, %p96
      %p98 = scmp.ne.s32.totalorder %s86, %s87
      %p99 = scmp.eq.s32.totalorder %s23, 3
      %p100 = por %p98, %p99
      %p102 = scmp.ne.s32.totalorder %s87, %s101
      %p103 = scmp.eq.s32.totalorder %s23, 0
      %p104 = por %p102, %p103
      %s106 = sadd.s32 %s105, 1
      %p109 = scmp.eq.s32.totalorder %s17, 3
      %p110 = scmp.ne.s32.totalorder %s105, %s107
      %p111 = scmp.eq.s32.totalorder %s17, 0
      %p112 = por %p110, %p111
      %p113 = scmp.ne.s32.totalorder %s105, %s107
      %p114 = scmp.eq.s32.totalorder %s22, 3
      %p115 = por %p113, %p114
      %p116 = scmp.ne.s32.totalorder %s107, %s108
      %p117 = scmp.eq.s32.totalorder %s22, 0
      %p118 = por %p116, %p117
      %p119 = scmp.ne.s32.totalorder %s107, %s108
      %p120 = scmp.eq.s32.totalorder %s23, 3
      %p121 = por %p119, %p120
      %p123 = scmp.ne.s32.totalorder %s108, %s122
      %p124 = scmp.eq.s32.totalorder %s23, 0
      %p125 = por %p123, %p124
      %s127 = sadd.s32 %s126, 1
      %p130 = scmp.eq.s32.totalorder %s17, 3
      %p131 = scmp.ne.s32.totalorder %s126, %s128
      %p132 = scmp.eq.s32.totalorder %s17, 0
      %p133 = por %p131, %p132
      %p134 = scmp.ne.s32.totalorder %s126, %s128
      %p135 = scmp.eq.s32.totalorder %s22, 3
      %p136 = por %p134, %p135
      %p137 = scmp.ne.s32.totalorder %s128, %s129
      %p138 = scmp.eq.s32.totalorder %s22, 0
      %p139 = por %p137, %p138
      %p140 = scmp.ne.s32.totalorder %s128, %s129
      %p141 = scmp.eq.s32.totalorder %s23, 3
      %p142 = por %p140, %p141
      %p144 = scmp.ne.s32.totalorder %s129, %s143
      %p145 = scmp.eq.s32.totalorder %s23, 0
      %p146 = por %p144, %p145
      %s148 = sadd.s32 %s147, 1
      %p151 = scmp.eq.s32.totalorder %s17, 3
      %p152 = scmp.ne.s32.totalorder %s147, %s149
      %p153 = scmp.eq.s32.totalorder %s17, 0
      %p154 = por %p152, %p153
      %p155 = scmp.ne.s32.totalorder %s147, %s149
      %p156 = scmp.eq.s32.totalorder %s22, 3
      %p157 = por %p155, %p156
      %p158 = scmp.ne.s32.totalorder %s149, %s150
      %p159 = scmp.eq.s32.totalorder %s22, 0
      %p160 = por %p158, %p159
      %p161 = scmp.ne.s32.totalorder %s149, %s150
      %p162 = scmp.eq.s32.totalorder %s23, 3
      %p163 = por %p161, %p162
      %p165 = scmp.ne.s32.totalorder %s150, %s164
      %p166 = scmp.eq.s32.totalorder %s23, 0
      %p167 = por %p165, %p166
      %s169 = sadd.s32 %s168, 1
      %p172 = scmp.eq.s32.totalorder %s17, 3
      %p173 = scmp.ne.s32.totalorder %s168, %s170
      %p174 = scmp.eq.s32.totalorder %s17, 0
      %p175 = por %p173, %p174
      %p176 = scmp.ne.s32.totalorder %s168, %s170
      %p177 = scmp.eq.s32.totalorder %s22, 3
      %p178 = por %p176, %p177
      %p179 = scmp.ne.s32.totalorder %s170, %s171
      %p180 = scmp.eq.s32.totalorder %s22, 0
      %p181 = por %p179, %p180
      %p182 = scmp.ne.s32.totalorder %s170, %s171
      %p183 = scmp.eq.s32.totalorder %s23, 3
      %p184 = por %p182, %p183
      %p186 = scmp.ne.s32.totalorder %s171, %s185
      %p187 = scmp.eq.s32.totalorder %s23, 0
      %p188 = por %p186, %p187
      %s189 = ssub.s32 %s24, %s36
      %s190 = ssub.s32 %s25, %s32
      %s191 = sor.u32 %s189, %s190
      %p192 = scmp.eq.s32.totalorder %s191, 0
      %s194 = sadd.s32 %s193, 1
      %s195 = scalar_select %p192, %s193, %s194
      %p198 = pneg %p192
      %p199 = scmp.eq.s32.totalorder %s17, 3
      %p200 = por %p198, %p199
      %p201 = scmp.ne.s32.totalorder %s193, %s196
      %p202 = scmp.eq.s32.totalorder %s17, 0
      %p203 = por %p201, %p202
      %p204 = scmp.ne.s32.totalorder %s193, %s196
      %p205 = scmp.eq.s32.totalorder %s22, 3
      %p206 = por %p204, %p205
      %p207 = scmp.ne.s32.totalorder %s196, %s197
      %p208 = scmp.eq.s32.totalorder %s22, 0
      %p209 = por %p207, %p208
      %p210 = scmp.ne.s32.totalorder %s196, %s197
      %p211 = scmp.eq.s32.totalorder %s23, 3
      %p212 = por %p210, %p211
      %p214 = scmp.ne.s32.totalorder %s197, %s213
      %p215 = scmp.eq.s32.totalorder %s23, 0
      %p216 = por %p214, %p215
      %p217 = scmp.le.s32.totalorder 1, %s17
      %p218 = scmp.lt.s32.totalorder %s17, 5
      %p219 = pnand %p217, %p218
      %p220 = pneg %p219
      // Predicated region
      $region9: #{tpu_custom_call.1} parent=5 // pred_check
        _
      $region10: #{tpu_custom_call.1} parent=5 // pred_check_branch
        %222 = sbr.rel (%p219) target = $region12
      $region11: #{tpu_custom_call.1} parent=5 // pred_region
        %s223 = ssub.s32 %s17, 1
        // Predicated region
        $region13: #{tpu_custom_call.1} parent=11 // pred_check
          %p224 = pneg %p76
        $region14: #{tpu_custom_call.1} parent=11 // pred_check_branch
          %226 = sbr.rel (%p224) target = $region16
        $region15: #{tpu_custom_call.1} parent=11 // pred_region
          _
        $region16: #{tpu_custom_call.1} parent=11 // pred_fallthru
          _
        // Predicated region
        $region17: #{tpu_custom_call.1} parent=11 // pred_check
          %p227 = pneg %p97
        $region18: #{tpu_custom_call.1} parent=11 // pred_check_branch
          %229 = sbr.rel (%p227) target = $region20
        $region19: #{tpu_custom_call.1} parent=11 // pred_region
          _
        $region20: #{tpu_custom_call.1} parent=11 // pred_fallthru
          _
        // Predicated region
        $region21: #{tpu_custom_call.1} parent=11 // pred_check
          %p230 = pneg %p118
        $region22: #{tpu_custom_call.1} parent=11 // pred_check_branch
          %232 = sbr.rel (%p230) target = $region24
        $region23: #{tpu_custom_call.1} parent=11 // pred_region
          _
        $region24: #{tpu_custom_call.1} parent=11 // pred_fallthru
          _
        // Predicated region
        $region25: #{tpu_custom_call.1} parent=11 // pred_check
          %p233 = pneg %p139
        $region26: #{tpu_custom_call.1} parent=11 // pred_check_branch
          %235 = sbr.rel (%p233) target = $region28
        $region27: #{tpu_custom_call.1} parent=11 // pred_region
          %s237 = ssub.s32 9216, 9216
          %238 = vsyncadd [#allocation4], %s237
          %s239 = sshll.u32 [#allocation3], 4
          %s240 = int_to_ptr.vmem [resolvable:$true] %s239
          %245 = dma.hbm_to_vmem [thread:$0]  %s4, 9216, %s240, [#allocation4], 64, 64, 4
        $region28: #{tpu_custom_call.1} parent=11 // pred_fallthru
          _
        // Predicated region
        $region29: #{tpu_custom_call.1} parent=11 // pred_check
          %p246 = pneg %p160
        $region30: #{tpu_custom_call.1} parent=11 // pred_check_branch
          %248 = sbr.rel (%p246) target = $region32
        $region31: #{tpu_custom_call.1} parent=11 // pred_region
          _
        $region32: #{tpu_custom_call.1} parent=11 // pred_fallthru
          _
        // Predicated region
        $region33: #{tpu_custom_call.1} parent=11 // pred_check
          %p249 = pneg %p181
        $region34: #{tpu_custom_call.1} parent=11 // pred_check_branch
          %251 = sbr.rel (%p249) target = $region36
        $region35: #{tpu_custom_call.1} parent=11 // pred_region
          _
        $region36: #{tpu_custom_call.1} parent=11 // pred_fallthru
          _
      $region12: #{tpu_custom_call.1} parent=5 // pred_fallthru
        _
      %p252 = scmp.lt.s32.totalorder %s17, 4
      // Predicated region
      $region37: #{tpu_custom_call.1} parent=5 // pred_check
        %p253 = pneg %p252
      $region38: #{tpu_custom_call.1} parent=5 // pred_check_branch
        %255 = sbr.rel (%p253) target = $region40
      $region39: #{tpu_custom_call.1} parent=5 // pred_region
        // Predicated region
        $region41: #{tpu_custom_call.1} parent=39 // pred_check
          %p256 = pneg %p49
        $region42: #{tpu_custom_call.1} parent=39 // pred_check_branch
          %258 = sbr.rel (%p256) target = $region44
        $region43: #{tpu_custom_call.1} parent=39 // pred_region
          %p259 = scmp.lt.s32.totalorder %s24, 1
          %s260 = scalar_select %p259, %s24, 1
          %s261 = smul.addr %s260, 60
          %s262 = smul.addr %s261, 4
          %s263 = scalar_lea.vmem %s0, %s262
        $region44: #{tpu_custom_call.1} parent=39 // pred_fallthru
          _
      $region40: #{tpu_custom_call.1} parent=5 // pred_fallthru
        _
      %p264 = scmp.le.s32.totalorder 1, %s17
      %p265 = scmp.lt.s32.totalorder %s17, 5
      %p266 = pnand %p264, %p265
      %p267 = pneg %p266
      // Predicated region
      $region45: #{tpu_custom_call.1} parent=5 // pred_check
        _
      $region46: #{tpu_custom_call.1} parent=5 // pred_check_branch
        %269 = sbr.rel (%p266) target = $region48
      $region47: #{tpu_custom_call.1} parent=5 // pred_region
        %s270 = ssub.s32 %s17, 1
        // Predicated region
        $region49: #{tpu_custom_call.1} parent=47 // pred_check
          %p271 = pneg %p139
        $region50: #{tpu_custom_call.1} parent=47 // pred_check_branch
          %273 = sbr.rel (%p271) target = $region52
        $region51: #{tpu_custom_call.1} parent=47 // pred_region
          %274 = dma.done [#allocation4], 9216
        $region52: #{tpu_custom_call.1} parent=47 // pred_fallthru
          _
        %p275 = scmp.lt.s32.totalorder %s26, 1
        %s276 = scalar_select %p275, %s26, 1
        %s277 = smul.addr %s276, 60
        %s278 = smul.addr %s277, 4
        %s279 = scalar_lea.vmem %s0, %s278
        %p280 = pneg %p55
        %p281 = pneg %p52
        %p282 = pneg %p76
        %p283 = pneg %p73
        %p284 = pneg %p97
        %p285 = pneg %p94
        %p286 = pneg %p118
        %p287 = pneg %p115
        %p288 = pneg %p139
        %p289 = pneg %p136
        %p290 = pneg %p160
        %p291 = pneg %p157
        %p292 = pneg %p181
        %p293 = pneg %p178
        %p294 = pneg %p209
        %p295 = pneg %p206
        %s296 = sand.u32 %s196, 1
        %s297 = scalar_lea.sflag [#allocation5], %s296
        %s298 = sand.u32 %s196, 1
        %s299 = smul.addr %s298, 128
        %s300 = scalar_lea.vmem [#allocation6], %s299
        %p301 = scmp.lt.s32.totalorder %s26, 1
        %s302 = scalar_select %p301, %s26, 1
        %s303 = smul.addr %s302, 60
        %s304 = smul.addr %s303, 4
        %s305 = scalar_lea.vmem %s0, %s304
        %s306 = smul.u32 8, %s27
        %s308 = smul.u32 %s27, 8
        %s309 = smul.u32 %s308, 3
        %s310 = smul.addr %s309, 4
        %s311 = scalar_lea.vmem %s305, %s310
        %v312 = vld [vmem:[%s311] sm:$0xf]
        %v313 = vld [vmem:[%s311 + $0x4] sm:$0xf]
        %v314 = vld [vmem:[%s311 + $0x8] sm:$0x1]
        %v315 = vld [vmem:[%s311 + $0xc] sm:$0xf]
        %v316 = vld [vmem:[%s311 + $0x10] sm:$0xf]
        %v317 = vld [vmem:[%s311 + $0x14] sm:$0x1]
        %v318 = vld [vmem:[%s311 + $0x18] sm:$0xf]
        %v319 = vld [vmem:[%s311 + $0x1c] sm:$0xf]
        %v320 = vld [vmem:[%s311 + $0x20] sm:$0x1]
        %v321 = vld [vmem:[%s311 + $0x24] sm:$0xf]
        %v322 = vld [vmem:[%s311 + $0x28] sm:$0xf]
        %v323 = vld [vmem:[%s311 + $0x2c] sm:$0x1]
        %v324 = vld [vmem:[%s311 + $0x30] sm:$0xf]
        %v325 = vld [vmem:[%s311 + $0x34] sm:$0xf]
        %v326 = vld [vmem:[%s311 + $0x38] sm:$0x1]
        %v327 = vld [vmem:[%s311 + $0x3c] sm:$0xf]
        %v328 = vld [vmem:[%s311 + $0x40] sm:$0xf]
        %v329 = vld [vmem:[%s311 + $0x44] sm:$0x1]
        %v330 = vld [vmem:[%s311 + $0x48] sm:$0xf]
        %v331 = vld [vmem:[%s311 + $0x4c] sm:$0xf]
        %v332 = vld [vmem:[%s311 + $0x50] sm:$0x1]
        %v333 = vld [vmem:[%s311 + $0x54] sm:$0xf]
        %v334 = vld [vmem:[%s311 + $0x58] sm:$0xf]
        %v335 = vld [vmem:[%s311 + $0x5c] sm:$0x1]
        %v336 = vld [vmem:[%s311 + $0x60] sm:$0xf]
        %v337 = vld [vmem:[%s311 + $0x64] sm:$0xf]
        %v338 = vld [vmem:[%s311 + $0x68] sm:$0x1]
        %v339 = vld [vmem:[%s311 + $0x6c] sm:$0xf]
        %v340 = vld [vmem:[%s311 + $0x70] sm:$0xf]
        %v341 = vld [vmem:[%s311 + $0x74] sm:$0x1]
        %v342 = vld [vmem:[%s311 + $0x78] sm:$0xf]
        %v343 = vld [vmem:[%s311 + $0x7c] sm:$0xf]
        %v344 = vld [vmem:[%s311 + $0x80] sm:$0x1]
        %v345 = vld [vmem:[%s311 + $0x84] sm:$0xf]
        %v346 = vld [vmem:[%s311 + $0x88] sm:$0xf]
        %v347 = vld [vmem:[%s311 + $0x8c] sm:$0x1]
        %v348 = vld [vmem:[%s1] sm:$0xf]
        %v349 = vld [vmem:[%s1 + $0x4] sm:$0xf]
        %v350 = vld [vmem:[%s1 + $0x8] sm:$0xf]
        %v351 = vld [vmem:[%s1 + $0xc] sm:$0xf]
        %v352 = vld [vmem:[%s1 + $0x10] sm:$0xf]
        %v353 = vld [vmem:[%s1 + $0x14] sm:$0xf]
        %v354 = vld [vmem:[%s1 + $0x18] sm:$0xf]
        %v355 = vld [vmem:[%s1 + $0x1c] sm:$0xf]
        %v356 = vld [vmem:[%s1 + $0x20] sm:$0xf]
        %v357 = vld [vmem:[%s1 + $0x24] sm:$0xf]
        %v358 = vld [vmem:[%s1 + $0x28] sm:$0xf]
        %v359 = vld [vmem:[%s1 + $0x2c] sm:$0xf]
        %v360 = vld [vmem:[%s1 + $0x30] sm:$0xf]
        %v361 = vld [vmem:[%s1 + $0x34] sm:$0xf]
        %v362 = vld [vmem:[%s1 + $0x38] sm:$0xf]
        %v363 = vld [vmem:[%s1 + $0x3c] sm:$0xf]
        %s364 = scalar_lea.vmem %s1, 192
        %v365 = vld [vmem:[%s364] sm:$0xf]
        %v366 = vld [vmem:[%s364 + $0x4] sm:$0xf]
        %v367 = vld [vmem:[%s364 + $0x8] sm:$0xf]
        %v368 = vld [vmem:[%s364 + $0xc] sm:$0xf]
        %v369 = vld [vmem:[%s364 + $0x10] sm:$0xf]
        %v370 = vld [vmem:[%s364 + $0x14] sm:$0xf]
        %v371 = vld [vmem:[%s364 + $0x18] sm:$0xf]
        %v372 = vld [vmem:[%s364 + $0x1c] sm:$0xf]
        %v373 = vld [vmem:[%s364 + $0x20] sm:$0xf]
        %v374 = vld [vmem:[%s364 + $0x24] sm:$0xf]
        %v375 = vld [vmem:[%s364 + $0x28] sm:$0xf]
        %v376 = vld [vmem:[%s364 + $0x2c] sm:$0xf]
        %v377 = vld [vmem:[%s364 + $0x30] sm:$0xf]
        %v378 = vld [vmem:[%s364 + $0x34] sm:$0xf]
        %v379 = vld [vmem:[%s364 + $0x38] sm:$0xf]
        %v380 = vld [vmem:[%s364 + $0x3c] sm:$0xf]
        %v401 = vunpack.c.l.b16 %v315
        %v402 = vunpack.c.l.b16 %v316
        %v403 = vunpack.c.l.b16 %v318
        %v404 = vunpack.c.l.b16 %v319
        %v405 = vunpack.c.l.b16 %v321
        %v406 = vunpack.c.l.b16 %v322
        %v407 = vunpack.c.l.b16 %v324
        %v408 = vunpack.c.l.b16 %v325
        %v409 = vunpack.c.l.b16 %v327
        %v410 = vunpack.c.l.b16 %v328
        %v411 = vunpack.c.l.b16 %v330
        %v412 = vunpack.c.l.b16 %v331
        %v413 = vunpack.c.l.b16 %v333
        %v414 = vunpack.c.l.b16 %v334
        %v415 = vunpack.c.l.b16 %v336
        %v416 = vunpack.c.l.b16 %v337
        %v417 = vunpack.c.l.b16 %v339
        %v418 = vunpack.c.l.b16 %v340
        %v419 = vunpack.c.l.b16 %v342
        %v420 = vunpack.c.l.b16 %v343
        %v421 = vpack.c.b16 %v402, %v401
        %v422 = vpack.c.b16 %v404, %v403
        %v423 = vpack.c.b16 %v406, %v405
        %v424 = vpack.c.b16 %v408, %v407
        %v425 = vpack.c.b16 %v410, %v409
        %v426 = vpack.c.b16 %v412, %v411
        %v427 = vpack.c.b16 %v414, %v413
        %v428 = vpack.c.b16 %v416, %v415
        %v429 = vpack.c.b16 %v418, %v417
        %v430 = vpack.c.b16 %v420, %v419
        %v457 = vunpack.c.l.b16 %v365
        %v458 = vunpack.c.l.b16 %v366
        %v459 = vunpack.c.l.b16 %v367
        %v460 = vunpack.c.l.b16 %v368
        %v461 = vunpack.c.l.b16 %v369
        %v462 = vunpack.c.l.b16 %v370
        %v463 = vunpack.c.l.b16 %v371
        %v464 = vunpack.c.l.b16 %v372
        %v465 = vunpack.c.l.b16 %v373
        %v466 = vunpack.c.l.b16 %v374
        %v467 = vunpack.c.l.b16 %v375
        %v468 = vunpack.c.l.b16 %v376
        %v469 = vunpack.c.l.b16 %v377
        %v470 = vunpack.c.l.b16 %v378
        %v471 = vunpack.c.l.b16 %v379
        %v472 = vunpack.c.l.b16 %v380
        %v473 = vpack.c.b16 %v458, %v457
        %v474 = vpack.c.b16 %v460, %v459
        %v475 = vpack.c.b16 %v462, %v461
        %v476 = vpack.c.b16 %v464, %v463
        %v477 = vpack.c.b16 %v466, %v465
        %v478 = vpack.c.b16 %v468, %v467
        %v479 = vpack.c.b16 %v470, %v469
        %v480 = vpack.c.b16 %v472, %v471
        %489 = vmatprep.subr.bf16.mxu0 0
        %490 = vmatpush1.bf16.msra.mxu0 %v473
        %491 = vmatprep.subr.bf16.mxu0 0
        %492 = vmatpush1.bf16.msra.mxu0 %v474
        %493 = vmatprep.subr.bf16.mxu0 0
        %494 = vmatpush1.bf16.msra.mxu0 %v475
        %495 = vmatprep.subr.bf16.mxu0 0
        %496 = vmatpush1.bf16.msra.mxu0 %v476
        %497 = vmatprep.subr.bf16.mxu0 0
        %498 = vmatpush1.bf16.msra.mxu0 %v477
        %499 = vmatprep.subr.bf16.mxu0 0
        %500 = vmatpush1.bf16.msra.mxu0 %v478
        %501 = vmatprep.subr.bf16.mxu0 0
        %502 = vmatpush1.bf16.msra.mxu0 %v479
        %503 = vmatprep.subr.bf16.mxu0 0
        %504 = vmatpush1.bf16.msra.mxu0 %v480
        %505 = vmatprep.subr.bf16.mxu0 0
        %506 = vmatpush1.bf16.msra.mxu0 0
        %507 = vmatprep.subr.bf16.mxu0 0
        %508 = vmatpush1.bf16.msra.mxu0 0
        %509 = vmatprep.subr.bf16.mxu0 0
        %510 = vmatpush1.bf16.msra.mxu0 0
        %511 = vmatprep.subr.bf16.mxu0 0
        %512 = vmatpush1.bf16.msra.mxu0 0
        %513 = vmatprep.subr.bf16.mxu0 0
        %514 = vmatpush1.bf16.msra.mxu0 0
        %515 = vmatprep.subr.bf16.mxu0 0
        %516 = vmatpush1.bf16.msra.mxu0 0
        %517 = vmatprep.subr.bf16.mxu0 0
        %518 = vmatpush1.bf16.msra.mxu0 0
        %519 = vmatprep.subr.bf16.mxu0 0
        %520 = vmatpush1.bf16.msra.mxu0 0
        %521 = vmatprep.mubr.bf16.mxu0 0
        %522 = vmatmul.mubr.bf16.gmra.mrb[0].mxu0 %v421
        %v523 = vpop.f32.mrb[0].mxu0
        %v524 = vadd.f32 0.0, %v523
        %v525 = vpop.f32.mrb[0].mxu0
        %v526 = vpop.f32.mrb[0].mxu0
        %v527 = vadd.f32 0.0, %v526
        %v528 = vpop.f32.mrb[0].mxu0
        %529 = vmatprep.mubr.bf16.mxu0 0
        %530 = vmatmul.mubr.bf16.gmra.mrb[0].mxu0 %v422
        %v531 = vpop.f32.mrb[0].mxu0
        %v532 = vadd.f32 0.0, %v531
        %v533 = vpop.f32.mrb[0].mxu0
        %v534 = vpop.f32.mrb[0].mxu0
        %v535 = vadd.f32 0.0, %v534
        %v536 = vpop.f32.mrb[0].mxu0
        %537 = vmatprep.mubr.bf16.mxu0 0
        %538 = vmatmul.mubr.bf16.gmra.mrb[0].mxu0 %v423
        %v539 = vpop.f32.mrb[0].mxu0
        %v540 = vadd.f32 0.0, %v539
        %v541 = vpop.f32.mrb[0].mxu0
        %v542 = vpop.f32.mrb[0].mxu0
        %v543 = vadd.f32 0.0, %v542
        %v544 = vpop.f32.mrb[0].mxu0
        %545 = vmatprep.mubr.bf16.mxu0 0
        %546 = vmatmul.mubr.bf16.gmra.mrb[0].mxu0 %v424
        %v547 = vpop.f32.mrb[0].mxu0
        %v548 = vadd.f32 0.0, %v547
        %v549 = vpop.f32.mrb[0].mxu0
        %v550 = vpop.f32.mrb[0].mxu0
        %v551 = vadd.f32 0.0, %v550
        %v552 = vpop.f32.mrb[0].mxu0
        %553 = vmatprep.mubr.bf16.mxu0 0
        %554 = vmatmul.mubr.bf16.gmra.mrb[0].mxu0 %v425
        %v555 = vpop.f32.mrb[0].mxu0
        %v556 = vadd.f32 0.0, %v555
        %v557 = vpop.f32.mrb[0].mxu0
        %v558 = vpop.f32.mrb[0].mxu0
        %v559 = vadd.f32 0.0, %v558
        %v560 = vpop.f32.mrb[0].mxu0
        %561 = vmatprep.mubr.bf16.mxu0 0
        %562 = vmatmul.mubr.bf16.gmra.mrb[0].mxu0 %v426
        %v563 = vpop.f32.mrb[0].mxu0
        %v564 = vadd.f32 0.0, %v563
        %v565 = vpop.f32.mrb[0].mxu0
        %v566 = vpop.f32.mrb[0].mxu0
        %v567 = vadd.f32 0.0, %v566
        %v568 = vpop.f32.mrb[0].mxu0
        %569 = vmatprep.mubr.bf16.mxu0 0
        %570 = vmatmul.mubr.bf16.gmra.mrb[0].mxu0 %v427
        %v571 = vpop.f32.mrb[0].mxu0
        %v572 = vadd.f32 0.0, %v571
        %v573 = vpop.f32.mrb[0].mxu0
        %v574 = vpop.f32.mrb[0].mxu0
        %v575 = vadd.f32 0.0, %v574
        %v576 = vpop.f32.mrb[0].mxu0
        %577 = vmatprep.mubr.bf16.mxu0 0
        %578 = vmatmul.mubr.bf16.gmra.mrb[0].mxu0 %v428
        %v579 = vpop.f32.mrb[0].mxu0
        %v580 = vadd.f32 0.0, %v579
        %v581 = vpop.f32.mrb[0].mxu0
        %v582 = vpop.f32.mrb[0].mxu0
        %v583 = vadd.f32 0.0, %v582
        %v584 = vpop.f32.mrb[0].mxu0
        %585 = vmatprep.mubr.bf16.mxu0 0
        %586 = vmatmul.mubr.bf16.gmra.mrb[0].mxu0 %v429
        %v587 = vpop.f32.mrb[0].mxu0
        %v588 = vadd.f32 0.0, %v587
        %v589 = vpop.f32.mrb[0].mxu0
        %v590 = vpop.f32.mrb[0].mxu0
        %v591 = vadd.f32 0.0, %v590
        %v592 = vpop.f32.mrb[0].mxu0
        %593 = vmatprep.mubr.bf16.mxu0 0
        %594 = vmatmul.mubr.bf16.gmra.mrb[0].mxu0 %v430
        %v595 = vpop.f32.mrb[0].mxu0
        %v596 = vadd.f32 0.0, %v595
        %v597 = vpop.f32.mrb[0].mxu0
        %v598 = vpop.f32.mrb[0].mxu0
        %v599 = vadd.f32 0.0, %v598
        %v600 = vpop.f32.mrb[0].mxu0
        %601 = vdwg.mxu0
        %v604 = vunpack.c.l.b16 %v312
        %v605 = vunpack.c.l.b16 %v313
        %v606 = vpack.c.b16 %v605, %v604
        %v624 = vunpack.c.l.b16 %v348
        %v625 = vunpack.c.l.b16 %v349
        %v626 = vunpack.c.l.b16 %v350
        %v627 = vunpack.c.l.b16 %v351
        %v628 = vunpack.c.l.b16 %v352
        %v629 = vunpack.c.l.b16 %v353
        %v630 = vunpack.c.l.b16 %v354
        %v631 = vunpack.c.l.b16 %v355
        %v632 = vunpack.c.l.b16 %v356
        %v633 = vunpack.c.l.b16 %v357
        %v634 = vunpack.c.l.b16 %v358
        %v635 = vunpack.c.l.b16 %v359
        %v636 = vunpack.c.l.b16 %v360
        %v637 = vunpack.c.l.b16 %v361
        %v638 = vunpack.c.l.b16 %v362
        %v639 = vunpack.c.l.b16 %v363
        %v640 = vpack.c.b16 %v625, %v624
        %v641 = vpack.c.b16 %v627, %v626
        %v642 = vpack.c.b16 %v629, %v628
        %v643 = vpack.c.b16 %v631, %v630
        %v644 = vpack.c.b16 %v633, %v632
        %v645 = vpack.c.b16 %v635, %v634
        %v646 = vpack.c.b16 %v637, %v636
        %v647 = vpack.c.b16 %v639, %v638
        %656 = vmatprep.subr.bf16.mxu0 0
        %657 = vmatpush1.bf16.msra.mxu0 %v640
        %658 = vmatprep.subr.bf16.mxu0 0
        %659 = vmatpush1.bf16.msra.mxu0 %v641
        %660 = vmatprep.subr.bf16.mxu0 0
        %661 = vmatpush1.bf16.msra.mxu0 %v642
        %662 = vmatprep.subr.bf16.mxu0 0
        %663 = vmatpush1.bf16.msra.mxu0 %v643
        %664 = vmatprep.subr.bf16.mxu0 0
        %665 = vmatpush1.bf16.msra.mxu0 %v644
        %666 = vmatprep.subr.bf16.mxu0 0
        %667 = vmatpush1.bf16.msra.mxu0 %v645
        %668 = vmatprep.subr.bf16.mxu0 0
        %669 = vmatpush1.bf16.msra.mxu0 %v646
        %670 = vmatprep.subr.bf16.mxu0 0
        %671 = vmatpush1.bf16.msra.mxu0 %v647
        %672 = vmatprep.subr.bf16.mxu0 0
        %673 = vmatpush1.bf16.msra.mxu0 0
        %674 = vmatprep.subr.bf16.mxu0 0
        %675 = vmatpush1.bf16.msra.mxu0 0
        %676 = vmatprep.subr.bf16.mxu0 0
        %677 = vmatpush1.bf16.msra.mxu0 0
        %678 = vmatprep.subr.bf16.mxu0 0
        %679 = vmatpush1.bf16.msra.mxu0 0
        %680 = vmatprep.subr.bf16.mxu0 0
        %681 = vmatpush1.bf16.msra.mxu0 0
        %682 = vmatprep.subr.bf16.mxu0 0
        %683 = vmatpush1.bf16.msra.mxu0 0
        %684 = vmatprep.subr.bf16.mxu0 0
        %685 = vmatpush1.bf16.msra.mxu0 0
        %686 = vmatprep.subr.bf16.mxu0 0
        %687 = vmatpush1.bf16.msra.mxu0 0
        %688 = vmatprep.mubr.bf16.mxu0 0
        %689 = vmatmul.mubr.bf16.gmra.mrb[0].mxu0 %v606
        %v690 = vpop.f32.mrb[0].mxu0
        %v691 = vadd.f32 %v524, %v690
        %v692 = vpop.f32.mrb[0].mxu0
        %v693 = vpop.f32.mrb[0].mxu0
        %v694 = vadd.f32 %v527, %v693
        %v695 = vpop.f32.mrb[0].mxu0
        %696 = vmatprep.mubr.bf16.mxu0 0
        %697 = vmatmul.mubr.bf16.gmra.mrb[0].mxu0 %v421
        %v698 = vpop.f32.mrb[0].mxu0
        %v699 = vadd.f32 %v532, %v698
        %v700 = vpop.f32.mrb[0].mxu0
        %v701 = vpop.f32.mrb[0].mxu0
        %v702 = vadd.f32 %v535, %v701
        %v703 = vpop.f32.mrb[0].mxu0
        %704 = vmatprep.mubr.bf16.mxu0 0
        %705 = vmatmul.mubr.bf16.gmra.mrb[0].mxu0 %v422
        %v706 = vpop.f32.mrb[0].mxu0
        %v707 = vadd.f32 %v540, %v706
        %v708 = vpop.f32.mrb[0].mxu0
        %v709 = vpop.f32.mrb[0].mxu0
        %v710 = vadd.f32 %v543, %v709
        %v711 = vpop.f32.mrb[0].mxu0
        %712 = vmatprep.mubr.bf16.mxu0 0
        %713 = vmatmul.mubr.bf16.gmra.mrb[0].mxu0 %v423
        %v714 = vpop.f32.mrb[0].mxu0
        %v715 = vadd.f32 %v548, %v714
        %v716 = vpop.f32.mrb[0].mxu0
        %v717 = vpop.f32.mrb[0].mxu0
        %v718 = vadd.f32 %v551, %v717
        %v719 = vpop.f32.mrb[0].mxu0
        %720 = vmatprep.mubr.bf16.mxu0 0
        %721 = vmatmul.mubr.bf16.gmra.mrb[0].mxu0 %v424
        %v722 = vpop.f32.mrb[0].mxu0
        %v723 = vadd.f32 %v556, %v722
        %v724 = vpop.f32.mrb[0].mxu0
        %v725 = vpop.f32.mrb[0].mxu0
        %v726 = vadd.f32 %v559, %v725
        %v727 = vpop.f32.mrb[0].mxu0
        %728 = vmatprep.mubr.bf16.mxu0 0
        %729 = vmatmul.mubr.bf16.gmra.mrb[0].mxu0 %v425
        %v730 = vpop.f32.mrb[0].mxu0
        %v731 = vadd.f32 %v564, %v730
        %v732 = vpop.f32.mrb[0].mxu0
        %v733 = vpop.f32.mrb[0].mxu0
        %v734 = vadd.f32 %v567, %v733
        %v735 = vpop.f32.mrb[0].mxu0
        %736 = vmatprep.mubr.bf16.mxu0 0
        %737 = vmatmul.mubr.bf16.gmra.mrb[0].mxu0 %v426
        %v738 = vpop.f32.mrb[0].mxu0
        %v739 = vadd.f32 %v572, %v738
        %v740 = vpop.f32.mrb[0].mxu0
        %v741 = vpop.f32.mrb[0].mxu0
        %v742 = vadd.f32 %v575, %v741
        %v743 = vpop.f32.mrb[0].mxu0
        %744 = vmatprep.mubr.bf16.mxu0 0
        %745 = vmatmul.mubr.bf16.gmra.mrb[0].mxu0 %v427
        %v746 = vpop.f32.mrb[0].mxu0
        %v747 = vadd.f32 %v580, %v746
        %v748 = vpop.f32.mrb[0].mxu0
        %v749 = vpop.f32.mrb[0].mxu0
        %v750 = vadd.f32 %v583, %v749
        %v751 = vpop.f32.mrb[0].mxu0
        %752 = vmatprep.mubr.bf16.mxu0 0
        %753 = vmatmul.mubr.bf16.gmra.mrb[0].mxu0 %v428
        %v754 = vpop.f32.mrb[0].mxu0
        %v755 = vadd.f32 %v588, %v754
        %v756 = vpop.f32.mrb[0].mxu0
        %v757 = vpop.f32.mrb[0].mxu0
        %v758 = vadd.f32 %v591, %v757
        %v759 = vpop.f32.mrb[0].mxu0
        %760 = vmatprep.mubr.bf16.mxu0 0
        %761 = vmatmul.mubr.bf16.gmra.mrb[0].mxu0 %v429
        %v762 = vpop.f32.mrb[0].mxu0
        %v763 = vadd.f32 %v596, %v762
        %v764 = vpop.f32.mrb[0].mxu0
        %v765 = vpop.f32.mrb[0].mxu0
        %v766 = vadd.f32 %v599, %v765
        %v767 = vpop.f32.mrb[0].mxu0
        %768 = vdwg.mxu0
        %s769 = scalar_lea.vmem %s1, 384
        %v770 = vld [vmem:[%s769] sm:$0xf]
        %v771 = vld [vmem:[%s769 + $0x4] sm:$0xf]
        %v772 = vld [vmem:[%s769 + $0x8] sm:$0xf]
        %v773 = vld [vmem:[%s769 + $0xc] sm:$0xf]
        %v774 = vld [vmem:[%s769 + $0x10] sm:$0xf]
        %v775 = vld [vmem:[%s769 + $0x14] sm:$0xf]
        %v776 = vld [vmem:[%s769 + $0x18] sm:$0xf]
        %v777 = vld [vmem:[%s769 + $0x1c] sm:$0xf]
        %v778 = vld [vmem:[%s769 + $0x20] sm:$0xf]
        %v779 = vld [vmem:[%s769 + $0x24] sm:$0xf]
        %v780 = vld [vmem:[%s769 + $0x28] sm:$0xf]
        %v781 = vld [vmem:[%s769 + $0x2c] sm:$0xf]
        %v782 = vld [vmem:[%s769 + $0x30] sm:$0xf]
        %v783 = vld [vmem:[%s769 + $0x34] sm:$0xf]
        %v784 = vld [vmem:[%s769 + $0x38] sm:$0xf]
        %v785 = vld [vmem:[%s769 + $0x3c] sm:$0xf]
        %v788 = vunpack.c.l.b16 %v345
        %v789 = vunpack.c.l.b16 %v346
        %v790 = vpack.c.b16 %v789, %v788
        %v808 = vunpack.c.l.b16 %v770
        %v809 = vunpack.c.l.b16 %v771
        %v810 = vunpack.c.l.b16 %v772
        %v811 = vunpack.c.l.b16 %v773
        %v812 = vunpack.c.l.b16 %v774
        %v813 = vunpack.c.l.b16 %v775
        %v814 = vunpack.c.l.b16 %v776
        %v815 = vunpack.c.l.b16 %v777
        %v816 = vunpack.c.l.b16 %v778
        %v817 = vunpack.c.l.b16 %v779
        %v818 = vunpack.c.l.b16 %v780
        %v819 = vunpack.c.l.b16 %v781
        %v820 = vunpack.c.l.b16 %v782
        %v821 = vunpack.c.l.b16 %v783
        %v822 = vunpack.c.l.b16 %v784
        %v823 = vunpack.c.l.b16 %v785
        %v824 = vpack.c.b16 %v809, %v808
        %v825 = vpack.c.b16 %v811, %v810
        %v826 = vpack.c.b16 %v813, %v812
        %v827 = vpack.c.b16 %v815, %v814
        %v828 = vpack.c.b16 %v817, %v816
        %v829 = vpack.c.b16 %v819, %v818
        %v830 = vpack.c.b16 %v821, %v820
        %v831 = vpack.c.b16 %v823, %v822
        %840 = vmatprep.subr.bf16.mxu0 0
        %841 = vmatpush1.bf16.msra.mxu0 %v824
        %842 = vmatprep.subr.bf16.mxu0 0
        %843 = vmatpush1.bf16.msra.mxu0 %v825
        %844 = vmatprep.subr.bf16.mxu0 0
        %845 = vmatpush1.bf16.msra.mxu0 %v826
        %846 = vmatprep.subr.bf16.mxu0 0
        %847 = vmatpush1.bf16.msra.mxu0 %v827
        %848 = vmatprep.subr.bf16.mxu0 0
        %849 = vmatpush1.bf16.msra.mxu0 %v828
        %850 = vmatprep.subr.bf16.mxu0 0
        %851 = vmatpush1.bf16.msra.mxu0 %v829
        %852 = vmatprep.subr.bf16.mxu0 0
        %853 = vmatpush1.bf16.msra.mxu0 %v830
        %854 = vmatprep.subr.bf16.mxu0 0
        %855 = vmatpush1.bf16.msra.mxu0 %v831
        %856 = vmatprep.subr.bf16.mxu0 0
        %857 = vmatpush1.bf16.msra.mxu0 0
        %858 = vmatprep.subr.bf16.mxu0 0
        %859 = vmatpush1.bf16.msra.mxu0 0
        %860 = vmatprep.subr.bf16.mxu0 0
        %861 = vmatpush1.bf16.msra.mxu0 0
        %862 = vmatprep.subr.bf16.mxu0 0
        %863 = vmatpush1.bf16.msra.mxu0 0
        %864 = vmatprep.subr.bf16.mxu0 0
        %865 = vmatpush1.bf16.msra.mxu0 0
        %866 = vmatprep.subr.bf16.mxu0 0
        %867 = vmatpush1.bf16.msra.mxu0 0
        %868 = vmatprep.subr.bf16.mxu0 0
        %869 = vmatpush1.bf16.msra.mxu0 0
        %870 = vmatprep.subr.bf16.mxu0 0
        %871 = vmatpush1.bf16.msra.mxu0 0
        %872 = vmatprep.mubr.bf16.mxu0 0
        %873 = vmatmul.mubr.bf16.gmra.mrb[0].mxu0 %v422
        %v874 = vpop.f32.mrb[0].mxu0
        %v875 = vadd.f32 0.0, %v874
        %v876 = vpop.f32.mrb[0].mxu0
        %v877 = vpop.f32.mrb[0].mxu0
        %v878 = vadd.f32 0.0, %v877
        %v879 = vpop.f32.mrb[0].mxu0
        %880 = vmatprep.mubr.bf16.mxu0 0
        %881 = vmatmul.mubr.bf16.gmra.mrb[0].mxu0 %v423
        %v882 = vpop.f32.mrb[0].mxu0
        %v883 = vadd.f32 0.0, %v882
        %v884 = vpop.f32.mrb[0].mxu0
        %v885 = vpop.f32.mrb[0].mxu0
        %v886 = vadd.f32 0.0, %v885
        %v887 = vpop.f32.mrb[0].mxu0
        %888 = vmatprep.mubr.bf16.mxu0 0
        %889 = vmatmul.mubr.bf16.gmra.mrb[0].mxu0 %v424
        %v890 = vpop.f32.mrb[0].mxu0
        %v891 = vadd.f32 0.0, %v890
        %v892 = vpop.f32.mrb[0].mxu0
        %v893 = vpop.f32.mrb[0].mxu0
        %v894 = vadd.f32 0.0, %v893
        %v895 = vpop.f32.mrb[0].mxu0
        %896 = vmatprep.mubr.bf16.mxu0 0
        %897 = vmatmul.mubr.bf16.gmra.mrb[0].mxu0 %v425
        %v898 = vpop.f32.mrb[0].mxu0
        %v899 = vadd.f32 0.0, %v898
        %v900 = vpop.f32.mrb[0].mxu0
        %v901 = vpop.f32.mrb[0].mxu0
        %v902 = vadd.f32 0.0, %v901
        %v903 = vpop.f32.mrb[0].mxu0
        %904 = vmatprep.mubr.bf16.mxu0 0
        %905 = vmatmul.mubr.bf16.gmra.mrb[0].mxu0 %v426
        %v906 = vpop.f32.mrb[0].mxu0
        %v907 = vadd.f32 0.0, %v906
        %v908 = vpop.f32.mrb[0].mxu0
        %v909 = vpop.f32.mrb[0].mxu0
        %v910 = vadd.f32 0.0, %v909
        %v911 = vpop.f32.mrb[0].mxu0
        %912 = vmatprep.mubr.bf16.mxu0 0
        %913 = vmatmul.mubr.bf16.gmra.mrb[0].mxu0 %v427
        %v914 = vpop.f32.mrb[0].mxu0
        %v915 = vadd.f32 0.0, %v914
        %v916 = vpop.f32.mrb[0].mxu0
        %v917 = vpop.f32.mrb[0].mxu0
        %v918 = vadd.f32 0.0, %v917
        %v919 = vpop.f32.mrb[0].mxu0
        %920 = vmatprep.mubr.bf16.mxu0 0
        %921 = vmatmul.mubr.bf16.gmra.mrb[0].mxu0 %v428
        %v922 = vpop.f32.mrb[0].mxu0
        %v923 = vadd.f32 0.0, %v922
        %v924 = vpop.f32.mrb[0].mxu0
        %v925 = vpop.f32.mrb[0].mxu0
        %v926 = vadd.f32 0.0, %v925
        %v927 = vpop.f32.mrb[0].mxu0
        %928 = vmatprep.mubr.bf16.mxu0 0
        %929 = vmatmul.mubr.bf16.gmra.mrb[0].mxu0 %v429
        %v930 = vpop.f32.mrb[0].mxu0
        %v931 = vadd.f32 0.0, %v930
        %v932 = vpop.f32.mrb[0].mxu0
        %v933 = vpop.f32.mrb[0].mxu0
        %v934 = vadd.f32 0.0, %v933
        %v935 = vpop.f32.mrb[0].mxu0
        %936 = vmatprep.mubr.bf16.mxu0 0
        %937 = vmatmul.mubr.bf16.gmra.mrb[0].mxu0 %v430
        %v938 = vpop.f32.mrb[0].mxu0
        %v939 = vadd.f32 0.0, %v938
        %v940 = vpop.f32.mrb[0].mxu0
        %v941 = vpop.f32.mrb[0].mxu0
        %v942 = vadd.f32 0.0, %v941
        %v943 = vpop.f32.mrb[0].mxu0
        %944 = vmatprep.mubr.bf16.mxu0 0
        %945 = vmatmul.mubr.bf16.gmra.mrb[0].mxu0 %v790
        %v946 = vpop.f32.mrb[0].mxu0
        %v947 = vadd.f32 0.0, %v946
        %v948 = vpop.f32.mrb[0].mxu0
        %v949 = vpop.f32.mrb[0].mxu0
        %v950 = vadd.f32 0.0, %v949
        %v951 = vpop.f32.mrb[0].mxu0
        %952 = vdwg.mxu0
        %v953 = vadd.f32 %v691, %v875
        %v954 = vadd.f32 %v694, %v878
        %v955 = vadd.f32 %v699, %v883
        %v956 = vadd.f32 %v702, %v886
        %v957 = vadd.f32 %v707, %v891
        %v958 = vadd.f32 %v710, %v894
        %v959 = vadd.f32 %v715, %v899
        %v960 = vadd.f32 %v718, %v902
        %v961 = vadd.f32 %v723, %v907
        %v962 = vadd.f32 %v726, %v910
        %v963 = vadd.f32 %v731, %v915
        %v964 = vadd.f32 %v734, %v918
        %v965 = vadd.f32 %v739, %v923
        %v966 = vadd.f32 %v742, %v926
        %v967 = vadd.f32 %v747, %v931
        %v968 = vadd.f32 %v750, %v934
        %v969 = vadd.f32 %v755, %v939
        %v970 = vadd.f32 %v758, %v942
        %v971 = vadd.f32 %v763, %v947
        %v972 = vadd.f32 %v766, %v950
        %vm973 = vsmask.f32 3328
        %vm974 = vsmask.f32 7440
        %vm975 = vmor %vm973, %vm974
        %v977 = vshrl.u32 %v312, 16
        %v979 = vrot.slane %v977, 4
        %v980 = vshll.u32 %v312, 16
        %v982 = vrot.slane %v980, 5
        %v983 = vor.u32 %v979, %v982
        %v984 = vrot.slane %v983, 4
        %v986 = vshll.u32 %v313, 16
        %v988 = vrot.slane %v986, 5
        %v989 = vsel %vm975, %v984, %v988
        %v990 = vshrl.u32 %v313, 16
        %v992 = vrot.slane %v990, 4
        %v993 = vor.u32 %v992, %v988
        %v994 = vrot.slane %v993, 4
        %v996 = vshll.u32 %v314, 16
        %v998 = vrot.slane %v996, 5
        %v999 = vsel %vm975, %v994, %v998
        %v1001 = vshrl.u32 %v315, 16
        %v1003 = vrot.slane %v1001, 4
        %v1004 = vshll.u32 %v315, 16
        %v1006 = vrot.slane %v1004, 5
        %v1007 = vor.u32 %v1003, %v1006
        %v1008 = vrot.slane %v1007, 4
        %v1010 = vshll.u32 %v316, 16
        %v1012 = vrot.slane %v1010, 5
        %v1013 = vsel %vm975, %v1008, %v1012
        %v1014 = vshrl.u32 %v316, 16
        %v1016 = vrot.slane %v1014, 4
        %v1017 = vor.u32 %v1016, %v1012
        %v1018 = vrot.slane %v1017, 4
        %v1020 = vshll.u32 %v317, 16
        %v1022 = vrot.slane %v1020, 5
        %v1023 = vsel %vm975, %v1018, %v1022
        %v1025 = vshrl.u32 %v318, 16
        %v1027 = vrot.slane %v1025, 4
        %v1028 = vshll.u32 %v318, 16
        %v1030 = vrot.slane %v1028, 5
        %v1031 = vor.u32 %v1027, %v1030
        %v1032 = vrot.slane %v1031, 4
        %v1034 = vshll.u32 %v319, 16
        %v1036 = vrot.slane %v1034, 5
        %v1037 = vsel %vm975, %v1032, %v1036
        %v1038 = vshrl.u32 %v319, 16
        %v1040 = vrot.slane %v1038, 4
        %v1041 = vor.u32 %v1040, %v1036
        %v1042 = vrot.slane %v1041, 4
        %v1044 = vshll.u32 %v320, 16
        %v1046 = vrot.slane %v1044, 5
        %v1047 = vsel %vm975, %v1042, %v1046
        %v1049 = vshrl.u32 %v321, 16
        %v1051 = vrot.slane %v1049, 4
        %v1052 = vshll.u32 %v321, 16
        %v1054 = vrot.slane %v1052, 5
        %v1055 = vor.u32 %v1051, %v1054
        %v1056 = vrot.slane %v1055, 4
        %v1058 = vshll.u32 %v322, 16
        %v1060 = vrot.slane %v1058, 5
        %v1061 = vsel %vm975, %v1056, %v1060
        %v1062 = vshrl.u32 %v322, 16
        %v1064 = vrot.slane %v1062, 4
        %v1065 = vor.u32 %v1064, %v1060
        %v1066 = vrot.slane %v1065, 4
        %v1068 = vshll.u32 %v323, 16
        %v1070 = vrot.slane %v1068, 5
        %v1071 = vsel %vm975, %v1066, %v1070
        %v1073 = vshrl.u32 %v324, 16
        %v1075 = vrot.slane %v1073, 4
        %v1076 = vshll.u32 %v324, 16
        %v1078 = vrot.slane %v1076, 5
        %v1079 = vor.u32 %v1075, %v1078
        %v1080 = vrot.slane %v1079, 4
        %v1082 = vshll.u32 %v325, 16
        %v1084 = vrot.slane %v1082, 5
        %v1085 = vsel %vm975, %v1080, %v1084
        %v1086 = vshrl.u32 %v325, 16
        %v1088 = vrot.slane %v1086, 4
        %v1089 = vor.u32 %v1088, %v1084
        %v1090 = vrot.slane %v1089, 4
        %v1092 = vshll.u32 %v326, 16
        %v1094 = vrot.slane %v1092, 5
        %v1095 = vsel %vm975, %v1090, %v1094
        %v1097 = vshrl.u32 %v327, 16
        %v1099 = vrot.slane %v1097, 4
        %v1100 = vshll.u32 %v327, 16
        %v1102 = vrot.slane %v1100, 5
        %v1103 = vor.u32 %v1099, %v1102
        %v1104 = vrot.slane %v1103, 4
        %v1106 = vshll.u32 %v328, 16
        %v1108 = vrot.slane %v1106, 5
        %v1109 = vsel %vm975, %v1104, %v1108
        %v1110 = vshrl.u32 %v328, 16
        %v1112 = vrot.slane %v1110, 4
        %v1113 = vor.u32 %v1112, %v1108
        %v1114 = vrot.slane %v1113, 4
        %v1116 = vshll.u32 %v329, 16
        %v1118 = vrot.slane %v1116, 5
        %v1119 = vsel %vm975, %v1114, %v1118
        %v1121 = vshrl.u32 %v330, 16
        %v1123 = vrot.slane %v1121, 4
        %v1124 = vshll.u32 %v330, 16
        %v1126 = vrot.slane %v1124, 5
        %v1127 = vor.u32 %v1123, %v1126
        %v1128 = vrot.slane %v1127, 4
        %v1130 = vshll.u32 %v331, 16
        %v1132 = vrot.slane %v1130, 5
        %v1133 = vsel %vm975, %v1128, %v1132
        %v1134 = vshrl.u32 %v331, 16
        %v1136 = vrot.slane %v1134, 4
        %v1137 = vor.u32 %v1136, %v1132
        %v1138 = vrot.slane %v1137, 4
        %v1140 = vshll.u32 %v332, 16
        %v1142 = vrot.slane %v1140, 5
        %v1143 = vsel %vm975, %v1138, %v1142
        %v1145 = vshrl.u32 %v333, 16
        %v1147 = vrot.slane %v1145, 4
        %v1148 = vshll.u32 %v333, 16
        %v1150 = vrot.slane %v1148, 5
        %v1151 = vor.u32 %v1147, %v1150
        %v1152 = vrot.slane %v1151, 4
        %v1154 = vshll.u32 %v334, 16
        %v1156 = vrot.slane %v1154, 5
        %v1157 = vsel %vm975, %v1152, %v1156
        %v1158 = vshrl.u32 %v334, 16
        %v1160 = vrot.slane %v1158, 4
        %v1161 = vor.u32 %v1160, %v1156
        %v1162 = vrot.slane %v1161, 4
        %v1164 = vshll.u32 %v335, 16
        %v1166 = vrot.slane %v1164, 5
        %v1167 = vsel %vm975, %v1162, %v1166
        %v1169 = vshrl.u32 %v336, 16
        %v1171 = vrot.slane %v1169, 4
        %v1172 = vshll.u32 %v336, 16
        %v1174 = vrot.slane %v1172, 5
        %v1175 = vor.u32 %v1171, %v1174
        %v1176 = vrot.slane %v1175, 4
        %v1178 = vshll.u32 %v337, 16
        %v1180 = vrot.slane %v1178, 5
        %v1181 = vsel %vm975, %v1176, %v1180
        %v1182 = vshrl.u32 %v337, 16
        %v1184 = vrot.slane %v1182, 4
        %v1185 = vor.u32 %v1184, %v1180
        %v1186 = vrot.slane %v1185, 4
        %v1188 = vshll.u32 %v338, 16
        %v1190 = vrot.slane %v1188, 5
        %v1191 = vsel %vm975, %v1186, %v1190
        %v1193 = vshrl.u32 %v339, 16
        %v1195 = vrot.slane %v1193, 4
        %v1196 = vshll.u32 %v339, 16
        %v1198 = vrot.slane %v1196, 5
        %v1199 = vor.u32 %v1195, %v1198
        %v1200 = vrot.slane %v1199, 4
        %v1202 = vshll.u32 %v340, 16
        %v1204 = vrot.slane %v1202, 5
        %v1205 = vsel %vm975, %v1200, %v1204
        %v1206 = vshrl.u32 %v340, 16
        %v1208 = vrot.slane %v1206, 4
        %v1209 = vor.u32 %v1208, %v1204
        %v1210 = vrot.slane %v1209, 4
        %v1212 = vshll.u32 %v341, 16
        %v1214 = vrot.slane %v1212, 5
        %v1215 = vsel %vm975, %v1210, %v1214
        %s1216 = scalar_lea.vmem %s1, 64
        %v1217 = vld [vmem:[%s1216] sm:$0xf]
        %v1218 = vld [vmem:[%s1216 + $0x4] sm:$0xf]
        %v1219 = vld [vmem:[%s1216 + $0x8] sm:$0xf]
        %v1220 = vld [vmem:[%s1216 + $0xc] sm:$0xf]
        %v1221 = vld [vmem:[%s1216 + $0x10] sm:$0xf]
        %v1222 = vld [vmem:[%s1216 + $0x14] sm:$0xf]
        %v1223 = vld [vmem:[%s1216 + $0x18] sm:$0xf]
        %v1224 = vld [vmem:[%s1216 + $0x1c] sm:$0xf]
        %v1225 = vld [vmem:[%s1216 + $0x20] sm:$0xf]
        %v1226 = vld [vmem:[%s1216 + $0x24] sm:$0xf]
        %v1227 = vld [vmem:[%s1216 + $0x28] sm:$0xf]
        %v1228 = vld [vmem:[%s1216 + $0x2c] sm:$0xf]
        %v1229 = vld [vmem:[%s1216 + $0x30] sm:$0xf]
        %v1230 = vld [vmem:[%s1216 + $0x34] sm:$0xf]
        %v1231 = vld [vmem:[%s1216 + $0x38] sm:$0xf]
        %v1232 = vld [vmem:[%s1216 + $0x3c] sm:$0xf]
        %v1233 = vunpack.c.l.b16 %v989
        %v1234 = vunpack.c.l.b16 %v999
        %v1235 = vunpack.c.l.b16 %v1013
        %v1236 = vunpack.c.l.b16 %v1023
        %v1237 = vunpack.c.l.b16 %v1037
        %v1238 = vunpack.c.l.b16 %v1047
        %v1239 = vunpack.c.l.b16 %v1061
        %v1240 = vunpack.c.l.b16 %v1071
        %v1241 = vunpack.c.l.b16 %v1085
        %v1242 = vunpack.c.l.b16 %v1095
        %v1243 = vunpack.c.l.b16 %v1109
        %v1244 = vunpack.c.l.b16 %v1119
        %v1245 = vunpack.c.l.b16 %v1133
        %v1246 = vunpack.c.l.b16 %v1143
        %v1247 = vunpack.c.l.b16 %v1157
        %v1248 = vunpack.c.l.b16 %v1167
        %v1249 = vunpack.c.l.b16 %v1181
        %v1250 = vunpack.c.l.b16 %v1191
        %v1251 = vunpack.c.l.b16 %v1205
        %v1252 = vunpack.c.l.b16 %v1215
        %v1253 = vpack.c.b16 %v1234, %v1233
        %v1254 = vpack.c.b16 %v1236, %v1235
        %v1255 = vpack.c.b16 %v1238, %v1237
        %v1256 = vpack.c.b16 %v1240, %v1239
        %v1257 = vpack.c.b16 %v1242, %v1241
        %v1258 = vpack.c.b16 %v1244, %v1243
        %v1259 = vpack.c.b16 %v1246, %v1245
        %v1260 = vpack.c.b16 %v1248, %v1247
        %v1261 = vpack.c.b16 %v1250, %v1249
        %v1262 = vpack.c.b16 %v1252, %v1251
        %v1289 = vunpack.c.l.b16 %v1217
        %v1290 = vunpack.c.l.b16 %v1218
        %v1291 = vunpack.c.l.b16 %v1219
        %v1292 = vunpack.c.l.b16 %v1220
        %v1293 = vunpack.c.l.b16 %v1221
        %v1294 = vunpack.c.l.b16 %v1222
        %v1295 = vunpack.c.l.b16 %v1223
        %v1296 = vunpack.c.l.b16 %v1224
        %v1297 = vunpack.c.l.b16 %v1225
        %v1298 = vunpack.c.l.b16 %v1226
        %v1299 = vunpack.c.l.b16 %v1227
        %v1300 = vunpack.c.l.b16 %v1228
        %v1301 = vunpack.c.l.b16 %v1229
        %v1302 = vunpack.c.l.b16 %v1230
        %v1303 = vunpack.c.l.b16 %v1231
        %v1304 = vunpack.c.l.b16 %v1232
        %v1305 = vpack.c.b16 %v1290, %v1289
        %v1306 = vpack.c.b16 %v1292, %v1291
        %v1307 = vpack.c.b16 %v1294, %v1293
        %v1308 = vpack.c.b16 %v1296, %v1295
        %v1309 = vpack.c.b16 %v1298, %v1297
        %v1310 = vpack.c.b16 %v1300, %v1299
        %v1311 = vpack.c.b16 %v1302, %v1301
        %v1312 = vpack.c.b16 %v1304, %v1303
        %1321 = vmatprep.subr.bf16.mxu0 0
        %1322 = vmatpush1.bf16.msra.mxu0 %v1305
        %1323 = vmatprep.subr.bf16.mxu0 0
        %1324 = vmatpush1.bf16.msra.mxu0 %v1306
        %1325 = vmatprep.subr.bf16.mxu0 0
        %1326 = vmatpush1.bf16.msra.mxu0 %v1307
        %1327 = vmatprep.subr.bf16.mxu0 0
        %1328 = vmatpush1.bf16.msra.mxu0 %v1308
        %1329 = vmatprep.subr.bf16.mxu0 0
        %1330 = vmatpush1.bf16.msra.mxu0 %v1309
        %1331 = vmatprep.subr.bf16.mxu0 0
        %1332 = vmatpush1.bf16.msra.mxu0 %v1310
        %1333 = vmatprep.subr.bf16.mxu0 0
        %1334 = vmatpush1.bf16.msra.mxu0 %v1311
        %1335 = vmatprep.subr.bf16.mxu0 0
        %1336 = vmatpush1.bf16.msra.mxu0 %v1312
        %1337 = vmatprep.subr.bf16.mxu0 0
        %1338 = vmatpush1.bf16.msra.mxu0 0
        %1339 = vmatprep.subr.bf16.mxu0 0
        %1340 = vmatpush1.bf16.msra.mxu0 0
        %1341 = vmatprep.subr.bf16.mxu0 0
        %1342 = vmatpush1.bf16.msra.mxu0 0
        %1343 = vmatprep.subr.bf16.mxu0 0
        %1344 = vmatpush1.bf16.msra.mxu0 0
        %1345 = vmatprep.subr.bf16.mxu0 0
        %1346 = vmatpush1.bf16.msra.mxu0 0
        %1347 = vmatprep.subr.bf16.mxu0 0
        %1348 = vmatpush1.bf16.msra.mxu0 0
        %1349 = vmatprep.subr.bf16.mxu0 0
        %1350 = vmatpush1.bf16.msra.mxu0 0
        %1351 = vmatprep.subr.bf16.mxu0 0
        %1352 = vmatpush1.bf16.msra.mxu0 0
        %1353 = vmatprep.mubr.bf16.mxu0 0
        %1354 = vmatmul.mubr.bf16.gmra.mrb[0].mxu0 %v1253
        %v1355 = vpop.f32.mrb[0].mxu0
        %v1356 = vadd.f32 0.0, %v1355
        %v1357 = vpop.f32.mrb[0].mxu0
        %v1358 = vpop.f32.mrb[0].mxu0
        %v1359 = vadd.f32 0.0, %v1358
        %v1360 = vpop.f32.mrb[0].mxu0
        %1361 = vmatprep.mubr.bf16.mxu0 0
        %1362 = vmatmul.mubr.bf16.gmra.mrb[0].mxu0 %v1254
        %v1363 = vpop.f32.mrb[0].mxu0
        %v1364 = vadd.f32 0.0, %v1363
        %v1365 = vpop.f32.mrb[0].mxu0
        %v1366 = vpop.f32.mrb[0].mxu0
        %v1367 = vadd.f32 0.0, %v1366
        %v1368 = vpop.f32.mrb[0].mxu0
        %1369 = vmatprep.mubr.bf16.mxu0 0
        %1370 = vmatmul.mubr.bf16.gmra.mrb[0].mxu0 %v1255
        %v1371 = vpop.f32.mrb[0].mxu0
        %v1372 = vadd.f32 0.0, %v1371
        %v1373 = vpop.f32.mrb[0].mxu0
        %v1374 = vpop.f32.mrb[0].mxu0
        %v1375 = vadd.f32 0.0, %v1374
        %v1376 = vpop.f32.mrb[0].mxu0
        %1377 = vmatprep.mubr.bf16.mxu0 0
        %1378 = vmatmul.mubr.bf16.gmra.mrb[0].mxu0 %v1256
        %v1379 = vpop.f32.mrb[0].mxu0
        %v1380 = vadd.f32 0.0, %v1379
        %v1381 = vpop.f32.mrb[0].mxu0
        %v1382 = vpop.f32.mrb[0].mxu0
        %v1383 = vadd.f32 0.0, %v1382
        %v1384 = vpop.f32.mrb[0].mxu0
        %1385 = vmatprep.mubr.bf16.mxu0 0
        %1386 = vmatmul.mubr.bf16.gmra.mrb[0].mxu0 %v1257
        %v1387 = vpop.f32.mrb[0].mxu0
        %v1388 = vadd.f32 0.0, %v1387
        %v1389 = vpop.f32.mrb[0].mxu0
        %v1390 = vpop.f32.mrb[0].mxu0
        %v1391 = vadd.f32 0.0, %v1390
        %v1392 = vpop.f32.mrb[0].mxu0
        %1393 = vmatprep.mubr.bf16.mxu0 0
        %1394 = vmatmul.mubr.bf16.gmra.mrb[0].mxu0 %v1258
        %v1395 = vpop.f32.mrb[0].mxu0
        %v1396 = vadd.f32 0.0, %v1395
        %v1397 = vpop.f32.mrb[0].mxu0
        %v1398 = vpop.f32.mrb[0].mxu0
        %v1399 = vadd.f32 0.0, %v1398
        %v1400 = vpop.f32.mrb[0].mxu0
        %1401 = vmatprep.mubr.bf16.mxu0 0
        %1402 = vmatmul.mubr.bf16.gmra.mrb[0].mxu0 %v1259
        %v1403 = vpop.f32.mrb[0].mxu0
        %v1404 = vadd.f32 0.0, %v1403
        %v1405 = vpop.f32.mrb[0].mxu0
        %v1406 = vpop.f32.mrb[0].mxu0
        %v1407 = vadd.f32 0.0, %v1406
        %v1408 = vpop.f32.mrb[0].mxu0
        %1409 = vmatprep.mubr.bf16.mxu0 0
        %1410 = vmatmul.mubr.bf16.gmra.mrb[0].mxu0 %v1260
        %v1411 = vpop.f32.mrb[0].mxu0
        %v1412 = vadd.f32 0.0, %v1411
        %v1413 = vpop.f32.mrb[0].mxu0
        %v1414 = vpop.f32.mrb[0].mxu0
        %v1415 = vadd.f32 0.0, %v1414
        %v1416 = vpop.f32.mrb[0].mxu0
        %1417 = vmatprep.mubr.bf16.mxu0 0
        %1418 = vmatmul.mubr.bf16.gmra.mrb[0].mxu0 %v1261
        %v1419 = vpop.f32.mrb[0].mxu0
        %v1420 = vadd.f32 0.0, %v1419
        %v1421 = vpop.f32.mrb[0].mxu0
        %v1422 = vpop.f32.mrb[0].mxu0
        %v1423 = vadd.f32 0.0, %v1422
        %v1424 = vpop.f32.mrb[0].mxu0
        %1425 = vmatprep.mubr.bf16.mxu0 0
        %1426 = vmatmul.mubr.bf16.gmra.mrb[0].mxu0 %v1262
        %v1427 = vpop.f32.mrb[0].mxu0
        %v1428 = vadd.f32 0.0, %v1427
        %v1429 = vpop.f32.mrb[0].mxu0
        %v1430 = vpop.f32.mrb[0].mxu0
        %v1431 = vadd.f32 0.0, %v1430
        %v1432 = vpop.f32.mrb[0].mxu0
        %1433 = vdwg.mxu0
        %v1434 = vadd.f32 %v953, %v1356
        %v1435 = vadd.f32 %v954, %v1359
        %v1436 = vadd.f32 %v955, %v1364
        %v1437 = vadd.f32 %v956, %v1367
        %v1438 = vadd.f32 %v957, %v1372
        %v1439 = vadd.f32 %v958, %v1375
        %v1440 = vadd.f32 %v959, %v1380
        %v1441 = vadd.f32 %v960, %v1383
        %v1442 = vadd.f32 %v961, %v1388
        %v1443 = vadd.f32 %v962, %v1391
        %v1444 = vadd.f32 %v963, %v1396
        %v1445 = vadd.f32 %v964, %v1399
        %v1446 = vadd.f32 %v965, %v1404
        %v1447 = vadd.f32 %v966, %v1407
        %v1448 = vadd.f32 %v967, %v1412
        %v1449 = vadd.f32 %v968, %v1415
        %v1450 = vadd.f32 %v969, %v1420
        %v1451 = vadd.f32 %v970, %v1423
        %v1452 = vadd.f32 %v971, %v1428
        %v1453 = vadd.f32 %v972, %v1431
        %v1455 = vshrl.u32 %v342, 16
        %v1457 = vrot.slane %v1455, 4
        %v1458 = vshll.u32 %v342, 16
        %v1460 = vrot.slane %v1458, 5
        %v1461 = vor.u32 %v1457, %v1460
        %v1462 = vrot.slane %v1461, 4
        %v1464 = vshll.u32 %v343, 16
        %v1466 = vrot.slane %v1464, 5
        %v1467 = vsel %vm975, %v1462, %v1466
        %v1468 = vshrl.u32 %v343, 16
        %v1470 = vrot.slane %v1468, 4
        %v1471 = vor.u32 %v1470, %v1466
        %v1472 = vrot.slane %v1471, 4
        %v1474 = vshll.u32 %v344, 16
        %v1476 = vrot.slane %v1474, 5
        %v1477 = vsel %vm975, %v1472, %v1476
        %s1478 = scalar_lea.vmem %s1, 256
        %v1479 = vld [vmem:[%s1478] sm:$0xf]
        %v1480 = vld [vmem:[%s1478 + $0x4] sm:$0xf]
        %v1481 = vld [vmem:[%s1478 + $0x8] sm:$0xf]
        %v1482 = vld [vmem:[%s1478 + $0xc] sm:$0xf]
        %v1483 = vld [vmem:[%s1478 + $0x10] sm:$0xf]
        %v1484 = vld [vmem:[%s1478 + $0x14] sm:$0xf]
        %v1485 = vld [vmem:[%s1478 + $0x18] sm:$0xf]
        %v1486 = vld [vmem:[%s1478 + $0x1c] sm:$0xf]
        %v1487 = vld [vmem:[%s1478 + $0x20] sm:$0xf]
        %v1488 = vld [vmem:[%s1478 + $0x24] sm:$0xf]
        %v1489 = vld [vmem:[%s1478 + $0x28] sm:$0xf]
        %v1490 = vld [vmem:[%s1478 + $0x2c] sm:$0xf]
        %v1491 = vld [vmem:[%s1478 + $0x30] sm:$0xf]
        %v1492 = vld [vmem:[%s1478 + $0x34] sm:$0xf]
        %v1493 = vld [vmem:[%s1478 + $0x38] sm:$0xf]
        %v1494 = vld [vmem:[%s1478 + $0x3c] sm:$0xf]
        %v1495 = vunpack.c.l.b16 %v1467
        %v1496 = vunpack.c.l.b16 %v1477
        %v1497 = vpack.c.b16 %v1496, %v1495
        %v1515 = vunpack.c.l.b16 %v1479
        %v1516 = vunpack.c.l.b16 %v1480
        %v1517 = vunpack.c.l.b16 %v1481
        %v1518 = vunpack.c.l.b16 %v1482
        %v1519 = vunpack.c.l.b16 %v1483
        %v1520 = vunpack.c.l.b16 %v1484
        %v1521 = vunpack.c.l.b16 %v1485
        %v1522 = vunpack.c.l.b16 %v1486
        %v1523 = vunpack.c.l.b16 %v1487
        %v1524 = vunpack.c.l.b16 %v1488
        %v1525 = vunpack.c.l.b16 %v1489
        %v1526 = vunpack.c.l.b16 %v1490
        %v1527 = vunpack.c.l.b16 %v1491
        %v1528 = vunpack.c.l.b16 %v1492
        %v1529 = vunpack.c.l.b16 %v1493
        %v1530 = vunpack.c.l.b16 %v1494
        %v1531 = vpack.c.b16 %v1516, %v1515
        %v1532 = vpack.c.b16 %v1518, %v1517
        %v1533 = vpack.c.b16 %v1520, %v1519
        %v1534 = vpack.c.b16 %v1522, %v1521
        %v1535 = vpack.c.b16 %v1524, %v1523
        %v1536 = vpack.c.b16 %v1526, %v1525
        %v1537 = vpack.c.b16 %v1528, %v1527
        %v1538 = vpack.c.b16 %v1530, %v1529
        %1547 = vmatprep.subr.bf16.mxu0 0
        %1548 = vmatpush1.bf16.msra.mxu0 %v1531
        %1549 = vmatprep.subr.bf16.mxu0 0
        %1550 = vmatpush1.bf16.msra.mxu0 %v1532
        %1551 = vmatprep.subr.bf16.mxu0 0
        %1552 = vmatpush1.bf16.msra.mxu0 %v1533
        %1553 = vmatprep.subr.bf16.mxu0 0
        %1554 = vmatpush1.bf16.msra.mxu0 %v1534
        %1555 = vmatprep.subr.bf16.mxu0 0
        %1556 = vmatpush1.bf16.msra.mxu0 %v1535
        %1557 = vmatprep.subr.bf16.mxu0 0
        %1558 = vmatpush1.bf16.msra.mxu0 %v1536
        %1559 = vmatprep.subr.bf16.mxu0 0
        %1560 = vmatpush1.bf16.msra.mxu0 %v1537
        %1561 = vmatprep.subr.bf16.mxu0 0
        %1562 = vmatpush1.bf16.msra.mxu0 %v1538
        %1563 = vmatprep.subr.bf16.mxu0 0
        %1564 = vmatpush1.bf16.msra.mxu0 0
        %1565 = vmatprep.subr.bf16.mxu0 0
        %1566 = vmatpush1.bf16.msra.mxu0 0
        %1567 = vmatprep.subr.bf16.mxu0 0
        %1568 = vmatpush1.bf16.msra.mxu0 0
        %1569 = vmatprep.subr.bf16.mxu0 0
        %1570 = vmatpush1.bf16.msra.mxu0 0
        %1571 = vmatprep.subr.bf16.mxu0 0
        %1572 = vmatpush1.bf16.msra.mxu0 0
        %1573 = vmatprep.subr.bf16.mxu0 0
        %1574 = vmatpush1.bf16.msra.mxu0 0
        %1575 = vmatprep.subr.bf16.mxu0 0
        %1576 = vmatpush1.bf16.msra.mxu0 0
        %1577 = vmatprep.subr.bf16.mxu0 0
        %1578 = vmatpush1.bf16.msra.mxu0 0
        %1579 = vmatprep.mubr.bf16.mxu0 0
        %1580 = vmatmul.mubr.bf16.gmra.mrb[0].mxu0 %v1254
        %v1581 = vpop.f32.mrb[0].mxu0
        %v1582 = vadd.f32 0.0, %v1581
        %v1583 = vpop.f32.mrb[0].mxu0
        %v1584 = vpop.f32.mrb[0].mxu0
        %v1585 = vadd.f32 0.0, %v1584
        %v1586 = vpop.f32.mrb[0].mxu0
        %1587 = vmatprep.mubr.bf16.mxu0 0
        %1588 = vmatmul.mubr.bf16.gmra.mrb[0].mxu0 %v1255
        %v1589 = vpop.f32.mrb[0].mxu0
        %v1590 = vadd.f32 0.0, %v1589
        %v1591 = vpop.f32.mrb[0].mxu0
        %v1592 = vpop.f32.mrb[0].mxu0
        %v1593 = vadd.f32 0.0, %v1592
        %v1594 = vpop.f32.mrb[0].mxu0
        %1595 = vmatprep.mubr.bf16.mxu0 0
        %1596 = vmatmul.mubr.bf16.gmra.mrb[0].mxu0 %v1256
        %v1597 = vpop.f32.mrb[0].mxu0
        %v1598 = vadd.f32 0.0, %v1597
        %v1599 = vpop.f32.mrb[0].mxu0
        %v1600 = vpop.f32.mrb[0].mxu0
        %v1601 = vadd.f32 0.0, %v1600
        %v1602 = vpop.f32.mrb[0].mxu0
        %1603 = vmatprep.mubr.bf16.mxu0 0
        %1604 = vmatmul.mubr.bf16.gmra.mrb[0].mxu0 %v1257
        %v1605 = vpop.f32.mrb[0].mxu0
        %v1606 = vadd.f32 0.0, %v1605
        %v1607 = vpop.f32.mrb[0].mxu0
        %v1608 = vpop.f32.mrb[0].mxu0
        %v1609 = vadd.f32 0.0, %v1608
        %v1610 = vpop.f32.mrb[0].mxu0
        %1611 = vmatprep.mubr.bf16.mxu0 0
        %1612 = vmatmul.mubr.bf16.gmra.mrb[0].mxu0 %v1258
        %v1613 = vpop.f32.mrb[0].mxu0
        %v1614 = vadd.f32 0.0, %v1613
        %v1615 = vpop.f32.mrb[0].mxu0
        %v1616 = vpop.f32.mrb[0].mxu0
        %v1617 = vadd.f32 0.0, %v1616
        %v1618 = vpop.f32.mrb[0].mxu0
        %1619 = vmatprep.mubr.bf16.mxu0 0
        %1620 = vmatmul.mubr.bf16.gmra.mrb[0].mxu0 %v1259
        %v1621 = vpop.f32.mrb[0].mxu0
        %v1622 = vadd.f32 0.0, %v1621
        %v1623 = vpop.f32.mrb[0].mxu0
        %v1624 = vpop.f32.mrb[0].mxu0
        %v1625 = vadd.f32 0.0, %v1624
        %v1626 = vpop.f32.mrb[0].mxu0
        %1627 = vmatprep.mubr.bf16.mxu0 0
        %1628 = vmatmul.mubr.bf16.gmra.mrb[0].mxu0 %v1260
        %v1629 = vpop.f32.mrb[0].mxu0
        %v1630 = vadd.f32 0.0, %v1629
        %v1631 = vpop.f32.mrb[0].mxu0
        %v1632 = vpop.f32.mrb[0].mxu0
        %v1633 = vadd.f32 0.0, %v1632
        %v1634 = vpop.f32.mrb[0].mxu0
        %1635 = vmatprep.mubr.bf16.mxu0 0
        %1636 = vmatmul.mubr.bf16.gmra.mrb[0].mxu0 %v1261
        %v1637 = vpop.f32.mrb[0].mxu0
        %v1638 = vadd.f32 0.0, %v1637
        %v1639 = vpop.f32.mrb[0].mxu0
        %v1640 = vpop.f32.mrb[0].mxu0
        %v1641 = vadd.f32 0.0, %v1640
        %v1642 = vpop.f32.mrb[0].mxu0
        %1643 = vmatprep.mubr.bf16.mxu0 0
        %1644 = vmatmul.mubr.bf16.gmra.mrb[0].mxu0 %v1262
        %v1645 = vpop.f32.mrb[0].mxu0
        %v1646 = vadd.f32 0.0, %v1645
        %v1647 = vpop.f32.mrb[0].mxu0
        %v1648 = vpop.f32.mrb[0].mxu0
        %v1649 = vadd.f32 0.0, %v1648
        %v1650 = vpop.f32.mrb[0].mxu0
        %1651 = vmatprep.mubr.bf16.mxu0 0
        %1652 = vmatmul.mubr.bf16.gmra.mrb[0].mxu0 %v1497
        %v1653 = vpop.f32.mrb[0].mxu0
        %v1654 = vadd.f32 0.0, %v1653
        %v1655 = vpop.f32.mrb[0].mxu0
        %v1656 = vpop.f32.mrb[0].mxu0
        %v1657 = vadd.f32 0.0, %v1656
        %v1658 = vpop.f32.mrb[0].mxu0
        %1659 = vdwg.mxu0
        %v1660 = vadd.f32 %v1434, %v1582
        %v1661 = vadd.f32 %v1435, %v1585
        %v1662 = vadd.f32 %v1436, %v1590
        %v1663 = vadd.f32 %v1437, %v1593
        %v1664 = vadd.f32 %v1438, %v1598
        %v1665 = vadd.f32 %v1439, %v1601
        %v1666 = vadd.f32 %v1440, %v1606
        %v1667 = vadd.f32 %v1441, %v1609
        %v1668 = vadd.f32 %v1442, %v1614
        %v1669 = vadd.f32 %v1443, %v1617
        %v1670 = vadd.f32 %v1444, %v1622
        %v1671 = vadd.f32 %v1445, %v1625
        %v1672 = vadd.f32 %v1446, %v1630
        %v1673 = vadd.f32 %v1447, %v1633
        %v1674 = vadd.f32 %v1448, %v1638
        %v1675 = vadd.f32 %v1449, %v1641
        %v1676 = vadd.f32 %v1450, %v1646
        %v1677 = vadd.f32 %v1451, %v1649
        %v1678 = vadd.f32 %v1452, %v1654
        %v1679 = vadd.f32 %v1453, %v1657
        %v1681 = vshrl.u32 %v345, 16
        %v1683 = vrot.slane %v1681, 4
        %v1684 = vshll.u32 %v345, 16
        %v1686 = vrot.slane %v1684, 5
        %v1687 = vor.u32 %v1683, %v1686
        %v1688 = vrot.slane %v1687, 4
        %v1690 = vshll.u32 %v346, 16
        %v1692 = vrot.slane %v1690, 5
        %v1693 = vsel %vm975, %v1688, %v1692
        %v1694 = vshrl.u32 %v346, 16
        %v1696 = vrot.slane %v1694, 4
        %v1697 = vor.u32 %v1696, %v1692
        %v1698 = vrot.slane %v1697, 4
        %v1700 = vshll.u32 %v347, 16
        %v1702 = vrot.slane %v1700, 5
        %v1703 = vsel %vm975, %v1698, %v1702
        %s1704 = scalar_lea.vmem %s1, 448
        %v1705 = vld [vmem:[%s1704] sm:$0xf]
        %v1706 = vld [vmem:[%s1704 + $0x4] sm:$0xf]
        %v1707 = vld [vmem:[%s1704 + $0x8] sm:$0xf]
        %v1708 = vld [vmem:[%s1704 + $0xc] sm:$0xf]
        %v1709 = vld [vmem:[%s1704 + $0x10] sm:$0xf]
        %v1710 = vld [vmem:[%s1704 + $0x14] sm:$0xf]
        %v1711 = vld [vmem:[%s1704 + $0x18] sm:$0xf]
        %v1712 = vld [vmem:[%s1704 + $0x1c] sm:$0xf]
        %v1713 = vld [vmem:[%s1704 + $0x20] sm:$0xf]
        %v1714 = vld [vmem:[%s1704 + $0x24] sm:$0xf]
        %v1715 = vld [vmem:[%s1704 + $0x28] sm:$0xf]
        %v1716 = vld [vmem:[%s1704 + $0x2c] sm:$0xf]
        %v1717 = vld [vmem:[%s1704 + $0x30] sm:$0xf]
        %v1718 = vld [vmem:[%s1704 + $0x34] sm:$0xf]
        %v1719 = vld [vmem:[%s1704 + $0x38] sm:$0xf]
        %v1720 = vld [vmem:[%s1704 + $0x3c] sm:$0xf]
        %v1721 = vunpack.c.l.b16 %v1693
        %v1722 = vunpack.c.l.b16 %v1703
        %v1723 = vpack.c.b16 %v1722, %v1721
        %v1741 = vunpack.c.l.b16 %v1705
        %v1742 = vunpack.c.l.b16 %v1706
        %v1743 = vunpack.c.l.b16 %v1707
        %v1744 = vunpack.c.l.b16 %v1708
        %v1745 = vunpack.c.l.b16 %v1709
        %v1746 = vunpack.c.l.b16 %v1710
        %v1747 = vunpack.c.l.b16 %v1711
        %v1748 = vunpack.c.l.b16 %v1712
        %v1749 = vunpack.c.l.b16 %v1713
        %v1750 = vunpack.c.l.b16 %v1714
        %v1751 = vunpack.c.l.b16 %v1715
        %v1752 = vunpack.c.l.b16 %v1716
        %v1753 = vunpack.c.l.b16 %v1717
        %v1754 = vunpack.c.l.b16 %v1718
        %v1755 = vunpack.c.l.b16 %v1719
        %v1756 = vunpack.c.l.b16 %v1720
        %v1757 = vpack.c.b16 %v1742, %v1741
        %v1758 = vpack.c.b16 %v1744, %v1743
        %v1759 = vpack.c.b16 %v1746, %v1745
        %v1760 = vpack.c.b16 %v1748, %v1747
        %v1761 = vpack.c.b16 %v1750, %v1749
        %v1762 = vpack.c.b16 %v1752, %v1751
        %v1763 = vpack.c.b16 %v1754, %v1753
        %v1764 = vpack.c.b16 %v1756, %v1755
        %1773 = vmatprep.subr.bf16.mxu0 0
        %1774 = vmatpush1.bf16.msra.mxu0 %v1757
        %1775 = vmatprep.subr.bf16.mxu0 0
        %1776 = vmatpush1.bf16.msra.mxu0 %v1758
        %1777 = vmatprep.subr.bf16.mxu0 0
        %1778 = vmatpush1.bf16.msra.mxu0 %v1759
        %1779 = vmatprep.subr.bf16.mxu0 0
        %1780 = vmatpush1.bf16.msra.mxu0 %v1760
        %1781 = vmatprep.subr.bf16.mxu0 0
        %1782 = vmatpush1.bf16.msra.mxu0 %v1761
        %1783 = vmatprep.subr.bf16.mxu0 0
        %1784 = vmatpush1.bf16.msra.mxu0 %v1762
        %1785 = vmatprep.subr.bf16.mxu0 0
        %1786 = vmatpush1.bf16.msra.mxu0 %v1763
        %1787 = vmatprep.subr.bf16.mxu0 0
        %1788 = vmatpush1.bf16.msra.mxu0 %v1764
        %1789 = vmatprep.subr.bf16.mxu0 0
        %1790 = vmatpush1.bf16.msra.mxu0 0
        %1791 = vmatprep.subr.bf16.mxu0 0
        %1792 = vmatpush1.bf16.msra.mxu0 0
        %1793 = vmatprep.subr.bf16.mxu0 0
        %1794 = vmatpush1.bf16.msra.mxu0 0
        %1795 = vmatprep.subr.bf16.mxu0 0
        %1796 = vmatpush1.bf16.msra.mxu0 0
        %1797 = vmatprep.subr.bf16.mxu0 0
        %1798 = vmatpush1.bf16.msra.mxu0 0
        %1799 = vmatprep.subr.bf16.mxu0 0
        %1800 = vmatpush1.bf16.msra.mxu0 0
        %1801 = vmatprep.subr.bf16.mxu0 0
        %1802 = vmatpush1.bf16.msra.mxu0 0
        %1803 = vmatprep.subr.bf16.mxu0 0
        %1804 = vmatpush1.bf16.msra.mxu0 0
        %1805 = vmatprep.mubr.bf16.mxu0 0
        %1806 = vmatmul.mubr.bf16.gmra.mrb[0].mxu0 %v1255
        %v1807 = vpop.f32.mrb[0].mxu0
        %v1808 = vadd.f32 0.0, %v1807
        %v1809 = vpop.f32.mrb[0].mxu0
        %v1810 = vpop.f32.mrb[0].mxu0
        %v1811 = vadd.f32 0.0, %v1810
        %v1812 = vpop.f32.mrb[0].mxu0
        %1813 = vmatprep.mubr.bf16.mxu0 0
        %1814 = vmatmul.mubr.bf16.gmra.mrb[0].mxu0 %v1256
        %v1815 = vpop.f32.mrb[0].mxu0
        %v1816 = vadd.f32 0.0, %v1815
        %v1817 = vpop.f32.mrb[0].mxu0
        %v1818 = vpop.f32.mrb[0].mxu0
        %v1819 = vadd.f32 0.0, %v1818
        %v1820 = vpop.f32.mrb[0].mxu0
        %1821 = vmatprep.mubr.bf16.mxu0 0
        %1822 = vmatmul.mubr.bf16.gmra.mrb[0].mxu0 %v1257
        %v1823 = vpop.f32.mrb[0].mxu0
        %v1824 = vadd.f32 0.0, %v1823
        %v1825 = vpop.f32.mrb[0].mxu0
        %v1826 = vpop.f32.mrb[0].mxu0
        %v1827 = vadd.f32 0.0, %v1826
        %v1828 = vpop.f32.mrb[0].mxu0
        %1829 = vmatprep.mubr.bf16.mxu0 0
        %1830 = vmatmul.mubr.bf16.gmra.mrb[0].mxu0 %v1258
        %v1831 = vpop.f32.mrb[0].mxu0
        %v1832 = vadd.f32 0.0, %v1831
        %v1833 = vpop.f32.mrb[0].mxu0
        %v1834 = vpop.f32.mrb[0].mxu0
        %v1835 = vadd.f32 0.0, %v1834
        %v1836 = vpop.f32.mrb[0].mxu0
        %1837 = vmatprep.mubr.bf16.mxu0 0
        %1838 = vmatmul.mubr.bf16.gmra.mrb[0].mxu0 %v1259
        %v1839 = vpop.f32.mrb[0].mxu0
        %v1840 = vadd.f32 0.0, %v1839
        %v1841 = vpop.f32.mrb[0].mxu0
        %v1842 = vpop.f32.mrb[0].mxu0
        %v1843 = vadd.f32 0.0, %v1842
        %v1844 = vpop.f32.mrb[0].mxu0
        %1845 = vmatprep.mubr.bf16.mxu0 0
        %1846 = vmatmul.mubr.bf16.gmra.mrb[0].mxu0 %v1260
        %v1847 = vpop.f32.mrb[0].mxu0
        %v1848 = vadd.f32 0.0, %v1847
        %v1849 = vpop.f32.mrb[0].mxu0
        %v1850 = vpop.f32.mrb[0].mxu0
        %v1851 = vadd.f32 0.0, %v1850
        %v1852 = vpop.f32.mrb[0].mxu0
        %1853 = vmatprep.mubr.bf16.mxu0 0
        %1854 = vmatmul.mubr.bf16.gmra.mrb[0].mxu0 %v1261
        %v1855 = vpop.f32.mrb[0].mxu0
        %v1856 = vadd.f32 0.0, %v1855
        %v1857 = vpop.f32.mrb[0].mxu0
        %v1858 = vpop.f32.mrb[0].mxu0
        %v1859 = vadd.f32 0.0, %v1858
        %v1860 = vpop.f32.mrb[0].mxu0
        %1861 = vmatprep.mubr.bf16.mxu0 0
        %1862 = vmatmul.mubr.bf16.gmra.mrb[0].mxu0 %v1262
        %v1863 = vpop.f32.mrb[0].mxu0
        %v1864 = vadd.f32 0.0, %v1863
        %v1865 = vpop.f32.mrb[0].mxu0
        %v1866 = vpop.f32.mrb[0].mxu0
        %v1867 = vadd.f32 0.0, %v1866
        %v1868 = vpop.f32.mrb[0].mxu0
        %1869 = vmatprep.mubr.bf16.mxu0 0
        %1870 = vmatmul.mubr.bf16.gmra.mrb[0].mxu0 %v1497
        %v1871 = vpop.f32.mrb[0].mxu0
        %v1872 = vadd.f32 0.0, %v1871
        %v1873 = vpop.f32.mrb[0].mxu0
        %v1874 = vpop.f32.mrb[0].mxu0
        %v1875 = vadd.f32 0.0, %v1874
        %v1876 = vpop.f32.mrb[0].mxu0
        %1877 = vmatprep.mubr.bf16.mxu0 0
        %1878 = vmatmul.mubr.bf16.gmra.mrb[0].mxu0 %v1723
        %v1879 = vpop.f32.mrb[0].mxu0
        %v1880 = vadd.f32 0.0, %v1879
        %v1881 = vpop.f32.mrb[0].mxu0
        %v1882 = vpop.f32.mrb[0].mxu0
        %v1883 = vadd.f32 0.0, %v1882
        %v1884 = vpop.f32.mrb[0].mxu0
        %1885 = vdwg.mxu0
        %v1886 = vadd.f32 %v1660, %v1808
        %v1887 = vadd.f32 %v1661, %v1811
        %v1888 = vadd.f32 %v1662, %v1816
        %v1889 = vadd.f32 %v1663, %v1819
        %v1890 = vadd.f32 %v1664, %v1824
        %v1891 = vadd.f32 %v1665, %v1827
        %v1892 = vadd.f32 %v1666, %v1832
        %v1893 = vadd.f32 %v1667, %v1835
        %v1894 = vadd.f32 %v1668, %v1840
        %v1895 = vadd.f32 %v1669, %v1843
        %v1896 = vadd.f32 %v1670, %v1848
        %v1897 = vadd.f32 %v1671, %v1851
        %v1898 = vadd.f32 %v1672, %v1856
        %v1899 = vadd.f32 %v1673, %v1859
        %v1900 = vadd.f32 %v1674, %v1864
        %v1901 = vadd.f32 %v1675, %v1867
        %v1902 = vadd.f32 %v1676, %v1872
        %v1903 = vadd.f32 %v1677, %v1875
        %v1904 = vadd.f32 %v1678, %v1880
        %v1905 = vadd.f32 %v1679, %v1883
        %vm1916 = vcmask 1042432
        %vm1917 = vcmask 1046532
        %vm1918 = vmor %vm1916, %vm1917
        %v1919 = vrot.slane %v312, 5
        %v1920 = vrot.slane %v1919, 4
        %v1921 = vrot.slane %v313, 5
        %v1922 = vsel %vm1918, %v1920, %v1921
        %v1923 = vrot.slane %v1921, 4
        %v1924 = vrot.slane %v314, 5
        %v1925 = vsel %vm1918, %v1923, %v1924
        %v1926 = vrot.slane %v315, 5
        %v1927 = vrot.slane %v1926, 4
        %v1928 = vrot.slane %v316, 5
        %v1929 = vsel %vm1918, %v1927, %v1928
        %v1930 = vrot.slane %v1928, 4
        %v1931 = vrot.slane %v317, 5
        %v1932 = vsel %vm1918, %v1930, %v1931
        %v1933 = vrot.slane %v318, 5
        %v1934 = vrot.slane %v1933, 4
        %v1935 = vrot.slane %v319, 5
        %v1936 = vsel %vm1918, %v1934, %v1935
        %v1937 = vrot.slane %v1935, 4
        %v1938 = vrot.slane %v320, 5
        %v1939 = vsel %vm1918, %v1937, %v1938
        %v1940 = vrot.slane %v321, 5
        %v1941 = vrot.slane %v1940, 4
        %v1942 = vrot.slane %v322, 5
        %v1943 = vsel %vm1918, %v1941, %v1942
        %v1944 = vrot.slane %v1942, 4
        %v1945 = vrot.slane %v323, 5
        %v1946 = vsel %vm1918, %v1944, %v1945
        %v1947 = vrot.slane %v324, 5
        %v1948 = vrot.slane %v1947, 4
        %v1949 = vrot.slane %v325, 5
        %v1950 = vsel %vm1918, %v1948, %v1949
        %v1951 = vrot.slane %v1949, 4
        %v1952 = vrot.slane %v326, 5
        %v1953 = vsel %vm1918, %v1951, %v1952
        %v1954 = vrot.slane %v327, 5
        %v1955 = vrot.slane %v1954, 4
        %v1956 = vrot.slane %v328, 5
        %v1957 = vsel %vm1918, %v1955, %v1956
        %v1958 = vrot.slane %v1956, 4
        %v1959 = vrot.slane %v329, 5
        %v1960 = vsel %vm1918, %v1958, %v1959
        %v1961 = vrot.slane %v330, 5
        %v1962 = vrot.slane %v1961, 4
        %v1963 = vrot.slane %v331, 5
        %v1964 = vsel %vm1918, %v1962, %v1963
        %v1965 = vrot.slane %v1963, 4
        %v1966 = vrot.slane %v332, 5
        %v1967 = vsel %vm1918, %v1965, %v1966
        %v1968 = vrot.slane %v333, 5
        %v1969 = vrot.slane %v1968, 4
        %v1970 = vrot.slane %v334, 5
        %v1971 = vsel %vm1918, %v1969, %v1970
        %v1972 = vrot.slane %v1970, 4
        %v1973 = vrot.slane %v335, 5
        %v1974 = vsel %vm1918, %v1972, %v1973
        %v1975 = vrot.slane %v336, 5
        %v1976 = vrot.slane %v1975, 4
        %v1977 = vrot.slane %v337, 5
        %v1978 = vsel %vm1918, %v1976, %v1977
        %v1979 = vrot.slane %v1977, 4
        %v1980 = vrot.slane %v338, 5
        %v1981 = vsel %vm1918, %v1979, %v1980
        %v1982 = vrot.slane %v339, 5
        %v1983 = vrot.slane %v1982, 4
        %v1984 = vrot.slane %v340, 5
        %v1985 = vsel %vm1918, %v1983, %v1984
        %v1986 = vrot.slane %v1984, 4
        %v1987 = vrot.slane %v341, 5
        %v1988 = vsel %vm1918, %v1986, %v1987
        %s1989 = scalar_lea.vmem %s1, 128
        %v1990 = vld [vmem:[%s1989] sm:$0xf]
        %v1991 = vld [vmem:[%s1989 + $0x4] sm:$0xf]
        %v1992 = vld [vmem:[%s1989 + $0x8] sm:$0xf]
        %v1993 = vld [vmem:[%s1989 + $0xc] sm:$0xf]
        %v1994 = vld [vmem:[%s1989 + $0x10] sm:$0xf]
        %v1995 = vld [vmem:[%s1989 + $0x14] sm:$0xf]
        %v1996 = vld [vmem:[%s1989 + $0x18] sm:$0xf]
        %v1997 = vld [vmem:[%s1989 + $0x1c] sm:$0xf]
        %v1998 = vld [vmem:[%s1989 + $0x20] sm:$0xf]
        %v1999 = vld [vmem:[%s1989 + $0x24] sm:$0xf]
        %v2000 = vld [vmem:[%s1989 + $0x28] sm:$0xf]
        %v2001 = vld [vmem:[%s1989 + $0x2c] sm:$0xf]
        %v2002 = vld [vmem:[%s1989 + $0x30] sm:$0xf]
        %v2003 = vld [vmem:[%s1989 + $0x34] sm:$0xf]
        %v2004 = vld [vmem:[%s1989 + $0x38] sm:$0xf]
        %v2005 = vld [vmem:[%s1989 + $0x3c] sm:$0xf]
        %v2006 = vunpack.c.l.b16 %v1922
        %v2007 = vunpack.c.l.b16 %v1925
        %v2008 = vunpack.c.l.b16 %v1929
        %v2009 = vunpack.c.l.b16 %v1932
        %v2010 = vunpack.c.l.b16 %v1936
        %v2011 = vunpack.c.l.b16 %v1939
        %v2012 = vunpack.c.l.b16 %v1943
        %v2013 = vunpack.c.l.b16 %v1946
        %v2014 = vunpack.c.l.b16 %v1950
        %v2015 = vunpack.c.l.b16 %v1953
        %v2016 = vunpack.c.l.b16 %v1957
        %v2017 = vunpack.c.l.b16 %v1960
        %v2018 = vunpack.c.l.b16 %v1964
        %v2019 = vunpack.c.l.b16 %v1967
        %v2020 = vunpack.c.l.b16 %v1971
        %v2021 = vunpack.c.l.b16 %v1974
        %v2022 = vunpack.c.l.b16 %v1978
        %v2023 = vunpack.c.l.b16 %v1981
        %v2024 = vunpack.c.l.b16 %v1985
        %v2025 = vunpack.c.l.b16 %v1988
        %v2026 = vpack.c.b16 %v2007, %v2006
        %v2027 = vpack.c.b16 %v2009, %v2008
        %v2028 = vpack.c.b16 %v2011, %v2010
        %v2029 = vpack.c.b16 %v2013, %v2012
        %v2030 = vpack.c.b16 %v2015, %v2014
        %v2031 = vpack.c.b16 %v2017, %v2016
        %v2032 = vpack.c.b16 %v2019, %v2018
        %v2033 = vpack.c.b16 %v2021, %v2020
        %v2034 = vpack.c.b16 %v2023, %v2022
        %v2035 = vpack.c.b16 %v2025, %v2024
        %v2062 = vunpack.c.l.b16 %v1990
        %v2063 = vunpack.c.l.b16 %v1991
        %v2064 = vunpack.c.l.b16 %v1992
        %v2065 = vunpack.c.l.b16 %v1993
        %v2066 = vunpack.c.l.b16 %v1994
        %v2067 = vunpack.c.l.b16 %v1995
        %v2068 = vunpack.c.l.b16 %v1996
        %v2069 = vunpack.c.l.b16 %v1997
        %v2070 = vunpack.c.l.b16 %v1998
        %v2071 = vunpack.c.l.b16 %v1999
        %v2072 = vunpack.c.l.b16 %v2000
        %v2073 = vunpack.c.l.b16 %v2001
        %v2074 = vunpack.c.l.b16 %v2002
        %v2075 = vunpack.c.l.b16 %v2003
        %v2076 = vunpack.c.l.b16 %v2004
        %v2077 = vunpack.c.l.b16 %v2005
        %v2078 = vpack.c.b16 %v2063, %v2062
        %v2079 = vpack.c.b16 %v2065, %v2064
        %v2080 = vpack.c.b16 %v2067, %v2066
        %v2081 = vpack.c.b16 %v2069, %v2068
        %v2082 = vpack.c.b16 %v2071, %v2070
        %v2083 = vpack.c.b16 %v2073, %v2072
        %v2084 = vpack.c.b16 %v2075, %v2074
        %v2085 = vpack.c.b16 %v2077, %v2076
        %2094 = vmatprep.subr.bf16.mxu0 0
        %2095 = vmatpush1.bf16.msra.mxu0 %v2078
        %2096 = vmatprep.subr.bf16.mxu0 0
        %2097 = vmatpush1.bf16.msra.mxu0 %v2079
        %2098 = vmatprep.subr.bf16.mxu0 0
        %2099 = vmatpush1.bf16.msra.mxu0 %v2080
        %2100 = vmatprep.subr.bf16.mxu0 0
        %2101 = vmatpush1.bf16.msra.mxu0 %v2081
        %2102 = vmatprep.subr.bf16.mxu0 0
        %2103 = vmatpush1.bf16.msra.mxu0 %v2082
        %2104 = vmatprep.subr.bf16.mxu0 0
        %2105 = vmatpush1.bf16.msra.mxu0 %v2083
        %2106 = vmatprep.subr.bf16.mxu0 0
        %2107 = vmatpush1.bf16.msra.mxu0 %v2084
        %2108 = vmatprep.subr.bf16.mxu0 0
        %2109 = vmatpush1.bf16.msra.mxu0 %v2085
        %2110 = vmatprep.subr.bf16.mxu0 0
        %2111 = vmatpush1.bf16.msra.mxu0 0
        %2112 = vmatprep.subr.bf16.mxu0 0
        %2113 = vmatpush1.bf16.msra.mxu0 0
        %2114 = vmatprep.subr.bf16.mxu0 0
        %2115 = vmatpush1.bf16.msra.mxu0 0
        %2116 = vmatprep.subr.bf16.mxu0 0
        %2117 = vmatpush1.bf16.msra.mxu0 0
        %2118 = vmatprep.subr.bf16.mxu0 0
        %2119 = vmatpush1.bf16.msra.mxu0 0
        %2120 = vmatprep.subr.bf16.mxu0 0
        %2121 = vmatpush1.bf16.msra.mxu0 0
        %2122 = vmatprep.subr.bf16.mxu0 0
        %2123 = vmatpush1.bf16.msra.mxu0 0
        %2124 = vmatprep.subr.bf16.mxu0 0
        %2125 = vmatpush1.bf16.msra.mxu0 0
        %2126 = vmatprep.mubr.bf16.mxu0 0
        %2127 = vmatmul.mubr.bf16.gmra.mrb[0].mxu0 %v2026
        %v2128 = vpop.f32.mrb[0].mxu0
        %v2129 = vadd.f32 0.0, %v2128
        %v2130 = vpop.f32.mrb[0].mxu0
        %v2131 = vpop.f32.mrb[0].mxu0
        %v2132 = vadd.f32 0.0, %v2131
        %v2133 = vpop.f32.mrb[0].mxu0
        %2134 = vmatprep.mubr.bf16.mxu0 0
        %2135 = vmatmul.mubr.bf16.gmra.mrb[0].mxu0 %v2027
        %v2136 = vpop.f32.mrb[0].mxu0
        %v2137 = vadd.f32 0.0, %v2136
        %v2138 = vpop.f32.mrb[0].mxu0
        %v2139 = vpop.f32.mrb[0].mxu0
        %v2140 = vadd.f32 0.0, %v2139
        %v2141 = vpop.f32.mrb[0].mxu0
        %2142 = vmatprep.mubr.bf16.mxu0 0
        %2143 = vmatmul.mubr.bf16.gmra.mrb[0].mxu0 %v2028
        %v2144 = vpop.f32.mrb[0].mxu0
        %v2145 = vadd.f32 0.0, %v2144
        %v2146 = vpop.f32.mrb[0].mxu0
        %v2147 = vpop.f32.mrb[0].mxu0
        %v2148 = vadd.f32 0.0, %v2147
        %v2149 = vpop.f32.mrb[0].mxu0
        %2150 = vmatprep.mubr.bf16.mxu0 0
        %2151 = vmatmul.mubr.bf16.gmra.mrb[0].mxu0 %v2029
        %v2152 = vpop.f32.mrb[0].mxu0
        %v2153 = vadd.f32 0.0, %v2152
        %v2154 = vpop.f32.mrb[0].mxu0
        %v2155 = vpop.f32.mrb[0].mxu0
        %v2156 = vadd.f32 0.0, %v2155
        %v2157 = vpop.f32.mrb[0].mxu0
        %2158 = vmatprep.mubr.bf16.mxu0 0
        %2159 = vmatmul.mubr.bf16.gmra.mrb[0].mxu0 %v2030
        %v2160 = vpop.f32.mrb[0].mxu0
        %v2161 = vadd.f32 0.0, %v2160
        %v2162 = vpop.f32.mrb[0].mxu0
        %v2163 = vpop.f32.mrb[0].mxu0
        %v2164 = vadd.f32 0.0, %v2163
        %v2165 = vpop.f32.mrb[0].mxu0
        %2166 = vmatprep.mubr.bf16.mxu0 0
        %2167 = vmatmul.mubr.bf16.gmra.mrb[0].mxu0 %v2031
        %v2168 = vpop.f32.mrb[0].mxu0
        %v2169 = vadd.f32 0.0, %v2168
        %v2170 = vpop.f32.mrb[0].mxu0
        %v2171 = vpop.f32.mrb[0].mxu0
        %v2172 = vadd.f32 0.0, %v2171
        %v2173 = vpop.f32.mrb[0].mxu0
        %2174 = vmatprep.mubr.bf16.mxu0 0
        %2175 = vmatmul.mubr.bf16.gmra.mrb[0].mxu0 %v2032
        %v2176 = vpop.f32.mrb[0].mxu0
        %v2177 = vadd.f32 0.0, %v2176
        %v2178 = vpop.f32.mrb[0].mxu0
        %v2179 = vpop.f32.mrb[0].mxu0
        %v2180 = vadd.f32 0.0, %v2179
        %v2181 = vpop.f32.mrb[0].mxu0
        %2182 = vmatprep.mubr.bf16.mxu0 0
        %2183 = vmatmul.mubr.bf16.gmra.mrb[0].mxu0 %v2033
        %v2184 = vpop.f32.mrb[0].mxu0
        %v2185 = vadd.f32 0.0, %v2184
        %v2186 = vpop.f32.mrb[0].mxu0
        %v2187 = vpop.f32.mrb[0].mxu0
        %v2188 = vadd.f32 0.0, %v2187
        %v2189 = vpop.f32.mrb[0].mxu0
        %2190 = vmatprep.mubr.bf16.mxu0 0
        %2191 = vmatmul.mubr.bf16.gmra.mrb[0].mxu0 %v2034
        %v2192 = vpop.f32.mrb[0].mxu0
        %v2193 = vadd.f32 0.0, %v2192
        %v2194 = vpop.f32.mrb[0].mxu0
        %v2195 = vpop.f32.mrb[0].mxu0
        %v2196 = vadd.f32 0.0, %v2195
        %v2197 = vpop.f32.mrb[0].mxu0
        %2198 = vmatprep.mubr.bf16.mxu0 0
        %2199 = vmatmul.mubr.bf16.gmra.mrb[0].mxu0 %v2035
        %v2200 = vpop.f32.mrb[0].mxu0
        %v2201 = vadd.f32 0.0, %v2200
        %v2202 = vpop.f32.mrb[0].mxu0
        %v2203 = vpop.f32.mrb[0].mxu0
        %v2204 = vadd.f32 0.0, %v2203
        %v2205 = vpop.f32.mrb[0].mxu0
        %2206 = vdwg.mxu0
        %v2207 = vadd.f32 %v1886, %v2129
        %v2208 = vadd.f32 %v1887, %v2132
        %v2209 = vadd.f32 %v1888, %v2137
        %v2210 = vadd.f32 %v1889, %v2140
        %v2211 = vadd.f32 %v1890, %v2145
        %v2212 = vadd.f32 %v1891, %v2148
        %v2213 = vadd.f32 %v1892, %v2153
        %v2214 = vadd.f32 %v1893, %v2156
        %v2215 = vadd.f32 %v1894, %v2161
        %v2216 = vadd.f32 %v1895, %v2164
        %v2217 = vadd.f32 %v1896, %v2169
        %v2218 = vadd.f32 %v1897, %v2172
        %v2219 = vadd.f32 %v1898, %v2177
        %v2220 = vadd.f32 %v1899, %v2180
        %v2221 = vadd.f32 %v1900, %v2185
        %v2222 = vadd.f32 %v1901, %v2188
        %v2223 = vadd.f32 %v1902, %v2193
        %v2224 = vadd.f32 %v1903, %v2196
        %v2225 = vadd.f32 %v1904, %v2201
        %v2226 = vadd.f32 %v1905, %v2204
        %v2228 = vrot.slane %v342, 5
        %v2229 = vrot.slane %v2228, 4
        %v2230 = vrot.slane %v343, 5
        %v2231 = vsel %vm1918, %v2229, %v2230
        %v2232 = vrot.slane %v2230, 4
        %v2233 = vrot.slane %v344, 5
        %v2234 = vsel %vm1918, %v2232, %v2233
        %s2235 = scalar_lea.vmem %s1, 320
        %v2236 = vld [vmem:[%s2235] sm:$0xf]
        %v2237 = vld [vmem:[%s2235 + $0x4] sm:$0xf]
        %v2238 = vld [vmem:[%s2235 + $0x8] sm:$0xf]
        %v2239 = vld [vmem:[%s2235 + $0xc] sm:$0xf]
        %v2240 = vld [vmem:[%s2235 + $0x10] sm:$0xf]
        %v2241 = vld [vmem:[%s2235 + $0x14] sm:$0xf]
        %v2242 = vld [vmem:[%s2235 + $0x18] sm:$0xf]
        %v2243 = vld [vmem:[%s2235 + $0x1c] sm:$0xf]
        %v2244 = vld [vmem:[%s2235 + $0x20] sm:$0xf]
        %v2245 = vld [vmem:[%s2235 + $0x24] sm:$0xf]
        %v2246 = vld [vmem:[%s2235 + $0x28] sm:$0xf]
        %v2247 = vld [vmem:[%s2235 + $0x2c] sm:$0xf]
        %v2248 = vld [vmem:[%s2235 + $0x30] sm:$0xf]
        %v2249 = vld [vmem:[%s2235 + $0x34] sm:$0xf]
        %v2250 = vld [vmem:[%s2235 + $0x38] sm:$0xf]
        %v2251 = vld [vmem:[%s2235 + $0x3c] sm:$0xf]
        %v2252 = vunpack.c.l.b16 %v2231
        %v2253 = vunpack.c.l.b16 %v2234
        %v2254 = vpack.c.b16 %v2253, %v2252
        %v2272 = vunpack.c.l.b16 %v2236
        %v2273 = vunpack.c.l.b16 %v2237
        %v2274 = vunpack.c.l.b16 %v2238
        %v2275 = vunpack.c.l.b16 %v2239
        %v2276 = vunpack.c.l.b16 %v2240
        %v2277 = vunpack.c.l.b16 %v2241
        %v2278 = vunpack.c.l.b16 %v2242
        %v2279 = vunpack.c.l.b16 %v2243
        %v2280 = vunpack.c.l.b16 %v2244
        %v2281 = vunpack.c.l.b16 %v2245
        %v2282 = vunpack.c.l.b16 %v2246
        %v2283 = vunpack.c.l.b16 %v2247
        %v2284 = vunpack.c.l.b16 %v2248
        %v2285 = vunpack.c.l.b16 %v2249
        %v2286 = vunpack.c.l.b16 %v2250
        %v2287 = vunpack.c.l.b16 %v2251
        %v2288 = vpack.c.b16 %v2273, %v2272
        %v2289 = vpack.c.b16 %v2275, %v2274
        %v2290 = vpack.c.b16 %v2277, %v2276
        %v2291 = vpack.c.b16 %v2279, %v2278
        %v2292 = vpack.c.b16 %v2281, %v2280
        %v2293 = vpack.c.b16 %v2283, %v2282
        %v2294 = vpack.c.b16 %v2285, %v2284
        %v2295 = vpack.c.b16 %v2287, %v2286
        %2304 = vmatprep.subr.bf16.mxu0 0
        %2305 = vmatpush1.bf16.msra.mxu0 %v2288
        %2306 = vmatprep.subr.bf16.mxu0 0
        %2307 = vmatpush1.bf16.msra.mxu0 %v2289
        %2308 = vmatprep.subr.bf16.mxu0 0
        %2309 = vmatpush1.bf16.msra.mxu0 %v2290
        %2310 = vmatprep.subr.bf16.mxu0 0
        %2311 = vmatpush1.bf16.msra.mxu0 %v2291
        %2312 = vmatprep.subr.bf16.mxu0 0
        %2313 = vmatpush1.bf16.msra.mxu0 %v2292
        %2314 = vmatprep.subr.bf16.mxu0 0
        %2315 = vmatpush1.bf16.msra.mxu0 %v2293
        %2316 = vmatprep.subr.bf16.mxu0 0
        %2317 = vmatpush1.bf16.msra.mxu0 %v2294
        %2318 = vmatprep.subr.bf16.mxu0 0
        %2319 = vmatpush1.bf16.msra.mxu0 %v2295
        %2320 = vmatprep.subr.bf16.mxu0 0
        %2321 = vmatpush1.bf16.msra.mxu0 0
        %2322 = vmatprep.subr.bf16.mxu0 0
        %2323 = vmatpush1.bf16.msra.mxu0 0
        %2324 = vmatprep.subr.bf16.mxu0 0
        %2325 = vmatpush1.bf16.msra.mxu0 0
        %2326 = vmatprep.subr.bf16.mxu0 0
        %2327 = vmatpush1.bf16.msra.mxu0 0
        %2328 = vmatprep.subr.bf16.mxu0 0
        %2329 = vmatpush1.bf16.msra.mxu0 0
        %2330 = vmatprep.subr.bf16.mxu0 0
        %2331 = vmatpush1.bf16.msra.mxu0 0
        %2332 = vmatprep.subr.bf16.mxu0 0
        %2333 = vmatpush1.bf16.msra.mxu0 0
        %2334 = vmatprep.subr.bf16.mxu0 0
        %2335 = vmatpush1.bf16.msra.mxu0 0
        %2336 = vmatprep.mubr.bf16.mxu0 0
        %2337 = vmatmul.mubr.bf16.gmra.mrb[0].mxu0 %v2027
        %v2338 = vpop.f32.mrb[0].mxu0
        %v2339 = vadd.f32 0.0, %v2338
        %v2340 = vpop.f32.mrb[0].mxu0
        %v2341 = vpop.f32.mrb[0].mxu0
        %v2342 = vadd.f32 0.0, %v2341
        %v2343 = vpop.f32.mrb[0].mxu0
        %2344 = vmatprep.mubr.bf16.mxu0 0
        %2345 = vmatmul.mubr.bf16.gmra.mrb[0].mxu0 %v2028
        %v2346 = vpop.f32.mrb[0].mxu0
        %v2347 = vadd.f32 0.0, %v2346
        %v2348 = vpop.f32.mrb[0].mxu0
        %v2349 = vpop.f32.mrb[0].mxu0
        %v2350 = vadd.f32 0.0, %v2349
        %v2351 = vpop.f32.mrb[0].mxu0
        %2352 = vmatprep.mubr.bf16.mxu0 0
        %2353 = vmatmul.mubr.bf16.gmra.mrb[0].mxu0 %v2029
        %v2354 = vpop.f32.mrb[0].mxu0
        %v2355 = vadd.f32 0.0, %v2354
        %v2356 = vpop.f32.mrb[0].mxu0
        %v2357 = vpop.f32.mrb[0].mxu0
        %v2358 = vadd.f32 0.0, %v2357
        %v2359 = vpop.f32.mrb[0].mxu0
        %2360 = vmatprep.mubr.bf16.mxu0 0
        %2361 = vmatmul.mubr.bf16.gmra.mrb[0].mxu0 %v2030
        %v2362 = vpop.f32.mrb[0].mxu0
        %v2363 = vadd.f32 0.0, %v2362
        %v2364 = vpop.f32.mrb[0].mxu0
        %v2365 = vpop.f32.mrb[0].mxu0
        %v2366 = vadd.f32 0.0, %v2365
        %v2367 = vpop.f32.mrb[0].mxu0
        %2368 = vmatprep.mubr.bf16.mxu0 0
        %2369 = vmatmul.mubr.bf16.gmra.mrb[0].mxu0 %v2031
        %v2370 = vpop.f32.mrb[0].mxu0
        %v2371 = vadd.f32 0.0, %v2370
        %v2372 = vpop.f32.mrb[0].mxu0
        %v2373 = vpop.f32.mrb[0].mxu0
        %v2374 = vadd.f32 0.0, %v2373
        %v2375 = vpop.f32.mrb[0].mxu0
        %2376 = vmatprep.mubr.bf16.mxu0 0
        %2377 = vmatmul.mubr.bf16.gmra.mrb[0].mxu0 %v2032
        %v2378 = vpop.f32.mrb[0].mxu0
        %v2379 = vadd.f32 0.0, %v2378
        %v2380 = vpop.f32.mrb[0].mxu0
        %v2381 = vpop.f32.mrb[0].mxu0
        %v2382 = vadd.f32 0.0, %v2381
        %v2383 = vpop.f32.mrb[0].mxu0
        %2384 = vmatprep.mubr.bf16.mxu0 0
        %2385 = vmatmul.mubr.bf16.gmra.mrb[0].mxu0 %v2033
        %v2386 = vpop.f32.mrb[0].mxu0
        %v2387 = vadd.f32 0.0, %v2386
        %v2388 = vpop.f32.mrb[0].mxu0
        %v2389 = vpop.f32.mrb[0].mxu0
        %v2390 = vadd.f32 0.0, %v2389
        %v2391 = vpop.f32.mrb[0].mxu0
        %2392 = vmatprep.mubr.bf16.mxu0 0
        %2393 = vmatmul.mubr.bf16.gmra.mrb[0].mxu0 %v2034
        %v2394 = vpop.f32.mrb[0].mxu0
        %v2395 = vadd.f32 0.0, %v2394
        %v2396 = vpop.f32.mrb[0].mxu0
        %v2397 = vpop.f32.mrb[0].mxu0
        %v2398 = vadd.f32 0.0, %v2397
        %v2399 = vpop.f32.mrb[0].mxu0
        %2400 = vmatprep.mubr.bf16.mxu0 0
        %2401 = vmatmul.mubr.bf16.gmra.mrb[0].mxu0 %v2035
        %v2402 = vpop.f32.mrb[0].mxu0
        %v2403 = vadd.f32 0.0, %v2402
        %v2404 = vpop.f32.mrb[0].mxu0
        %v2405 = vpop.f32.mrb[0].mxu0
        %v2406 = vadd.f32 0.0, %v2405
        %v2407 = vpop.f32.mrb[0].mxu0
        %2408 = vmatprep.mubr.bf16.mxu0 0
        %2409 = vmatmul.mubr.bf16.gmra.mrb[0].mxu0 %v2254
        %v2410 = vpop.f32.mrb[0].mxu0
        %v2411 = vadd.f32 0.0, %v2410
        %v2412 = vpop.f32.mrb[0].mxu0
        %v2413 = vpop.f32.mrb[0].mxu0
        %v2414 = vadd.f32 0.0, %v2413
        %v2415 = vpop.f32.mrb[0].mxu0
        %2416 = vdwg.mxu0
        %v2417 = vadd.f32 %v2207, %v2339
        %v2418 = vadd.f32 %v2208, %v2342
        %v2419 = vadd.f32 %v2209, %v2347
        %v2420 = vadd.f32 %v2210, %v2350
        %v2421 = vadd.f32 %v2211, %v2355
        %v2422 = vadd.f32 %v2212, %v2358
        %v2423 = vadd.f32 %v2213, %v2363
        %v2424 = vadd.f32 %v2214, %v2366
        %v2425 = vadd.f32 %v2215, %v2371
        %v2426 = vadd.f32 %v2216, %v2374
        %v2427 = vadd.f32 %v2217, %v2379
        %v2428 = vadd.f32 %v2218, %v2382
        %v2429 = vadd.f32 %v2219, %v2387
        %v2430 = vadd.f32 %v2220, %v2390
        %v2431 = vadd.f32 %v2221, %v2395
        %v2432 = vadd.f32 %v2222, %v2398
        %v2433 = vadd.f32 %v2223, %v2403
        %v2434 = vadd.f32 %v2224, %v2406
        %v2435 = vadd.f32 %v2225, %v2411
        %v2436 = vadd.f32 %v2226, %v2414
        %v2438 = vrot.slane %v345, 5
        %v2439 = vrot.slane %v2438, 4
        %v2440 = vrot.slane %v346, 5
        %v2441 = vsel %vm1918, %v2439, %v2440
        %v2442 = vrot.slane %v2440, 4
        %v2443 = vrot.slane %v347, 5
        %v2444 = vsel %vm1918, %v2442, %v2443
        %s2445 = scalar_lea.vmem %s1, 512
        %v2446 = vld [vmem:[%s2445] sm:$0xf]
        %v2447 = vld [vmem:[%s2445 + $0x4] sm:$0xf]
        %v2448 = vld [vmem:[%s2445 + $0x8] sm:$0xf]
        %v2449 = vld [vmem:[%s2445 + $0xc] sm:$0xf]
        %v2450 = vld [vmem:[%s2445 + $0x10] sm:$0xf]
        %v2451 = vld [vmem:[%s2445 + $0x14] sm:$0xf]
        %v2452 = vld [vmem:[%s2445 + $0x18] sm:$0xf]
        %v2453 = vld [vmem:[%s2445 + $0x1c] sm:$0xf]
        %v2454 = vld [vmem:[%s2445 + $0x20] sm:$0xf]
        %v2455 = vld [vmem:[%s2445 + $0x24] sm:$0xf]
        %v2456 = vld [vmem:[%s2445 + $0x28] sm:$0xf]
        %v2457 = vld [vmem:[%s2445 + $0x2c] sm:$0xf]
        %v2458 = vld [vmem:[%s2445 + $0x30] sm:$0xf]
        %v2459 = vld [vmem:[%s2445 + $0x34] sm:$0xf]
        %v2460 = vld [vmem:[%s2445 + $0x38] sm:$0xf]
        %v2461 = vld [vmem:[%s2445 + $0x3c] sm:$0xf]
        %v2462 = vunpack.c.l.b16 %v2441
        %v2463 = vunpack.c.l.b16 %v2444
        %v2464 = vpack.c.b16 %v2463, %v2462
        %v2482 = vunpack.c.l.b16 %v2446
        %v2483 = vunpack.c.l.b16 %v2447
        %v2484 = vunpack.c.l.b16 %v2448
        %v2485 = vunpack.c.l.b16 %v2449
        %v2486 = vunpack.c.l.b16 %v2450
        %v2487 = vunpack.c.l.b16 %v2451
        %v2488 = vunpack.c.l.b16 %v2452
        %v2489 = vunpack.c.l.b16 %v2453
        %v2490 = vunpack.c.l.b16 %v2454
        %v2491 = vunpack.c.l.b16 %v2455
        %v2492 = vunpack.c.l.b16 %v2456
        %v2493 = vunpack.c.l.b16 %v2457
        %v2494 = vunpack.c.l.b16 %v2458
        %v2495 = vunpack.c.l.b16 %v2459
        %v2496 = vunpack.c.l.b16 %v2460
        %v2497 = vunpack.c.l.b16 %v2461
        %v2498 = vpack.c.b16 %v2483, %v2482
        %v2499 = vpack.c.b16 %v2485, %v2484
        %v2500 = vpack.c.b16 %v2487, %v2486
        %v2501 = vpack.c.b16 %v2489, %v2488
        %v2502 = vpack.c.b16 %v2491, %v2490
        %v2503 = vpack.c.b16 %v2493, %v2492
        %v2504 = vpack.c.b16 %v2495, %v2494
        %v2505 = vpack.c.b16 %v2497, %v2496
        %2514 = vmatprep.subr.bf16.mxu0 0
        %2515 = vmatpush1.bf16.msra.mxu0 %v2498
        %2516 = vmatprep.subr.bf16.mxu0 0
        %2517 = vmatpush1.bf16.msra.mxu0 %v2499
        %2518 = vmatprep.subr.bf16.mxu0 0
        %2519 = vmatpush1.bf16.msra.mxu0 %v2500
        %2520 = vmatprep.subr.bf16.mxu0 0
        %2521 = vmatpush1.bf16.msra.mxu0 %v2501
        %2522 = vmatprep.subr.bf16.mxu0 0
        %2523 = vmatpush1.bf16.msra.mxu0 %v2502
        %2524 = vmatprep.subr.bf16.mxu0 0
        %2525 = vmatpush1.bf16.msra.mxu0 %v2503
        %2526 = vmatprep.subr.bf16.mxu0 0
        %2527 = vmatpush1.bf16.msra.mxu0 %v2504
        %2528 = vmatprep.subr.bf16.mxu0 0
        %2529 = vmatpush1.bf16.msra.mxu0 %v2505
        %2530 = vmatprep.subr.bf16.mxu0 0
        %2531 = vmatpush1.bf16.msra.mxu0 0
        %2532 = vmatprep.subr.bf16.mxu0 0
        %2533 = vmatpush1.bf16.msra.mxu0 0
        %2534 = vmatprep.subr.bf16.mxu0 0
        %2535 = vmatpush1.bf16.msra.mxu0 0
        %2536 = vmatprep.subr.bf16.mxu0 0
        %2537 = vmatpush1.bf16.msra.mxu0 0
        %2538 = vmatprep.subr.bf16.mxu0 0
        %2539 = vmatpush1.bf16.msra.mxu0 0
        %2540 = vmatprep.subr.bf16.mxu0 0
        %2541 = vmatpush1.bf16.msra.mxu0 0
        %2542 = vmatprep.subr.bf16.mxu0 0
        %2543 = vmatpush1.bf16.msra.mxu0 0
        %2544 = vmatprep.subr.bf16.mxu0 0
        %2545 = vmatpush1.bf16.msra.mxu0 0
        %2546 = vmatprep.mubr.bf16.mxu0 0
        %2547 = vmatmul.mubr.bf16.gmra.mrb[0].mxu0 %v2028
        %v2548 = vpop.f32.mrb[0].mxu0
        %v2549 = vadd.f32 0.0, %v2548
        %v2550 = vpop.f32.mrb[0].mxu0
        %v2551 = vpop.f32.mrb[0].mxu0
        %v2552 = vadd.f32 0.0, %v2551
        %v2553 = vpop.f32.mrb[0].mxu0
        %2554 = vmatprep.mubr.bf16.mxu0 0
        %2555 = vmatmul.mubr.bf16.gmra.mrb[0].mxu0 %v2029
        %v2556 = vpop.f32.mrb[0].mxu0
        %v2557 = vadd.f32 0.0, %v2556
        %v2558 = vpop.f32.mrb[0].mxu0
        %v2559 = vpop.f32.mrb[0].mxu0
        %v2560 = vadd.f32 0.0, %v2559
        %v2561 = vpop.f32.mrb[0].mxu0
        %2562 = vmatprep.mubr.bf16.mxu0 0
        %2563 = vmatmul.mubr.bf16.gmra.mrb[0].mxu0 %v2030
        %v2564 = vpop.f32.mrb[0].mxu0
        %v2565 = vadd.f32 0.0, %v2564
        %v2566 = vpop.f32.mrb[0].mxu0
        %v2567 = vpop.f32.mrb[0].mxu0
        %v2568 = vadd.f32 0.0, %v2567
        %v2569 = vpop.f32.mrb[0].mxu0
        %2570 = vmatprep.mubr.bf16.mxu0 0
        %2571 = vmatmul.mubr.bf16.gmra.mrb[0].mxu0 %v2031
        %v2572 = vpop.f32.mrb[0].mxu0
        %v2573 = vadd.f32 0.0, %v2572
        %v2574 = vpop.f32.mrb[0].mxu0
        %v2575 = vpop.f32.mrb[0].mxu0
        %v2576 = vadd.f32 0.0, %v2575
        %v2577 = vpop.f32.mrb[0].mxu0
        %2578 = vmatprep.mubr.bf16.mxu0 0
        %2579 = vmatmul.mubr.bf16.gmra.mrb[0].mxu0 %v2032
        %v2580 = vpop.f32.mrb[0].mxu0
        %v2581 = vadd.f32 0.0, %v2580
        %v2582 = vpop.f32.mrb[0].mxu0
        %v2583 = vpop.f32.mrb[0].mxu0
        %v2584 = vadd.f32 0.0, %v2583
        %v2585 = vpop.f32.mrb[0].mxu0
        %2586 = vmatprep.mubr.bf16.mxu0 0
        %2587 = vmatmul.mubr.bf16.gmra.mrb[0].mxu0 %v2033
        %v2588 = vpop.f32.mrb[0].mxu0
        %v2589 = vadd.f32 0.0, %v2588
        %v2590 = vpop.f32.mrb[0].mxu0
        %v2591 = vpop.f32.mrb[0].mxu0
        %v2592 = vadd.f32 0.0, %v2591
        %v2593 = vpop.f32.mrb[0].mxu0
        %2594 = vmatprep.mubr.bf16.mxu0 0
        %2595 = vmatmul.mubr.bf16.gmra.mrb[0].mxu0 %v2034
        %v2596 = vpop.f32.mrb[0].mxu0
        %v2597 = vadd.f32 0.0, %v2596
        %v2598 = vpop.f32.mrb[0].mxu0
        %v2599 = vpop.f32.mrb[0].mxu0
        %v2600 = vadd.f32 0.0, %v2599
        %v2601 = vpop.f32.mrb[0].mxu0
        %2602 = vmatprep.mubr.bf16.mxu0 0
        %2603 = vmatmul.mubr.bf16.gmra.mrb[0].mxu0 %v2035
        %v2604 = vpop.f32.mrb[0].mxu0
        %v2605 = vadd.f32 0.0, %v2604
        %v2606 = vpop.f32.mrb[0].mxu0
        %v2607 = vpop.f32.mrb[0].mxu0
        %v2608 = vadd.f32 0.0, %v2607
        %v2609 = vpop.f32.mrb[0].mxu0
        %2610 = vmatprep.mubr.bf16.mxu0 0
        %2611 = vmatmul.mubr.bf16.gmra.mrb[0].mxu0 %v2254
        %v2612 = vpop.f32.mrb[0].mxu0
        %v2613 = vadd.f32 0.0, %v2612
        %v2614 = vpop.f32.mrb[0].mxu0
        %v2615 = vpop.f32.mrb[0].mxu0
        %v2616 = vadd.f32 0.0, %v2615
        %v2617 = vpop.f32.mrb[0].mxu0
        %2618 = vmatprep.mubr.bf16.mxu0 0
        %2619 = vmatmul.mubr.bf16.gmra.mrb[0].mxu0 %v2464
        %v2620 = vpop.f32.mrb[0].mxu0
        %v2621 = vadd.f32 0.0, %v2620
        %v2622 = vpop.f32.mrb[0].mxu0
        %v2623 = vpop.f32.mrb[0].mxu0
        %v2624 = vadd.f32 0.0, %v2623
        %v2625 = vpop.f32.mrb[0].mxu0
        %2626 = vdwg.mxu0
        %v2627 = vadd.f32 %v2417, %v2549
        %v2628 = vadd.f32 %v2418, %v2552
        %v2629 = vadd.f32 %v2419, %v2557
        %v2630 = vadd.f32 %v2420, %v2560
        %v2631 = vadd.f32 %v2421, %v2565
        %v2632 = vadd.f32 %v2422, %v2568
        %v2633 = vadd.f32 %v2423, %v2573
        %v2634 = vadd.f32 %v2424, %v2576
        %v2635 = vadd.f32 %v2425, %v2581
        %v2636 = vadd.f32 %v2426, %v2584
        %v2637 = vadd.f32 %v2427, %v2589
        %v2638 = vadd.f32 %v2428, %v2592
        %v2639 = vadd.f32 %v2429, %v2597
        %v2640 = vadd.f32 %v2430, %v2600
        %v2641 = vadd.f32 %v2431, %v2605
        %v2642 = vadd.f32 %v2432, %v2608
        %v2643 = vadd.f32 %v2433, %v2613
        %v2644 = vadd.f32 %v2434, %v2616
        %v2645 = vadd.f32 %v2435, %v2621
        %v2646 = vadd.f32 %v2436, %v2624
        %v2647 = vld [vmem:[%s2] sm:$0x1]
        %v2649 = vlaneseq
        %v2650 = vshrl.u32 %v2649, 7
        %v2651 = vsub.s32 0, %v2650
        %v2652 = vrot.slane %v2647, %v2651
        %v2654 = vmul.f32 %v2627, %v2652
        %v2655 = vmul.f32 %v2628, %v2652
        %v2656 = vmul.f32 %v2629, %v2652
        %v2657 = vmul.f32 %v2630, %v2652
        %v2658 = vmul.f32 %v2631, %v2652
        %v2659 = vmul.f32 %v2632, %v2652
        %v2660 = vmul.f32 %v2633, %v2652
        %v2661 = vmul.f32 %v2634, %v2652
        %v2662 = vmul.f32 %v2635, %v2652
        %v2663 = vmul.f32 %v2636, %v2652
        %v2664 = vmul.f32 %v2637, %v2652
        %v2665 = vmul.f32 %v2638, %v2652
        %v2666 = vmul.f32 %v2639, %v2652
        %v2667 = vmul.f32 %v2640, %v2652
        %v2668 = vmul.f32 %v2641, %v2652
        %v2669 = vmul.f32 %v2642, %v2652
        %v2670 = vmul.f32 %v2643, %v2652
        %v2671 = vmul.f32 %v2644, %v2652
        %v2672 = vmul.f32 %v2645, %v2652
        %v2673 = vmul.f32 %v2646, %v2652
        %v2674 = vld [vmem:[%s3] sm:$0x1]
        %v2676 = vlaneseq
        %v2677 = vshrl.u32 %v2676, 7
        %v2678 = vsub.s32 0, %v2677
        %v2679 = vrot.slane %v2674, %v2678
        %v2681 = vadd.f32 %v2654, %v2679
        %v2682 = vadd.f32 %v2655, %v2679
        %v2683 = vadd.f32 %v2656, %v2679
        %v2684 = vadd.f32 %v2657, %v2679
        %v2685 = vadd.f32 %v2658, %v2679
        %v2686 = vadd.f32 %v2659, %v2679
        %v2687 = vadd.f32 %v2660, %v2679
        %v2688 = vadd.f32 %v2661, %v2679
        %v2689 = vadd.f32 %v2662, %v2679
        %v2690 = vadd.f32 %v2663, %v2679
        %v2691 = vadd.f32 %v2664, %v2679
        %v2692 = vadd.f32 %v2665, %v2679
        %v2693 = vadd.f32 %v2666, %v2679
        %v2694 = vadd.f32 %v2667, %v2679
        %v2695 = vadd.f32 %v2668, %v2679
        %v2696 = vadd.f32 %v2669, %v2679
        %v2697 = vadd.f32 %v2670, %v2679
        %v2698 = vadd.f32 %v2671, %v2679
        %v2699 = vadd.f32 %v2672, %v2679
        %v2700 = vadd.f32 %v2673, %v2679
        %v2701 = vmax.f32 %v2681, 0.0
        %v2702 = vmax.f32 %v2682, 0.0
        %v2703 = vmax.f32 %v2683, 0.0
        %v2704 = vmax.f32 %v2684, 0.0
        %v2705 = vmax.f32 %v2685, 0.0
        %v2706 = vmax.f32 %v2686, 0.0
        %v2707 = vmax.f32 %v2687, 0.0
        %v2708 = vmax.f32 %v2688, 0.0
        %v2709 = vmax.f32 %v2689, 0.0
        %v2710 = vmax.f32 %v2690, 0.0
        %v2711 = vmax.f32 %v2691, 0.0
        %v2712 = vmax.f32 %v2692, 0.0
        %v2713 = vmax.f32 %v2693, 0.0
        %v2714 = vmax.f32 %v2694, 0.0
        %v2715 = vmax.f32 %v2695, 0.0
        %v2716 = vmax.f32 %v2696, 0.0
        %v2717 = vmax.f32 %v2697, 0.0
        %v2718 = vmax.f32 %v2698, 0.0
        %v2719 = vmax.f32 %v2699, 0.0
        %v2720 = vmax.f32 %v2700, 0.0
        %s2721 = ssub.s32 %s308, 1
        %v2722 = vstv %s2721
        %v2723 = vadd.s32 %v2722, 1
        %v2724 = vadd.s32 %v2722, 2
        %v2725 = vadd.s32 %v2722, 3
        %v2726 = vadd.s32 %v2722, 4
        %v2727 = vadd.s32 %v2722, 5
        %v2728 = vadd.s32 %v2722, 6
        %v2729 = vadd.s32 %v2722, 7
        %v2730 = vadd.s32 %v2722, 8
        %v2731 = vadd.s32 %v2722, 9
        %vm2732 = vcmp.ge.s32.totalorder %v2722, 0
        %vm2733 = vcmp.ge.s32.totalorder %v2723, 0
        %vm2734 = vcmp.ge.s32.totalorder %v2724, 0
        %vm2735 = vcmp.ge.s32.totalorder %v2725, 0
        %vm2736 = vcmp.ge.s32.totalorder %v2726, 0
        %vm2737 = vcmp.ge.s32.totalorder %v2727, 0
        %vm2738 = vcmp.ge.s32.totalorder %v2728, 0
        %vm2739 = vcmp.ge.s32.totalorder %v2729, 0
        %vm2740 = vcmp.ge.s32.totalorder %v2730, 0
        %vm2741 = vcmp.ge.s32.totalorder %v2731, 0
        %vm2742 = vcmp.lt.s32.totalorder %v2722, 16
        %vm2743 = vcmp.lt.s32.totalorder %v2723, 16
        %vm2744 = vcmp.lt.s32.totalorder %v2724, 16
        %vm2745 = vcmp.lt.s32.totalorder %v2725, 16
        %vm2746 = vcmp.lt.s32.totalorder %v2726, 16
        %vm2747 = vcmp.lt.s32.totalorder %v2727, 16
        %vm2748 = vcmp.lt.s32.totalorder %v2728, 16
        %vm2749 = vcmp.lt.s32.totalorder %v2729, 16
        %vm2750 = vcmp.lt.s32.totalorder %v2730, 16
        %vm2751 = vcmp.lt.s32.totalorder %v2731, 16
        %vm2752 = vmand %vm2732, %vm2742
        %vm2753 = vmand %vm2733, %vm2743
        %vm2754 = vmand %vm2734, %vm2744
        %vm2755 = vmand %vm2735, %vm2745
        %vm2756 = vmand %vm2736, %vm2746
        %vm2757 = vmand %vm2737, %vm2747
        %vm2758 = vmand %vm2738, %vm2748
        %vm2759 = vmand %vm2739, %vm2749
        %vm2760 = vmand %vm2740, %vm2750
        %vm2761 = vmand %vm2741, %vm2751
        %v2762 = vsel %vm2752, 1, 0
        %v2763 = vsel %vm2753, 1, 0
        %v2764 = vsel %vm2754, 1, 0
        %v2765 = vsel %vm2755, 1, 0
        %v2766 = vsel %vm2756, 1, 0
        %v2767 = vsel %vm2757, 1, 0
        %v2768 = vsel %vm2758, 1, 0
        %v2769 = vsel %vm2759, 1, 0
        %v2770 = vsel %vm2760, 1, 0
        %v2771 = vsel %vm2761, 1, 0
        %vm2772 = vcmp.eq.s32.totalorder %v2762, 1
        %vm2773 = vcmp.eq.s32.totalorder %v2763, 1
        %vm2774 = vcmp.eq.s32.totalorder %v2764, 1
        %vm2775 = vcmp.eq.s32.totalorder %v2765, 1
        %vm2776 = vcmp.eq.s32.totalorder %v2766, 1
        %vm2777 = vcmp.eq.s32.totalorder %v2767, 1
        %vm2778 = vcmp.eq.s32.totalorder %v2768, 1
        %vm2779 = vcmp.eq.s32.totalorder %v2769, 1
        %vm2780 = vcmp.eq.s32.totalorder %v2770, 1
        %vm2781 = vcmp.eq.s32.totalorder %v2771, 1
        %v2782 = vsel %vm2772, %v2701, 0.0
        %v2783 = vsel %vm2772, %v2702, 0.0
        %v2784 = vsel %vm2773, %v2703, 0.0
        %v2785 = vsel %vm2773, %v2704, 0.0
        %v2786 = vsel %vm2774, %v2705, 0.0
        %v2787 = vsel %vm2774, %v2706, 0.0
        %v2788 = vsel %vm2775, %v2707, 0.0
        %v2789 = vsel %vm2775, %v2708, 0.0
        %v2790 = vsel %vm2776, %v2709, 0.0
        %v2791 = vsel %vm2776, %v2710, 0.0
        %v2792 = vsel %vm2777, %v2711, 0.0
        %v2793 = vsel %vm2777, %v2712, 0.0
        %v2794 = vsel %vm2778, %v2713, 0.0
        %v2795 = vsel %vm2778, %v2714, 0.0
        %v2796 = vsel %vm2779, %v2715, 0.0
        %v2797 = vsel %vm2779, %v2716, 0.0
        %v2798 = vsel %vm2780, %v2717, 0.0
        %v2799 = vsel %vm2780, %v2718, 0.0
        %v2800 = vsel %vm2781, %v2719, 0.0
        %v2801 = vsel %vm2781, %v2720, 0.0
        %vm2802 = vcmask 1047559
        %vm2803 = vsmask.f32 7966
        %vm2804 = vmand %vm2802, %vm2803
        %v2805 = vld [vmem:[#allocation2] sm:$0x80]
        %v2806 = vsel %vm2804, 0, %v2805
        %2807 = vst [vmem:[#allocation2] sm:$0x80] %v2806
        %v2808 = vld [vmem:[#allocation2 + $0x18] sm:$0x80]
        %v2809 = vsel %vm2804, 0, %v2808
        %2810 = vst [vmem:[#allocation2 + $0x18] sm:$0x80] %v2809
        %v2811 = vld [vmem:[#allocation2 + $0x30] sm:$0x80]
        %v2812 = vsel %vm2804, 0, %v2811
        %2813 = vst [vmem:[#allocation2 + $0x30] sm:$0x80] %v2812
        %v2814 = vld [vmem:[#allocation2 + $0x48] sm:$0x80]
        %v2815 = vsel %vm2804, 0, %v2814
        %2816 = vst [vmem:[#allocation2 + $0x48] sm:$0x80] %v2815
        %v2817 = vld [vmem:[#allocation2 + $0x60] sm:$0x80]
        %v2818 = vsel %vm2804, 0, %v2817
        %2819 = vst [vmem:[#allocation2 + $0x60] sm:$0x80] %v2818
        %v2820 = vld [vmem:[#allocation2 + $0x78] sm:$0x80]
        %v2821 = vsel %vm2804, 0, %v2820
        %2822 = vst [vmem:[#allocation2 + $0x78] sm:$0x80] %v2821
        %v2823 = vld [vmem:[#allocation2 + $0x90] sm:$0x80]
        %v2824 = vsel %vm2804, 0, %v2823
        %2825 = vst [vmem:[#allocation2 + $0x90] sm:$0x80] %v2824
        %v2826 = vld [vmem:[#allocation2 + $0xa8] sm:$0x80]
        %v2827 = vsel %vm2804, 0, %v2826
        %2828 = vst [vmem:[#allocation2 + $0xa8] sm:$0x80] %v2827
        %v2829 = vld [vmem:[#allocation2 + $0xc0] sm:$0x80]
        %v2830 = vsel %vm2804, 0, %v2829
        %2831 = vst [vmem:[#allocation2 + $0xc0] sm:$0x80] %v2830
        %v2832 = vld [vmem:[#allocation2 + $0xd8] sm:$0x80]
        %v2833 = vsel %vm2804, 0, %v2832
        %2834 = vst [vmem:[#allocation2 + $0xd8] sm:$0x80] %v2833
        %vm2835 = vcmask 1040384
        %vm2836 = vsmask.f32 256
        %vm2837 = vmand %vm2835, %vm2836
        %v2838 = vld [vmem:[#allocation2 + $0x10] sm:$0x1]
        %v2839 = vsel %vm2837, 0, %v2838
        %2840 = vst [vmem:[#allocation2 + $0x10] sm:$0x1] %v2839
        %v2841 = vld [vmem:[#allocation2 + $0x28] sm:$0x1]
        %v2842 = vsel %vm2837, 0, %v2841
        %2843 = vst [vmem:[#allocation2 + $0x28] sm:$0x1] %v2842
        %v2844 = vld [vmem:[#allocation2 + $0x40] sm:$0x1]
        %v2845 = vsel %vm2837, 0, %v2844
        %2846 = vst [vmem:[#allocation2 + $0x40] sm:$0x1] %v2845
        %v2847 = vld [vmem:[#allocation2 + $0x58] sm:$0x1]
        %v2848 = vsel %vm2837, 0, %v2847
        %2849 = vst [vmem:[#allocation2 + $0x58] sm:$0x1] %v2848
        %v2850 = vld [vmem:[#allocation2 + $0x70] sm:$0x1]
        %v2851 = vsel %vm2837, 0, %v2850
        %2852 = vst [vmem:[#allocation2 + $0x70] sm:$0x1] %v2851
        %v2853 = vld [vmem:[#allocation2 + $0x88] sm:$0x1]
        %v2854 = vsel %vm2837, 0, %v2853
        %2855 = vst [vmem:[#allocation2 + $0x88] sm:$0x1] %v2854
        %v2856 = vld [vmem:[#allocation2 + $0xa0] sm:$0x1]
        %v2857 = vsel %vm2837, 0, %v2856
        %2858 = vst [vmem:[#allocation2 + $0xa0] sm:$0x1] %v2857
        %v2859 = vld [vmem:[#allocation2 + $0xb8] sm:$0x1]
        %v2860 = vsel %vm2837, 0, %v2859
        %2861 = vst [vmem:[#allocation2 + $0xb8] sm:$0x1] %v2860
        %v2862 = vld [vmem:[#allocation2 + $0xd0] sm:$0x1]
        %v2863 = vsel %vm2837, 0, %v2862
        %2864 = vst [vmem:[#allocation2 + $0xd0] sm:$0x1] %v2863
        %v2865 = vld [vmem:[#allocation2 + $0xe8] sm:$0x1]
        %v2866 = vsel %vm2837, 0, %v2865
        %2867 = vst [vmem:[#allocation2 + $0xe8] sm:$0x1] %v2866
        %v2868 = vpack.c.bf16 %v2783, %v2782
        %v2869 = vpack.c.bf16 %v2785, %v2784
        %v2870 = vpack.c.bf16 %v2787, %v2786
        %v2871 = vpack.c.bf16 %v2789, %v2788
        %v2872 = vpack.c.bf16 %v2791, %v2790
        %v2873 = vpack.c.bf16 %v2793, %v2792
        %v2874 = vpack.c.bf16 %v2795, %v2794
        %v2875 = vpack.c.bf16 %v2797, %v2796
        %v2876 = vpack.c.bf16 %v2799, %v2798
        %v2877 = vpack.c.bf16 %v2801, %v2800
        %2878 = vst [vmem:[#allocation2 + $0x8] sm:$0xff] %v2868
        %2879 = vst [vmem:[#allocation2 + $0x20] sm:$0xff] %v2869
        %2880 = vst [vmem:[#allocation2 + $0x38] sm:$0xff] %v2870
        %2881 = vst [vmem:[#allocation2 + $0x50] sm:$0xff] %v2871
        %2882 = vst [vmem:[#allocation2 + $0x68] sm:$0xff] %v2872
        %2883 = vst [vmem:[#allocation2 + $0x80] sm:$0xff] %v2873
        %2884 = vst [vmem:[#allocation2 + $0x98] sm:$0xff] %v2874
        %2885 = vst [vmem:[#allocation2 + $0xb0] sm:$0xff] %v2875
        %2886 = vst [vmem:[#allocation2 + $0xc8] sm:$0xff] %v2876
        %2887 = vst [vmem:[#allocation2 + $0xe0] sm:$0xff] %v2877
        %v2888 = vld [vmem:[#allocation2] sm:$0x80]
        %v2889 = vld [vmem:[#allocation2 + $0x8] sm:$0xff]
        %v2890 = vld [vmem:[#allocation2 + $0x18] sm:$0x80]
        %v2891 = vld [vmem:[#allocation2 + $0x20] sm:$0xff]
        %v2892 = vld [vmem:[#allocation2 + $0x30] sm:$0x80]
        %v2893 = vld [vmem:[#allocation2 + $0x38] sm:$0xff]
        %v2894 = vld [vmem:[#allocation2 + $0x48] sm:$0x80]
        %v2895 = vld [vmem:[#allocation2 + $0x50] sm:$0xff]
        %v2896 = vld [vmem:[#allocation2 + $0x60] sm:$0x80]
        %v2897 = vld [vmem:[#allocation2 + $0x68] sm:$0xff]
        %v2898 = vld [vmem:[#allocation2 + $0x78] sm:$0x80]
        %v2899 = vld [vmem:[#allocation2 + $0x80] sm:$0xff]
        %v2900 = vld [vmem:[#allocation2 + $0x90] sm:$0x80]
        %v2901 = vld [vmem:[#allocation2 + $0x98] sm:$0xff]
        %v2902 = vld [vmem:[#allocation2 + $0xa8] sm:$0x80]
        %v2903 = vld [vmem:[#allocation2 + $0xb0] sm:$0xff]
        %v2904 = vld [vmem:[#allocation2 + $0xc0] sm:$0x80]
        %v2905 = vld [vmem:[#allocation2 + $0xc8] sm:$0xff]
        %v2906 = vld [vmem:[#allocation2 + $0xd8] sm:$0x80]
        %v2907 = vld [vmem:[#allocation2 + $0xe0] sm:$0xff]
        %v2909 = vshrl.u32 %v2888, 16
        %v2911 = vrot.slane %v2909, 7
        %v2913 = vshrl.u32 %v2889, 16
        %v2915 = vrot.slane %v2913, 7
        %v2916 = vshll.u32 %v2889, 16
        %v2918 = vor.u32 %v2915, %v2916
        %v2919 = vsel %vm2836, %v2911, %v2918
        %v2921 = vshrl.u32 %v2890, 16
        %v2923 = vrot.slane %v2921, 7
        %v2925 = vshrl.u32 %v2891, 16
        %v2927 = vrot.slane %v2925, 7
        %v2928 = vshll.u32 %v2891, 16
        %v2930 = vor.u32 %v2927, %v2928
        %v2931 = vsel %vm2836, %v2923, %v2930
        %v2933 = vshrl.u32 %v2892, 16
        %v2935 = vrot.slane %v2933, 7
        %v2937 = vshrl.u32 %v2893, 16
        %v2939 = vrot.slane %v2937, 7
        %v2940 = vshll.u32 %v2893, 16
        %v2942 = vor.u32 %v2939, %v2940
        %v2943 = vsel %vm2836, %v2935, %v2942
        %v2945 = vshrl.u32 %v2894, 16
        %v2947 = vrot.slane %v2945, 7
        %v2949 = vshrl.u32 %v2895, 16
        %v2951 = vrot.slane %v2949, 7
        %v2952 = vshll.u32 %v2895, 16
        %v2954 = vor.u32 %v2951, %v2952
        %v2955 = vsel %vm2836, %v2947, %v2954
        %v2957 = vshrl.u32 %v2896, 16
        %v2959 = vrot.slane %v2957, 7
        %v2961 = vshrl.u32 %v2897, 16
        %v2963 = vrot.slane %v2961, 7
        %v2964 = vshll.u32 %v2897, 16
        %v2966 = vor.u32 %v2963, %v2964
        %v2967 = vsel %vm2836, %v2959, %v2966
        %v2969 = vshrl.u32 %v2898, 16
        %v2971 = vrot.slane %v2969, 7
        %v2973 = vshrl.u32 %v2899, 16
        %v2975 = vrot.slane %v2973, 7
        %v2976 = vshll.u32 %v2899, 16
        %v2978 = vor.u32 %v2975, %v2976
        %v2979 = vsel %vm2836, %v2971, %v2978
        %v2981 = vshrl.u32 %v2900, 16
        %v2983 = vrot.slane %v2981, 7
        %v2985 = vshrl.u32 %v2901, 16
        %v2987 = vrot.slane %v2985, 7
        %v2988 = vshll.u32 %v2901, 16
        %v2990 = vor.u32 %v2987, %v2988
        %v2991 = vsel %vm2836, %v2983, %v2990
        %v2993 = vshrl.u32 %v2902, 16
        %v2995 = vrot.slane %v2993, 7
        %v2997 = vshrl.u32 %v2903, 16
        %v2999 = vrot.slane %v2997, 7
        %v3000 = vshll.u32 %v2903, 16
        %v3002 = vor.u32 %v2999, %v3000
        %v3003 = vsel %vm2836, %v2995, %v3002
        %v3012 = vld [vmem:[#allocation3] sm:$0xf]
        %v3013 = vld [vmem:[#allocation3 + $0x4] sm:$0xf]
        %v3014 = vld [vmem:[#allocation3 + $0x8] sm:$0xf]
        %v3015 = vld [vmem:[#allocation3 + $0xc] sm:$0xf]
        %v3016 = vld [vmem:[#allocation3 + $0x10] sm:$0xf]
        %v3017 = vld [vmem:[#allocation3 + $0x14] sm:$0xf]
        %v3018 = vld [vmem:[#allocation3 + $0x18] sm:$0xf]
        %v3019 = vld [vmem:[#allocation3 + $0x1c] sm:$0xf]
        %v3020 = vld [vmem:[#allocation3 + $0x20] sm:$0xf]
        %v3021 = vld [vmem:[#allocation3 + $0x24] sm:$0xf]
        %v3022 = vld [vmem:[#allocation3 + $0x28] sm:$0xf]
        %v3023 = vld [vmem:[#allocation3 + $0x2c] sm:$0xf]
        %v3024 = vld [vmem:[#allocation3 + $0x30] sm:$0xf]
        %v3025 = vld [vmem:[#allocation3 + $0x34] sm:$0xf]
        %v3026 = vld [vmem:[#allocation3 + $0x38] sm:$0xf]
        %v3027 = vld [vmem:[#allocation3 + $0x3c] sm:$0xf]
        %v3029 = vshrl.u32 %v2904, 16
        %v3031 = vrot.slane %v3029, 7
        %v3033 = vshrl.u32 %v2905, 16
        %v3035 = vrot.slane %v3033, 7
        %v3036 = vshll.u32 %v2905, 16
        %v3038 = vor.u32 %v3035, %v3036
        %v3039 = vsel %vm2836, %v3031, %v3038
        %s3041 = scalar_lea.vmem [#allocation3], 192
        %v3042 = vld [vmem:[%s3041] sm:$0xf]
        %v3043 = vld [vmem:[%s3041 + $0x4] sm:$0xf]
        %v3044 = vld [vmem:[%s3041 + $0x8] sm:$0xf]
        %v3045 = vld [vmem:[%s3041 + $0xc] sm:$0xf]
        %v3046 = vld [vmem:[%s3041 + $0x10] sm:$0xf]
        %v3047 = vld [vmem:[%s3041 + $0x14] sm:$0xf]
        %v3048 = vld [vmem:[%s3041 + $0x18] sm:$0xf]
        %v3049 = vld [vmem:[%s3041 + $0x1c] sm:$0xf]
        %v3050 = vld [vmem:[%s3041 + $0x20] sm:$0xf]
        %v3051 = vld [vmem:[%s3041 + $0x24] sm:$0xf]
        %v3052 = vld [vmem:[%s3041 + $0x28] sm:$0xf]
        %v3053 = vld [vmem:[%s3041 + $0x2c] sm:$0xf]
        %v3054 = vld [vmem:[%s3041 + $0x30] sm:$0xf]
        %v3055 = vld [vmem:[%s3041 + $0x34] sm:$0xf]
        %v3056 = vld [vmem:[%s3041 + $0x38] sm:$0xf]
        %v3057 = vld [vmem:[%s3041 + $0x3c] sm:$0xf]
        %v3074 = vunpack.c.l.b16 %v3042
        %v3075 = vunpack.c.l.b16 %v3043
        %v3076 = vunpack.c.l.b16 %v3044
        %v3077 = vunpack.c.l.b16 %v3045
        %v3078 = vunpack.c.l.b16 %v3046
        %v3079 = vunpack.c.l.b16 %v3047
        %v3080 = vunpack.c.l.b16 %v3048
        %v3081 = vunpack.c.l.b16 %v3049
        %v3082 = vunpack.c.l.b16 %v3050
        %v3083 = vunpack.c.l.b16 %v3051
        %v3084 = vunpack.c.l.b16 %v3052
        %v3085 = vunpack.c.l.b16 %v3053
        %v3086 = vunpack.c.l.b16 %v3054
        %v3087 = vunpack.c.l.b16 %v3055
        %v3088 = vunpack.c.l.b16 %v3056
        %v3089 = vunpack.c.l.b16 %v3057
        %v3090 = vpack.c.b16 %v3075, %v3074
        %v3091 = vpack.c.b16 %v3077, %v3076
        %v3092 = vpack.c.b16 %v3079, %v3078
        %v3093 = vpack.c.b16 %v3081, %v3080
        %v3094 = vpack.c.b16 %v3083, %v3082
        %v3095 = vpack.c.b16 %v3085, %v3084
        %v3096 = vpack.c.b16 %v3087, %v3086
        %v3097 = vpack.c.b16 %v3089, %v3088
        %3106 = vmatprep.subr.bf16.mxu0 0
        %3107 = vmatpush1.bf16.msra.mxu0 %v3090
        %3108 = vmatprep.subr.bf16.mxu0 0
        %3109 = vmatpush1.bf16.msra.mxu0 %v3091
        %3110 = vmatprep.subr.bf16.mxu0 0
        %3111 = vmatpush1.bf16.msra.mxu0 %v3092
        %3112 = vmatprep.subr.bf16.mxu0 0
        %3113 = vmatpush1.bf16.msra.mxu0 %v3093
        %3114 = vmatprep.subr.bf16.mxu0 0
        %3115 = vmatpush1.bf16.msra.mxu0 %v3094
        %3116 = vmatprep.subr.bf16.mxu0 0
        %3117 = vmatpush1.bf16.msra.mxu0 %v3095
        %3118 = vmatprep.subr.bf16.mxu0 0
        %3119 = vmatpush1.bf16.msra.mxu0 %v3096
        %3120 = vmatprep.subr.bf16.mxu0 0
        %3121 = vmatpush1.bf16.msra.mxu0 %v3097
        %3122 = vmatprep.subr.bf16.mxu0 0
        %3123 = vmatpush1.bf16.msra.mxu0 0
        %3124 = vmatprep.subr.bf16.mxu0 0
        %3125 = vmatpush1.bf16.msra.mxu0 0
        %3126 = vmatprep.subr.bf16.mxu0 0
        %3127 = vmatpush1.bf16.msra.mxu0 0
        %3128 = vmatprep.subr.bf16.mxu0 0
        %3129 = vmatpush1.bf16.msra.mxu0 0
        %3130 = vmatprep.subr.bf16.mxu0 0
        %3131 = vmatpush1.bf16.msra.mxu0 0
        %3132 = vmatprep.subr.bf16.mxu0 0
        %3133 = vmatpush1.bf16.msra.mxu0 0
        %3134 = vmatprep.subr.bf16.mxu0 0
        %3135 = vmatpush1.bf16.msra.mxu0 0
        %3136 = vmatprep.subr.bf16.mxu0 0
        %3137 = vmatpush1.bf16.msra.mxu0 0
        %3138 = vmatprep.mubr.bf16.mxu0 0
        %3139 = vmatmul.mubr.bf16.gmra.mrb[0].mxu0 %v2931
        %v3140 = vpop.f32.mrb[0].mxu0
        %v3141 = vadd.f32 0.0, %v3140
        %v3142 = vpop.f32.mrb[0].mxu0
        %v3143 = vpop.f32.mrb[0].mxu0
        %v3144 = vadd.f32 0.0, %v3143
        %v3145 = vpop.f32.mrb[0].mxu0
        %3146 = vmatprep.mubr.bf16.mxu0 0
        %3147 = vmatmul.mubr.bf16.gmra.mrb[0].mxu0 %v2943
        %v3148 = vpop.f32.mrb[0].mxu0
        %v3149 = vadd.f32 0.0, %v3148
        %v3150 = vpop.f32.mrb[0].mxu0
        %v3151 = vpop.f32.mrb[0].mxu0
        %v3152 = vadd.f32 0.0, %v3151
        %v3153 = vpop.f32.mrb[0].mxu0
        %3154 = vmatprep.mubr.bf16.mxu0 0
        %3155 = vmatmul.mubr.bf16.gmra.mrb[0].mxu0 %v2955
        %v3156 = vpop.f32.mrb[0].mxu0
        %v3157 = vadd.f32 0.0, %v3156
        %v3158 = vpop.f32.mrb[0].mxu0
        %v3159 = vpop.f32.mrb[0].mxu0
        %v3160 = vadd.f32 0.0, %v3159
        %v3161 = vpop.f32.mrb[0].mxu0
        %3162 = vmatprep.mubr.bf16.mxu0 0
        %3163 = vmatmul.mubr.bf16.gmra.mrb[0].mxu0 %v2967
        %v3164 = vpop.f32.mrb[0].mxu0
        %v3165 = vadd.f32 0.0, %v3164
        %v3166 = vpop.f32.mrb[0].mxu0
        %v3167 = vpop.f32.mrb[0].mxu0
        %v3168 = vadd.f32 0.0, %v3167
        %v3169 = vpop.f32.mrb[0].mxu0
        %3170 = vmatprep.mubr.bf16.mxu0 0
        %3171 = vmatmul.mubr.bf16.gmra.mrb[0].mxu0 %v2979
        %v3172 = vpop.f32.mrb[0].mxu0
        %v3173 = vadd.f32 0.0, %v3172
        %v3174 = vpop.f32.mrb[0].mxu0
        %v3175 = vpop.f32.mrb[0].mxu0
        %v3176 = vadd.f32 0.0, %v3175
        %v3177 = vpop.f32.mrb[0].mxu0
        %3178 = vmatprep.mubr.bf16.mxu0 0
        %3179 = vmatmul.mubr.bf16.gmra.mrb[0].mxu0 %v2991
        %v3180 = vpop.f32.mrb[0].mxu0
        %v3181 = vadd.f32 0.0, %v3180
        %v3182 = vpop.f32.mrb[0].mxu0
        %v3183 = vpop.f32.mrb[0].mxu0
        %v3184 = vadd.f32 0.0, %v3183
        %v3185 = vpop.f32.mrb[0].mxu0
        %3186 = vmatprep.mubr.bf16.mxu0 0
        %3187 = vmatmul.mubr.bf16.gmra.mrb[0].mxu0 %v3003
        %v3188 = vpop.f32.mrb[0].mxu0
        %v3189 = vadd.f32 0.0, %v3188
        %v3190 = vpop.f32.mrb[0].mxu0
        %v3191 = vpop.f32.mrb[0].mxu0
        %v3192 = vadd.f32 0.0, %v3191
        %v3193 = vpop.f32.mrb[0].mxu0
        %3194 = vmatprep.mubr.bf16.mxu0 0
        %3195 = vmatmul.mubr.bf16.gmra.mrb[0].mxu0 %v3039
        %v3196 = vpop.f32.mrb[0].mxu0
        %v3197 = vadd.f32 0.0, %v3196
        %v3198 = vpop.f32.mrb[0].mxu0
        %v3199 = vpop.f32.mrb[0].mxu0
        %v3200 = vadd.f32 0.0, %v3199
        %v3201 = vpop.f32.mrb[0].mxu0
        %3202 = vdwg.mxu0
        %v3219 = vunpack.c.l.b16 %v3012
        %v3220 = vunpack.c.l.b16 %v3013
        %v3221 = vunpack.c.l.b16 %v3014
        %v3222 = vunpack.c.l.b16 %v3015
        %v3223 = vunpack.c.l.b16 %v3016
        %v3224 = vunpack.c.l.b16 %v3017
        %v3225 = vunpack.c.l.b16 %v3018
        %v3226 = vunpack.c.l.b16 %v3019
        %v3227 = vunpack.c.l.b16 %v3020
        %v3228 = vunpack.c.l.b16 %v3021
        %v3229 = vunpack.c.l.b16 %v3022
        %v3230 = vunpack.c.l.b16 %v3023
        %v3231 = vunpack.c.l.b16 %v3024
        %v3232 = vunpack.c.l.b16 %v3025
        %v3233 = vunpack.c.l.b16 %v3026
        %v3234 = vunpack.c.l.b16 %v3027
        %v3235 = vpack.c.b16 %v3220, %v3219
        %v3236 = vpack.c.b16 %v3222, %v3221
        %v3237 = vpack.c.b16 %v3224, %v3223
        %v3238 = vpack.c.b16 %v3226, %v3225
        %v3239 = vpack.c.b16 %v3228, %v3227
        %v3240 = vpack.c.b16 %v3230, %v3229
        %v3241 = vpack.c.b16 %v3232, %v3231
        %v3242 = vpack.c.b16 %v3234, %v3233
        %3251 = vmatprep.subr.bf16.mxu0 0
        %3252 = vmatpush1.bf16.msra.mxu0 %v3235
        %3253 = vmatprep.subr.bf16.mxu0 0
        %3254 = vmatpush1.bf16.msra.mxu0 %v3236
        %3255 = vmatprep.subr.bf16.mxu0 0
        %3256 = vmatpush1.bf16.msra.mxu0 %v3237
        %3257 = vmatprep.subr.bf16.mxu0 0
        %3258 = vmatpush1.bf16.msra.mxu0 %v3238
        %3259 = vmatprep.subr.bf16.mxu0 0
        %3260 = vmatpush1.bf16.msra.mxu0 %v3239
        %3261 = vmatprep.subr.bf16.mxu0 0
        %3262 = vmatpush1.bf16.msra.mxu0 %v3240
        %3263 = vmatprep.subr.bf16.mxu0 0
        %3264 = vmatpush1.bf16.msra.mxu0 %v3241
        %3265 = vmatprep.subr.bf16.mxu0 0
        %3266 = vmatpush1.bf16.msra.mxu0 %v3242
        %3267 = vmatprep.subr.bf16.mxu0 0
        %3268 = vmatpush1.bf16.msra.mxu0 0
        %3269 = vmatprep.subr.bf16.mxu0 0
        %3270 = vmatpush1.bf16.msra.mxu0 0
        %3271 = vmatprep.subr.bf16.mxu0 0
        %3272 = vmatpush1.bf16.msra.mxu0 0
        %3273 = vmatprep.subr.bf16.mxu0 0
        %3274 = vmatpush1.bf16.msra.mxu0 0
        %3275 = vmatprep.subr.bf16.mxu0 0
        %3276 = vmatpush1.bf16.msra.mxu0 0
        %3277 = vmatprep.subr.bf16.mxu0 0
        %3278 = vmatpush1.bf16.msra.mxu0 0
        %3279 = vmatprep.subr.bf16.mxu0 0
        %3280 = vmatpush1.bf16.msra.mxu0 0
        %3281 = vmatprep.subr.bf16.mxu0 0
        %3282 = vmatpush1.bf16.msra.mxu0 0
        %3283 = vmatprep.mubr.bf16.mxu0 0
        %3284 = vmatmul.mubr.bf16.gmra.mrb[0].mxu0 %v2919
        %v3285 = vpop.f32.mrb[0].mxu0
        %v3286 = vadd.f32 %v3141, %v3285
        %v3287 = vpop.f32.mrb[0].mxu0
        %v3288 = vpop.f32.mrb[0].mxu0
        %v3289 = vadd.f32 %v3144, %v3288
        %v3290 = vpop.f32.mrb[0].mxu0
        %3291 = vmatprep.mubr.bf16.mxu0 0
        %3292 = vmatmul.mubr.bf16.gmra.mrb[0].mxu0 %v2931
        %v3293 = vpop.f32.mrb[0].mxu0
        %v3294 = vadd.f32 %v3149, %v3293
        %v3295 = vpop.f32.mrb[0].mxu0
        %v3296 = vpop.f32.mrb[0].mxu0
        %v3297 = vadd.f32 %v3152, %v3296
        %v3298 = vpop.f32.mrb[0].mxu0
        %3299 = vmatprep.mubr.bf16.mxu0 0
        %3300 = vmatmul.mubr.bf16.gmra.mrb[0].mxu0 %v2943
        %v3301 = vpop.f32.mrb[0].mxu0
        %v3302 = vadd.f32 %v3157, %v3301
        %v3303 = vpop.f32.mrb[0].mxu0
        %v3304 = vpop.f32.mrb[0].mxu0
        %v3305 = vadd.f32 %v3160, %v3304
        %v3306 = vpop.f32.mrb[0].mxu0
        %3307 = vmatprep.mubr.bf16.mxu0 0
        %3308 = vmatmul.mubr.bf16.gmra.mrb[0].mxu0 %v2955
        %v3309 = vpop.f32.mrb[0].mxu0
        %v3310 = vadd.f32 %v3165, %v3309
        %v3311 = vpop.f32.mrb[0].mxu0
        %v3312 = vpop.f32.mrb[0].mxu0
        %v3313 = vadd.f32 %v3168, %v3312
        %v3314 = vpop.f32.mrb[0].mxu0
        %3315 = vmatprep.mubr.bf16.mxu0 0
        %3316 = vmatmul.mubr.bf16.gmra.mrb[0].mxu0 %v2967
        %v3317 = vpop.f32.mrb[0].mxu0
        %v3318 = vadd.f32 %v3173, %v3317
        %v3319 = vpop.f32.mrb[0].mxu0
        %v3320 = vpop.f32.mrb[0].mxu0
        %v3321 = vadd.f32 %v3176, %v3320
        %v3322 = vpop.f32.mrb[0].mxu0
        %3323 = vmatprep.mubr.bf16.mxu0 0
        %3324 = vmatmul.mubr.bf16.gmra.mrb[0].mxu0 %v2979
        %v3325 = vpop.f32.mrb[0].mxu0
        %v3326 = vadd.f32 %v3181, %v3325
        %v3327 = vpop.f32.mrb[0].mxu0
        %v3328 = vpop.f32.mrb[0].mxu0
        %v3329 = vadd.f32 %v3184, %v3328
        %v3330 = vpop.f32.mrb[0].mxu0
        %3331 = vmatprep.mubr.bf16.mxu0 0
        %3332 = vmatmul.mubr.bf16.gmra.mrb[0].mxu0 %v2991
        %v3333 = vpop.f32.mrb[0].mxu0
        %v3334 = vadd.f32 %v3189, %v3333
        %v3335 = vpop.f32.mrb[0].mxu0
        %v3336 = vpop.f32.mrb[0].mxu0
        %v3337 = vadd.f32 %v3192, %v3336
        %v3338 = vpop.f32.mrb[0].mxu0
        %3339 = vmatprep.mubr.bf16.mxu0 0
        %3340 = vmatmul.mubr.bf16.gmra.mrb[0].mxu0 %v3003
        %v3341 = vpop.f32.mrb[0].mxu0
        %v3342 = vadd.f32 %v3197, %v3341
        %v3343 = vpop.f32.mrb[0].mxu0
        %v3344 = vpop.f32.mrb[0].mxu0
        %v3345 = vadd.f32 %v3200, %v3344
        %v3346 = vpop.f32.mrb[0].mxu0
        %3347 = vdwg.mxu0
        %v3349 = vshrl.u32 %v2906, 16
        %v3351 = vrot.slane %v3349, 7
        %v3353 = vshrl.u32 %v2907, 16
        %v3355 = vrot.slane %v3353, 7
        %v3356 = vshll.u32 %v2907, 16
        %v3358 = vor.u32 %v3355, %v3356
        %v3359 = vsel %vm2836, %v3351, %v3358
        %s3361 = scalar_lea.vmem [#allocation3], 384
        %v3362 = vld [vmem:[%s3361] sm:$0xf]
        %v3363 = vld [vmem:[%s3361 + $0x4] sm:$0xf]
        %v3364 = vld [vmem:[%s3361 + $0x8] sm:$0xf]
        %v3365 = vld [vmem:[%s3361 + $0xc] sm:$0xf]
        %v3366 = vld [vmem:[%s3361 + $0x10] sm:$0xf]
        %v3367 = vld [vmem:[%s3361 + $0x14] sm:$0xf]
        %v3368 = vld [vmem:[%s3361 + $0x18] sm:$0xf]
        %v3369 = vld [vmem:[%s3361 + $0x1c] sm:$0xf]
        %v3370 = vld [vmem:[%s3361 + $0x20] sm:$0xf]
        %v3371 = vld [vmem:[%s3361 + $0x24] sm:$0xf]
        %v3372 = vld [vmem:[%s3361 + $0x28] sm:$0xf]
        %v3373 = vld [vmem:[%s3361 + $0x2c] sm:$0xf]
        %v3374 = vld [vmem:[%s3361 + $0x30] sm:$0xf]
        %v3375 = vld [vmem:[%s3361 + $0x34] sm:$0xf]
        %v3376 = vld [vmem:[%s3361 + $0x38] sm:$0xf]
        %v3377 = vld [vmem:[%s3361 + $0x3c] sm:$0xf]
        %v3394 = vunpack.c.l.b16 %v3362
        %v3395 = vunpack.c.l.b16 %v3363
        %v3396 = vunpack.c.l.b16 %v3364
        %v3397 = vunpack.c.l.b16 %v3365
        %v3398 = vunpack.c.l.b16 %v3366
        %v3399 = vunpack.c.l.b16 %v3367
        %v3400 = vunpack.c.l.b16 %v3368
        %v3401 = vunpack.c.l.b16 %v3369
        %v3402 = vunpack.c.l.b16 %v3370
        %v3403 = vunpack.c.l.b16 %v3371
        %v3404 = vunpack.c.l.b16 %v3372
        %v3405 = vunpack.c.l.b16 %v3373
        %v3406 = vunpack.c.l.b16 %v3374
        %v3407 = vunpack.c.l.b16 %v3375
        %v3408 = vunpack.c.l.b16 %v3376
        %v3409 = vunpack.c.l.b16 %v3377
        %v3410 = vpack.c.b16 %v3395, %v3394
        %v3411 = vpack.c.b16 %v3397, %v3396
        %v3412 = vpack.c.b16 %v3399, %v3398
        %v3413 = vpack.c.b16 %v3401, %v3400
        %v3414 = vpack.c.b16 %v3403, %v3402
        %v3415 = vpack.c.b16 %v3405, %v3404
        %v3416 = vpack.c.b16 %v3407, %v3406
        %v3417 = vpack.c.b16 %v3409, %v3408
        %3426 = vmatprep.subr.bf16.mxu0 0
        %3427 = vmatpush1.bf16.msra.mxu0 %v3410
        %3428 = vmatprep.subr.bf16.mxu0 0
        %3429 = vmatpush1.bf16.msra.mxu0 %v3411
        %3430 = vmatprep.subr.bf16.mxu0 0
        %3431 = vmatpush1.bf16.msra.mxu0 %v3412
        %3432 = vmatprep.subr.bf16.mxu0 0
        %3433 = vmatpush1.bf16.msra.mxu0 %v3413
        %3434 = vmatprep.subr.bf16.mxu0 0
        %3435 = vmatpush1.bf16.msra.mxu0 %v3414
        %3436 = vmatprep.subr.bf16.mxu0 0
        %3437 = vmatpush1.bf16.msra.mxu0 %v3415
        %3438 = vmatprep.subr.bf16.mxu0 0
        %3439 = vmatpush1.bf16.msra.mxu0 %v3416
        %3440 = vmatprep.subr.bf16.mxu0 0
        %3441 = vmatpush1.bf16.msra.mxu0 %v3417
        %3442 = vmatprep.subr.bf16.mxu0 0
        %3443 = vmatpush1.bf16.msra.mxu0 0
        %3444 = vmatprep.subr.bf16.mxu0 0
        %3445 = vmatpush1.bf16.msra.mxu0 0
        %3446 = vmatprep.subr.bf16.mxu0 0
        %3447 = vmatpush1.bf16.msra.mxu0 0
        %3448 = vmatprep.subr.bf16.mxu0 0
        %3449 = vmatpush1.bf16.msra.mxu0 0
        %3450 = vmatprep.subr.bf16.mxu0 0
        %3451 = vmatpush1.bf16.msra.mxu0 0
        %3452 = vmatprep.subr.bf16.mxu0 0
        %3453 = vmatpush1.bf16.msra.mxu0 0
        %3454 = vmatprep.subr.bf16.mxu0 0
        %3455 = vmatpush1.bf16.msra.mxu0 0
        %3456 = vmatprep.subr.bf16.mxu0 0
        %3457 = vmatpush1.bf16.msra.mxu0 0
        %3458 = vmatprep.mubr.bf16.mxu0 0
        %3459 = vmatmul.mubr.bf16.gmra.mrb[0].mxu0 %v2943
        %v3460 = vpop.f32.mrb[0].mxu0
        %v3461 = vadd.f32 0.0, %v3460
        %v3462 = vpop.f32.mrb[0].mxu0
        %v3463 = vpop.f32.mrb[0].mxu0
        %v3464 = vadd.f32 0.0, %v3463
        %v3465 = vpop.f32.mrb[0].mxu0
        %3466 = vmatprep.mubr.bf16.mxu0 0
        %3467 = vmatmul.mubr.bf16.gmra.mrb[0].mxu0 %v2955
        %v3468 = vpop.f32.mrb[0].mxu0
        %v3469 = vadd.f32 0.0, %v3468
        %v3470 = vpop.f32.mrb[0].mxu0
        %v3471 = vpop.f32.mrb[0].mxu0
        %v3472 = vadd.f32 0.0, %v3471
        %v3473 = vpop.f32.mrb[0].mxu0
        %3474 = vmatprep.mubr.bf16.mxu0 0
        %3475 = vmatmul.mubr.bf16.gmra.mrb[0].mxu0 %v2967
        %v3476 = vpop.f32.mrb[0].mxu0
        %v3477 = vadd.f32 0.0, %v3476
        %v3478 = vpop.f32.mrb[0].mxu0
        %v3479 = vpop.f32.mrb[0].mxu0
        %v3480 = vadd.f32 0.0, %v3479
        %v3481 = vpop.f32.mrb[0].mxu0
        %3482 = vmatprep.mubr.bf16.mxu0 0
        %3483 = vmatmul.mubr.bf16.gmra.mrb[0].mxu0 %v2979
        %v3484 = vpop.f32.mrb[0].mxu0
        %v3485 = vadd.f32 0.0, %v3484
        %v3486 = vpop.f32.mrb[0].mxu0
        %v3487 = vpop.f32.mrb[0].mxu0
        %v3488 = vadd.f32 0.0, %v3487
        %v3489 = vpop.f32.mrb[0].mxu0
        %3490 = vmatprep.mubr.bf16.mxu0 0
        %3491 = vmatmul.mubr.bf16.gmra.mrb[0].mxu0 %v2991
        %v3492 = vpop.f32.mrb[0].mxu0
        %v3493 = vadd.f32 0.0, %v3492
        %v3494 = vpop.f32.mrb[0].mxu0
        %v3495 = vpop.f32.mrb[0].mxu0
        %v3496 = vadd.f32 0.0, %v3495
        %v3497 = vpop.f32.mrb[0].mxu0
        %3498 = vmatprep.mubr.bf16.mxu0 0
        %3499 = vmatmul.mubr.bf16.gmra.mrb[0].mxu0 %v3003
        %v3500 = vpop.f32.mrb[0].mxu0
        %v3501 = vadd.f32 0.0, %v3500
        %v3502 = vpop.f32.mrb[0].mxu0
        %v3503 = vpop.f32.mrb[0].mxu0
        %v3504 = vadd.f32 0.0, %v3503
        %v3505 = vpop.f32.mrb[0].mxu0
        %3506 = vmatprep.mubr.bf16.mxu0 0
        %3507 = vmatmul.mubr.bf16.gmra.mrb[0].mxu0 %v3039
        %v3508 = vpop.f32.mrb[0].mxu0
        %v3509 = vadd.f32 0.0, %v3508
        %v3510 = vpop.f32.mrb[0].mxu0
        %v3511 = vpop.f32.mrb[0].mxu0
        %v3512 = vadd.f32 0.0, %v3511
        %v3513 = vpop.f32.mrb[0].mxu0
        %3514 = vmatprep.mubr.bf16.mxu0 0
        %3515 = vmatmul.mubr.bf16.gmra.mrb[0].mxu0 %v3359
        %v3516 = vpop.f32.mrb[0].mxu0
        %v3517 = vadd.f32 0.0, %v3516
        %v3518 = vpop.f32.mrb[0].mxu0
        %v3519 = vpop.f32.mrb[0].mxu0
        %v3520 = vadd.f32 0.0, %v3519
        %v3521 = vpop.f32.mrb[0].mxu0
        %3522 = vdwg.mxu0
        %v3523 = vadd.f32 %v3286, %v3461
        %v3524 = vadd.f32 %v3289, %v3464
        %v3525 = vadd.f32 %v3294, %v3469
        %v3526 = vadd.f32 %v3297, %v3472
        %v3527 = vadd.f32 %v3302, %v3477
        %v3528 = vadd.f32 %v3305, %v3480
        %v3529 = vadd.f32 %v3310, %v3485
        %v3530 = vadd.f32 %v3313, %v3488
        %v3531 = vadd.f32 %v3318, %v3493
        %v3532 = vadd.f32 %v3321, %v3496
        %v3533 = vadd.f32 %v3326, %v3501
        %v3534 = vadd.f32 %v3329, %v3504
        %v3535 = vadd.f32 %v3334, %v3509
        %v3536 = vadd.f32 %v3337, %v3512
        %v3537 = vadd.f32 %v3342, %v3517
        %v3538 = vadd.f32 %v3345, %v3520
        %s3539 = scalar_lea.vmem [#allocation3], 64
        %v3540 = vld [vmem:[%s3539] sm:$0xf]
        %v3541 = vld [vmem:[%s3539 + $0x4] sm:$0xf]
        %v3542 = vld [vmem:[%s3539 + $0x8] sm:$0xf]
        %v3543 = vld [vmem:[%s3539 + $0xc] sm:$0xf]
        %v3544 = vld [vmem:[%s3539 + $0x10] sm:$0xf]
        %v3545 = vld [vmem:[%s3539 + $0x14] sm:$0xf]
        %v3546 = vld [vmem:[%s3539 + $0x18] sm:$0xf]
        %v3547 = vld [vmem:[%s3539 + $0x1c] sm:$0xf]
        %v3548 = vld [vmem:[%s3539 + $0x20] sm:$0xf]
        %v3549 = vld [vmem:[%s3539 + $0x24] sm:$0xf]
        %v3550 = vld [vmem:[%s3539 + $0x28] sm:$0xf]
        %v3551 = vld [vmem:[%s3539 + $0x2c] sm:$0xf]
        %v3552 = vld [vmem:[%s3539 + $0x30] sm:$0xf]
        %v3553 = vld [vmem:[%s3539 + $0x34] sm:$0xf]
        %v3554 = vld [vmem:[%s3539 + $0x38] sm:$0xf]
        %v3555 = vld [vmem:[%s3539 + $0x3c] sm:$0xf]
        %v3572 = vunpack.c.l.b16 %v3540
        %v3573 = vunpack.c.l.b16 %v3541
        %v3574 = vunpack.c.l.b16 %v3542
        %v3575 = vunpack.c.l.b16 %v3543
        %v3576 = vunpack.c.l.b16 %v3544
        %v3577 = vunpack.c.l.b16 %v3545
        %v3578 = vunpack.c.l.b16 %v3546
        %v3579 = vunpack.c.l.b16 %v3547
        %v3580 = vunpack.c.l.b16 %v3548
        %v3581 = vunpack.c.l.b16 %v3549
        %v3582 = vunpack.c.l.b16 %v3550
        %v3583 = vunpack.c.l.b16 %v3551
        %v3584 = vunpack.c.l.b16 %v3552
        %v3585 = vunpack.c.l.b16 %v3553
        %v3586 = vunpack.c.l.b16 %v3554
        %v3587 = vunpack.c.l.b16 %v3555
        %v3588 = vpack.c.b16 %v3573, %v3572
        %v3589 = vpack.c.b16 %v3575, %v3574
        %v3590 = vpack.c.b16 %v3577, %v3576
        %v3591 = vpack.c.b16 %v3579, %v3578
        %v3592 = vpack.c.b16 %v3581, %v3580
        %v3593 = vpack.c.b16 %v3583, %v3582
        %v3594 = vpack.c.b16 %v3585, %v3584
        %v3595 = vpack.c.b16 %v3587, %v3586
        %3604 = vmatprep.subr.bf16.mxu0 0
        %3605 = vmatpush1.bf16.msra.mxu0 %v3588
        %3606 = vmatprep.subr.bf16.mxu0 0
        %3607 = vmatpush1.bf16.msra.mxu0 %v3589
        %3608 = vmatprep.subr.bf16.mxu0 0
        %3609 = vmatpush1.bf16.msra.mxu0 %v3590
        %3610 = vmatprep.subr.bf16.mxu0 0
        %3611 = vmatpush1.bf16.msra.mxu0 %v3591
        %3612 = vmatprep.subr.bf16.mxu0 0
        %3613 = vmatpush1.bf16.msra.mxu0 %v3592
        %3614 = vmatprep.subr.bf16.mxu0 0
        %3615 = vmatpush1.bf16.msra.mxu0 %v3593
        %3616 = vmatprep.subr.bf16.mxu0 0
        %3617 = vmatpush1.bf16.msra.mxu0 %v3594
        %3618 = vmatprep.subr.bf16.mxu0 0
        %3619 = vmatpush1.bf16.msra.mxu0 %v3595
        %3620 = vmatprep.subr.bf16.mxu0 0
        %3621 = vmatpush1.bf16.msra.mxu0 0
        %3622 = vmatprep.subr.bf16.mxu0 0
        %3623 = vmatpush1.bf16.msra.mxu0 0
        %3624 = vmatprep.subr.bf16.mxu0 0
        %3625 = vmatpush1.bf16.msra.mxu0 0
        %3626 = vmatprep.subr.bf16.mxu0 0
        %3627 = vmatpush1.bf16.msra.mxu0 0
        %3628 = vmatprep.subr.bf16.mxu0 0
        %3629 = vmatpush1.bf16.msra.mxu0 0
        %3630 = vmatprep.subr.bf16.mxu0 0
        %3631 = vmatpush1.bf16.msra.mxu0 0
        %3632 = vmatprep.subr.bf16.mxu0 0
        %3633 = vmatpush1.bf16.msra.mxu0 0
        %3634 = vmatprep.subr.bf16.mxu0 0
        %3635 = vmatpush1.bf16.msra.mxu0 0
        %3636 = vmatprep.mubr.bf16.mxu0 0
        %3637 = vmatmul.mubr.bf16.gmra.mrb[0].mxu0 %v2889
        %v3638 = vpop.f32.mrb[0].mxu0
        %v3639 = vadd.f32 0.0, %v3638
        %v3640 = vpop.f32.mrb[0].mxu0
        %v3641 = vpop.f32.mrb[0].mxu0
        %v3642 = vadd.f32 0.0, %v3641
        %v3643 = vpop.f32.mrb[0].mxu0
        %3644 = vmatprep.mubr.bf16.mxu0 0
        %3645 = vmatmul.mubr.bf16.gmra.mrb[0].mxu0 %v2891
        %v3646 = vpop.f32.mrb[0].mxu0
        %v3647 = vadd.f32 0.0, %v3646
        %v3648 = vpop.f32.mrb[0].mxu0
        %v3649 = vpop.f32.mrb[0].mxu0
        %v3650 = vadd.f32 0.0, %v3649
        %v3651 = vpop.f32.mrb[0].mxu0
        %3652 = vmatprep.mubr.bf16.mxu0 0
        %3653 = vmatmul.mubr.bf16.gmra.mrb[0].mxu0 %v2893
        %v3654 = vpop.f32.mrb[0].mxu0
        %v3655 = vadd.f32 0.0, %v3654
        %v3656 = vpop.f32.mrb[0].mxu0
        %v3657 = vpop.f32.mrb[0].mxu0
        %v3658 = vadd.f32 0.0, %v3657
        %v3659 = vpop.f32.mrb[0].mxu0
        %3660 = vmatprep.mubr.bf16.mxu0 0
        %3661 = vmatmul.mubr.bf16.gmra.mrb[0].mxu0 %v2895
        %v3662 = vpop.f32.mrb[0].mxu0
        %v3663 = vadd.f32 0.0, %v3662
        %v3664 = vpop.f32.mrb[0].mxu0
        %v3665 = vpop.f32.mrb[0].mxu0
        %v3666 = vadd.f32 0.0, %v3665
        %v3667 = vpop.f32.mrb[0].mxu0
        %3668 = vmatprep.mubr.bf16.mxu0 0
        %3669 = vmatmul.mubr.bf16.gmra.mrb[0].mxu0 %v2897
        %v3670 = vpop.f32.mrb[0].mxu0
        %v3671 = vadd.f32 0.0, %v3670
        %v3672 = vpop.f32.mrb[0].mxu0
        %v3673 = vpop.f32.mrb[0].mxu0
        %v3674 = vadd.f32 0.0, %v3673
        %v3675 = vpop.f32.mrb[0].mxu0
        %3676 = vmatprep.mubr.bf16.mxu0 0
        %3677 = vmatmul.mubr.bf16.gmra.mrb[0].mxu0 %v2899
        %v3678 = vpop.f32.mrb[0].mxu0
        %v3679 = vadd.f32 0.0, %v3678
        %v3680 = vpop.f32.mrb[0].mxu0
        %v3681 = vpop.f32.mrb[0].mxu0
        %v3682 = vadd.f32 0.0, %v3681
        %v3683 = vpop.f32.mrb[0].mxu0
        %3684 = vmatprep.mubr.bf16.mxu0 0
        %3685 = vmatmul.mubr.bf16.gmra.mrb[0].mxu0 %v2901
        %v3686 = vpop.f32.mrb[0].mxu0
        %v3687 = vadd.f32 0.0, %v3686
        %v3688 = vpop.f32.mrb[0].mxu0
        %v3689 = vpop.f32.mrb[0].mxu0
        %v3690 = vadd.f32 0.0, %v3689
        %v3691 = vpop.f32.mrb[0].mxu0
        %3692 = vmatprep.mubr.bf16.mxu0 0
        %3693 = vmatmul.mubr.bf16.gmra.mrb[0].mxu0 %v2903
        %v3694 = vpop.f32.mrb[0].mxu0
        %v3695 = vadd.f32 0.0, %v3694
        %v3696 = vpop.f32.mrb[0].mxu0
        %v3697 = vpop.f32.mrb[0].mxu0
        %v3698 = vadd.f32 0.0, %v3697
        %v3699 = vpop.f32.mrb[0].mxu0
        %3700 = vdwg.mxu0
        %v3701 = vadd.f32 %v3523, %v3639
        %v3702 = vadd.f32 %v3524, %v3642
        %v3703 = vadd.f32 %v3525, %v3647
        %v3704 = vadd.f32 %v3526, %v3650
        %v3705 = vadd.f32 %v3527, %v3655
        %v3706 = vadd.f32 %v3528, %v3658
        %v3707 = vadd.f32 %v3529, %v3663
        %v3708 = vadd.f32 %v3530, %v3666
        %v3709 = vadd.f32 %v3531, %v3671
        %v3710 = vadd.f32 %v3532, %v3674
        %v3711 = vadd.f32 %v3533, %v3679
        %v3712 = vadd.f32 %v3534, %v3682
        %v3713 = vadd.f32 %v3535, %v3687
        %v3714 = vadd.f32 %v3536, %v3690
        %v3715 = vadd.f32 %v3537, %v3695
        %v3716 = vadd.f32 %v3538, %v3698
        %s3717 = scalar_lea.vmem [#allocation3], 256
        %v3718 = vld [vmem:[%s3717] sm:$0xf]
        %v3719 = vld [vmem:[%s3717 + $0x4] sm:$0xf]
        %v3720 = vld [vmem:[%s3717 + $0x8] sm:$0xf]
        %v3721 = vld [vmem:[%s3717 + $0xc] sm:$0xf]
        %v3722 = vld [vmem:[%s3717 + $0x10] sm:$0xf]
        %v3723 = vld [vmem:[%s3717 + $0x14] sm:$0xf]
        %v3724 = vld [vmem:[%s3717 + $0x18] sm:$0xf]
        %v3725 = vld [vmem:[%s3717 + $0x1c] sm:$0xf]
        %v3726 = vld [vmem:[%s3717 + $0x20] sm:$0xf]
        %v3727 = vld [vmem:[%s3717 + $0x24] sm:$0xf]
        %v3728 = vld [vmem:[%s3717 + $0x28] sm:$0xf]
        %v3729 = vld [vmem:[%s3717 + $0x2c] sm:$0xf]
        %v3730 = vld [vmem:[%s3717 + $0x30] sm:$0xf]
        %v3731 = vld [vmem:[%s3717 + $0x34] sm:$0xf]
        %v3732 = vld [vmem:[%s3717 + $0x38] sm:$0xf]
        %v3733 = vld [vmem:[%s3717 + $0x3c] sm:$0xf]
        %v3750 = vunpack.c.l.b16 %v3718
        %v3751 = vunpack.c.l.b16 %v3719
        %v3752 = vunpack.c.l.b16 %v3720
        %v3753 = vunpack.c.l.b16 %v3721
        %v3754 = vunpack.c.l.b16 %v3722
        %v3755 = vunpack.c.l.b16 %v3723
        %v3756 = vunpack.c.l.b16 %v3724
        %v3757 = vunpack.c.l.b16 %v3725
        %v3758 = vunpack.c.l.b16 %v3726
        %v3759 = vunpack.c.l.b16 %v3727
        %v3760 = vunpack.c.l.b16 %v3728
        %v3761 = vunpack.c.l.b16 %v3729
        %v3762 = vunpack.c.l.b16 %v3730
        %v3763 = vunpack.c.l.b16 %v3731
        %v3764 = vunpack.c.l.b16 %v3732
        %v3765 = vunpack.c.l.b16 %v3733
        %v3766 = vpack.c.b16 %v3751, %v3750
        %v3767 = vpack.c.b16 %v3753, %v3752
        %v3768 = vpack.c.b16 %v3755, %v3754
        %v3769 = vpack.c.b16 %v3757, %v3756
        %v3770 = vpack.c.b16 %v3759, %v3758
        %v3771 = vpack.c.b16 %v3761, %v3760
        %v3772 = vpack.c.b16 %v3763, %v3762
        %v3773 = vpack.c.b16 %v3765, %v3764
        %3782 = vmatprep.subr.bf16.mxu0 0
        %3783 = vmatpush1.bf16.msra.mxu0 %v3766
        %3784 = vmatprep.subr.bf16.mxu0 0
        %3785 = vmatpush1.bf16.msra.mxu0 %v3767
        %3786 = vmatprep.subr.bf16.mxu0 0
        %3787 = vmatpush1.bf16.msra.mxu0 %v3768
        %3788 = vmatprep.subr.bf16.mxu0 0
        %3789 = vmatpush1.bf16.msra.mxu0 %v3769
        %3790 = vmatprep.subr.bf16.mxu0 0
        %3791 = vmatpush1.bf16.msra.mxu0 %v3770
        %3792 = vmatprep.subr.bf16.mxu0 0
        %3793 = vmatpush1.bf16.msra.mxu0 %v3771
        %3794 = vmatprep.subr.bf16.mxu0 0
        %3795 = vmatpush1.bf16.msra.mxu0 %v3772
        %3796 = vmatprep.subr.bf16.mxu0 0
        %3797 = vmatpush1.bf16.msra.mxu0 %v3773
        %3798 = vmatprep.subr.bf16.mxu0 0
        %3799 = vmatpush1.bf16.msra.mxu0 0
        %3800 = vmatprep.subr.bf16.mxu0 0
        %3801 = vmatpush1.bf16.msra.mxu0 0
        %3802 = vmatprep.subr.bf16.mxu0 0
        %3803 = vmatpush1.bf16.msra.mxu0 0
        %3804 = vmatprep.subr.bf16.mxu0 0
        %3805 = vmatpush1.bf16.msra.mxu0 0
        %3806 = vmatprep.subr.bf16.mxu0 0
        %3807 = vmatpush1.bf16.msra.mxu0 0
        %3808 = vmatprep.subr.bf16.mxu0 0
        %3809 = vmatpush1.bf16.msra.mxu0 0
        %3810 = vmatprep.subr.bf16.mxu0 0
        %3811 = vmatpush1.bf16.msra.mxu0 0
        %3812 = vmatprep.subr.bf16.mxu0 0
        %3813 = vmatpush1.bf16.msra.mxu0 0
        %3814 = vmatprep.mubr.bf16.mxu0 0
        %3815 = vmatmul.mubr.bf16.gmra.mrb[0].mxu0 %v2891
        %v3816 = vpop.f32.mrb[0].mxu0
        %v3817 = vadd.f32 0.0, %v3816
        %v3818 = vpop.f32.mrb[0].mxu0
        %v3819 = vpop.f32.mrb[0].mxu0
        %v3820 = vadd.f32 0.0, %v3819
        %v3821 = vpop.f32.mrb[0].mxu0
        %3822 = vmatprep.mubr.bf16.mxu0 0
        %3823 = vmatmul.mubr.bf16.gmra.mrb[0].mxu0 %v2893
        %v3824 = vpop.f32.mrb[0].mxu0
        %v3825 = vadd.f32 0.0, %v3824
        %v3826 = vpop.f32.mrb[0].mxu0
        %v3827 = vpop.f32.mrb[0].mxu0
        %v3828 = vadd.f32 0.0, %v3827
        %v3829 = vpop.f32.mrb[0].mxu0
        %3830 = vmatprep.mubr.bf16.mxu0 0
        %3831 = vmatmul.mubr.bf16.gmra.mrb[0].mxu0 %v2895
        %v3832 = vpop.f32.mrb[0].mxu0
        %v3833 = vadd.f32 0.0, %v3832
        %v3834 = vpop.f32.mrb[0].mxu0
        %v3835 = vpop.f32.mrb[0].mxu0
        %v3836 = vadd.f32 0.0, %v3835
        %v3837 = vpop.f32.mrb[0].mxu0
        %3838 = vmatprep.mubr.bf16.mxu0 0
        %3839 = vmatmul.mubr.bf16.gmra.mrb[0].mxu0 %v2897
        %v3840 = vpop.f32.mrb[0].mxu0
        %v3841 = vadd.f32 0.0, %v3840
        %v3842 = vpop.f32.mrb[0].mxu0
        %v3843 = vpop.f32.mrb[0].mxu0
        %v3844 = vadd.f32 0.0, %v3843
        %v3845 = vpop.f32.mrb[0].mxu0
        %3846 = vmatprep.mubr.bf16.mxu0 0
        %3847 = vmatmul.mubr.bf16.gmra.mrb[0].mxu0 %v2899
        %v3848 = vpop.f32.mrb[0].mxu0
        %v3849 = vadd.f32 0.0, %v3848
        %v3850 = vpop.f32.mrb[0].mxu0
        %v3851 = vpop.f32.mrb[0].mxu0
        %v3852 = vadd.f32 0.0, %v3851
        %v3853 = vpop.f32.mrb[0].mxu0
        %3854 = vmatprep.mubr.bf16.mxu0 0
        %3855 = vmatmul.mubr.bf16.gmra.mrb[0].mxu0 %v2901
        %v3856 = vpop.f32.mrb[0].mxu0
        %v3857 = vadd.f32 0.0, %v3856
        %v3858 = vpop.f32.mrb[0].mxu0
        %v3859 = vpop.f32.mrb[0].mxu0
        %v3860 = vadd.f32 0.0, %v3859
        %v3861 = vpop.f32.mrb[0].mxu0
        %3862 = vmatprep.mubr.bf16.mxu0 0
        %3863 = vmatmul.mubr.bf16.gmra.mrb[0].mxu0 %v2903
        %v3864 = vpop.f32.mrb[0].mxu0
        %v3865 = vadd.f32 0.0, %v3864
        %v3866 = vpop.f32.mrb[0].mxu0
        %v3867 = vpop.f32.mrb[0].mxu0
        %v3868 = vadd.f32 0.0, %v3867
        %v3869 = vpop.f32.mrb[0].mxu0
        %3870 = vmatprep.mubr.bf16.mxu0 0
        %3871 = vmatmul.mubr.bf16.gmra.mrb[0].mxu0 %v2905
        %v3872 = vpop.f32.mrb[0].mxu0
        %v3873 = vadd.f32 0.0, %v3872
        %v3874 = vpop.f32.mrb[0].mxu0
        %v3875 = vpop.f32.mrb[0].mxu0
        %v3876 = vadd.f32 0.0, %v3875
        %v3877 = vpop.f32.mrb[0].mxu0
        %3878 = vdwg.mxu0
        %v3879 = vadd.f32 %v3701, %v3817
        %v3880 = vadd.f32 %v3702, %v3820
        %v3881 = vadd.f32 %v3703, %v3825
        %v3882 = vadd.f32 %v3704, %v3828
        %v3883 = vadd.f32 %v3705, %v3833
        %v3884 = vadd.f32 %v3706, %v3836
        %v3885 = vadd.f32 %v3707, %v3841
        %v3886 = vadd.f32 %v3708, %v3844
        %v3887 = vadd.f32 %v3709, %v3849
        %v3888 = vadd.f32 %v3710, %v3852
        %v3889 = vadd.f32 %v3711, %v3857
        %v3890 = vadd.f32 %v3712, %v3860
        %v3891 = vadd.f32 %v3713, %v3865
        %v3892 = vadd.f32 %v3714, %v3868
        %v3893 = vadd.f32 %v3715, %v3873
        %v3894 = vadd.f32 %v3716, %v3876
        %s3895 = scalar_lea.vmem [#allocation3], 448
        %v3896 = vld [vmem:[%s3895] sm:$0xf]
        %v3897 = vld [vmem:[%s3895 + $0x4] sm:$0xf]
        %v3898 = vld [vmem:[%s3895 + $0x8] sm:$0xf]
        %v3899 = vld [vmem:[%s3895 + $0xc] sm:$0xf]
        %v3900 = vld [vmem:[%s3895 + $0x10] sm:$0xf]
        %v3901 = vld [vmem:[%s3895 + $0x14] sm:$0xf]
        %v3902 = vld [vmem:[%s3895 + $0x18] sm:$0xf]
        %v3903 = vld [vmem:[%s3895 + $0x1c] sm:$0xf]
        %v3904 = vld [vmem:[%s3895 + $0x20] sm:$0xf]
        %v3905 = vld [vmem:[%s3895 + $0x24] sm:$0xf]
        %v3906 = vld [vmem:[%s3895 + $0x28] sm:$0xf]
        %v3907 = vld [vmem:[%s3895 + $0x2c] sm:$0xf]
        %v3908 = vld [vmem:[%s3895 + $0x30] sm:$0xf]
        %v3909 = vld [vmem:[%s3895 + $0x34] sm:$0xf]
        %v3910 = vld [vmem:[%s3895 + $0x38] sm:$0xf]
        %v3911 = vld [vmem:[%s3895 + $0x3c] sm:$0xf]
        %v3928 = vunpack.c.l.b16 %v3896
        %v3929 = vunpack.c.l.b16 %v3897
        %v3930 = vunpack.c.l.b16 %v3898
        %v3931 = vunpack.c.l.b16 %v3899
        %v3932 = vunpack.c.l.b16 %v3900
        %v3933 = vunpack.c.l.b16 %v3901
        %v3934 = vunpack.c.l.b16 %v3902
        %v3935 = vunpack.c.l.b16 %v3903
        %v3936 = vunpack.c.l.b16 %v3904
        %v3937 = vunpack.c.l.b16 %v3905
        %v3938 = vunpack.c.l.b16 %v3906
        %v3939 = vunpack.c.l.b16 %v3907
        %v3940 = vunpack.c.l.b16 %v3908
        %v3941 = vunpack.c.l.b16 %v3909
        %v3942 = vunpack.c.l.b16 %v3910
        %v3943 = vunpack.c.l.b16 %v3911
        %v3944 = vpack.c.b16 %v3929, %v3928
        %v3945 = vpack.c.b16 %v3931, %v3930
        %v3946 = vpack.c.b16 %v3933, %v3932
        %v3947 = vpack.c.b16 %v3935, %v3934
        %v3948 = vpack.c.b16 %v3937, %v3936
        %v3949 = vpack.c.b16 %v3939, %v3938
        %v3950 = vpack.c.b16 %v3941, %v3940
        %v3951 = vpack.c.b16 %v3943, %v3942
        %3960 = vmatprep.subr.bf16.mxu0 0
        %3961 = vmatpush1.bf16.msra.mxu0 %v3944
        %3962 = vmatprep.subr.bf16.mxu0 0
        %3963 = vmatpush1.bf16.msra.mxu0 %v3945
        %3964 = vmatprep.subr.bf16.mxu0 0
        %3965 = vmatpush1.bf16.msra.mxu0 %v3946
        %3966 = vmatprep.subr.bf16.mxu0 0
        %3967 = vmatpush1.bf16.msra.mxu0 %v3947
        %3968 = vmatprep.subr.bf16.mxu0 0
        %3969 = vmatpush1.bf16.msra.mxu0 %v3948
        %3970 = vmatprep.subr.bf16.mxu0 0
        %3971 = vmatpush1.bf16.msra.mxu0 %v3949
        %3972 = vmatprep.subr.bf16.mxu0 0
        %3973 = vmatpush1.bf16.msra.mxu0 %v3950
        %3974 = vmatprep.subr.bf16.mxu0 0
        %3975 = vmatpush1.bf16.msra.mxu0 %v3951
        %3976 = vmatprep.subr.bf16.mxu0 0
        %3977 = vmatpush1.bf16.msra.mxu0 0
        %3978 = vmatprep.subr.bf16.mxu0 0
        %3979 = vmatpush1.bf16.msra.mxu0 0
        %3980 = vmatprep.subr.bf16.mxu0 0
        %3981 = vmatpush1.bf16.msra.mxu0 0
        %3982 = vmatprep.subr.bf16.mxu0 0
        %3983 = vmatpush1.bf16.msra.mxu0 0
        %3984 = vmatprep.subr.bf16.mxu0 0
        %3985 = vmatpush1.bf16.msra.mxu0 0
        %3986 = vmatprep.subr.bf16.mxu0 0
        %3987 = vmatpush1.bf16.msra.mxu0 0
        %3988 = vmatprep.subr.bf16.mxu0 0
        %3989 = vmatpush1.bf16.msra.mxu0 0
        %3990 = vmatprep.subr.bf16.mxu0 0
        %3991 = vmatpush1.bf16.msra.mxu0 0
        %3992 = vmatprep.mubr.bf16.mxu0 0
        %3993 = vmatmul.mubr.bf16.gmra.mrb[0].mxu0 %v2893
        %v3994 = vpop.f32.mrb[0].mxu0
        %v3995 = vadd.f32 0.0, %v3994
        %v3996 = vpop.f32.mrb[0].mxu0
        %v3997 = vpop.f32.mrb[0].mxu0
        %v3998 = vadd.f32 0.0, %v3997
        %v3999 = vpop.f32.mrb[0].mxu0
        %4000 = vmatprep.mubr.bf16.mxu0 0
        %4001 = vmatmul.mubr.bf16.gmra.mrb[0].mxu0 %v2895
        %v4002 = vpop.f32.mrb[0].mxu0
        %v4003 = vadd.f32 0.0, %v4002
        %v4004 = vpop.f32.mrb[0].mxu0
        %v4005 = vpop.f32.mrb[0].mxu0
        %v4006 = vadd.f32 0.0, %v4005
        %v4007 = vpop.f32.mrb[0].mxu0
        %4008 = vmatprep.mubr.bf16.mxu0 0
        %4009 = vmatmul.mubr.bf16.gmra.mrb[0].mxu0 %v2897
        %v4010 = vpop.f32.mrb[0].mxu0
        %v4011 = vadd.f32 0.0, %v4010
        %v4012 = vpop.f32.mrb[0].mxu0
        %v4013 = vpop.f32.mrb[0].mxu0
        %v4014 = vadd.f32 0.0, %v4013
        %v4015 = vpop.f32.mrb[0].mxu0
        %4016 = vmatprep.mubr.bf16.mxu0 0
        %4017 = vmatmul.mubr.bf16.gmra.mrb[0].mxu0 %v2899
        %v4018 = vpop.f32.mrb[0].mxu0
        %v4019 = vadd.f32 0.0, %v4018
        %v4020 = vpop.f32.mrb[0].mxu0
        %v4021 = vpop.f32.mrb[0].mxu0
        %v4022 = vadd.f32 0.0, %v4021
        %v4023 = vpop.f32.mrb[0].mxu0
        %4024 = vmatprep.mubr.bf16.mxu0 0
        %4025 = vmatmul.mubr.bf16.gmra.mrb[0].mxu0 %v2901
        %v4026 = vpop.f32.mrb[0].mxu0
        %v4027 = vadd.f32 0.0, %v4026
        %v4028 = vpop.f32.mrb[0].mxu0
        %v4029 = vpop.f32.mrb[0].mxu0
        %v4030 = vadd.f32 0.0, %v4029
        %v4031 = vpop.f32.mrb[0].mxu0
        %4032 = vmatprep.mubr.bf16.mxu0 0
        %4033 = vmatmul.mubr.bf16.gmra.mrb[0].mxu0 %v2903
        %v4034 = vpop.f32.mrb[0].mxu0
        %v4035 = vadd.f32 0.0, %v4034
        %v4036 = vpop.f32.mrb[0].mxu0
        %v4037 = vpop.f32.mrb[0].mxu0
        %v4038 = vadd.f32 0.0, %v4037
        %v4039 = vpop.f32.mrb[0].mxu0
        %4040 = vmatprep.mubr.bf16.mxu0 0
        %4041 = vmatmul.mubr.bf16.gmra.mrb[0].mxu0 %v2905
        %v4042 = vpop.f32.mrb[0].mxu0
        %v4043 = vadd.f32 0.0, %v4042
        %v4044 = vpop.f32.mrb[0].mxu0
        %v4045 = vpop.f32.mrb[0].mxu0
        %v4046 = vadd.f32 0.0, %v4045
        %v4047 = vpop.f32.mrb[0].mxu0
        %4048 = vmatprep.mubr.bf16.mxu0 0
        %4049 = vmatmul.mubr.bf16.gmra.mrb[0].mxu0 %v2907
        %v4050 = vpop.f32.mrb[0].mxu0
        %v4051 = vadd.f32 0.0, %v4050
        %v4052 = vpop.f32.mrb[0].mxu0
        %v4053 = vpop.f32.mrb[0].mxu0
        %v4054 = vadd.f32 0.0, %v4053
        %v4055 = vpop.f32.mrb[0].mxu0
        %4056 = vdwg.mxu0
        %v4057 = vadd.f32 %v3879, %v3995
        %v4058 = vadd.f32 %v3880, %v3998
        %v4059 = vadd.f32 %v3881, %v4003
        %v4060 = vadd.f32 %v3882, %v4006
        %v4061 = vadd.f32 %v3883, %v4011
        %v4062 = vadd.f32 %v3884, %v4014
        %v4063 = vadd.f32 %v3885, %v4019
        %v4064 = vadd.f32 %v3886, %v4022
        %v4065 = vadd.f32 %v3887, %v4027
        %v4066 = vadd.f32 %v3888, %v4030
        %v4067 = vadd.f32 %v3889, %v4035
        %v4068 = vadd.f32 %v3890, %v4038
        %v4069 = vadd.f32 %v3891, %v4043
        %v4070 = vadd.f32 %v3892, %v4046
        %v4071 = vadd.f32 %v3893, %v4051
        %v4072 = vadd.f32 %v3894, %v4054
        %v4073 = vld [vmem:[#allocation2 + $0x8] sm:$0xff]
        %v4074 = vld [vmem:[#allocation2 + $0x10] sm:$0x1]
        %v4075 = vld [vmem:[#allocation2 + $0x20] sm:$0xff]
        %v4076 = vld [vmem:[#allocation2 + $0x28] sm:$0x1]
        %v4077 = vld [vmem:[#allocation2 + $0x38] sm:$0xff]
        %v4078 = vld [vmem:[#allocation2 + $0x40] sm:$0x1]
        %v4079 = vld [vmem:[#allocation2 + $0x50] sm:$0xff]
        %v4080 = vld [vmem:[#allocation2 + $0x58] sm:$0x1]
        %v4081 = vld [vmem:[#allocation2 + $0x68] sm:$0xff]
        %v4082 = vld [vmem:[#allocation2 + $0x70] sm:$0x1]
        %v4083 = vld [vmem:[#allocation2 + $0x80] sm:$0xff]
        %v4084 = vld [vmem:[#allocation2 + $0x88] sm:$0x1]
        %v4085 = vld [vmem:[#allocation2 + $0x98] sm:$0xff]
        %v4086 = vld [vmem:[#allocation2 + $0xa0] sm:$0x1]
        %v4087 = vld [vmem:[#allocation2 + $0xb0] sm:$0xff]
        %v4088 = vld [vmem:[#allocation2 + $0xb8] sm:$0x1]
        %v4089 = vld [vmem:[#allocation2 + $0xc8] sm:$0xff]
        %v4090 = vld [vmem:[#allocation2 + $0xd0] sm:$0x1]
        %v4091 = vld [vmem:[#allocation2 + $0xe0] sm:$0xff]
        %v4092 = vld [vmem:[#allocation2 + $0xe8] sm:$0x1]
        %vm4093 = vsmask.f32 7424
        %v4095 = vshrl.u32 %v4073, 16
        %v4097 = vshll.u32 %v4073, 16
        %v4099 = vrot.slane %v4097, 1
        %v4100 = vor.u32 %v4095, %v4099
        %v4102 = vshll.u32 %v4074, 16
        %v4104 = vrot.slane %v4102, 1
        %v4105 = vsel %vm4093, %v4100, %v4104
        %v4107 = vshrl.u32 %v4075, 16
        %v4109 = vshll.u32 %v4075, 16
        %v4111 = vrot.slane %v4109, 1
        %v4112 = vor.u32 %v4107, %v4111
        %v4114 = vshll.u32 %v4076, 16
        %v4116 = vrot.slane %v4114, 1
        %v4117 = vsel %vm4093, %v4112, %v4116
        %v4119 = vshrl.u32 %v4077, 16
        %v4121 = vshll.u32 %v4077, 16
        %v4123 = vrot.slane %v4121, 1
        %v4124 = vor.u32 %v4119, %v4123
        %v4126 = vshll.u32 %v4078, 16
        %v4128 = vrot.slane %v4126, 1
        %v4129 = vsel %vm4093, %v4124, %v4128
        %v4131 = vshrl.u32 %v4079, 16
        %v4133 = vshll.u32 %v4079, 16
        %v4135 = vrot.slane %v4133, 1
        %v4136 = vor.u32 %v4131, %v4135
        %v4138 = vshll.u32 %v4080, 16
        %v4140 = vrot.slane %v4138, 1
        %v4141 = vsel %vm4093, %v4136, %v4140
        %v4143 = vshrl.u32 %v4081, 16
        %v4145 = vshll.u32 %v4081, 16
        %v4147 = vrot.slane %v4145, 1
        %v4148 = vor.u32 %v4143, %v4147
        %v4150 = vshll.u32 %v4082, 16
        %v4152 = vrot.slane %v4150, 1
        %v4153 = vsel %vm4093, %v4148, %v4152
        %v4155 = vshrl.u32 %v4083, 16
        %v4157 = vshll.u32 %v4083, 16
        %v4159 = vrot.slane %v4157, 1
        %v4160 = vor.u32 %v4155, %v4159
        %v4162 = vshll.u32 %v4084, 16
        %v4164 = vrot.slane %v4162, 1
        %v4165 = vsel %vm4093, %v4160, %v4164
        %v4167 = vshrl.u32 %v4085, 16
        %v4169 = vshll.u32 %v4085, 16
        %v4171 = vrot.slane %v4169, 1
        %v4172 = vor.u32 %v4167, %v4171
        %v4174 = vshll.u32 %v4086, 16
        %v4176 = vrot.slane %v4174, 1
        %v4177 = vsel %vm4093, %v4172, %v4176
        %v4179 = vshrl.u32 %v4087, 16
        %v4181 = vshll.u32 %v4087, 16
        %v4183 = vrot.slane %v4181, 1
        %v4184 = vor.u32 %v4179, %v4183
        %v4186 = vshll.u32 %v4088, 16
        %v4188 = vrot.slane %v4186, 1
        %v4189 = vsel %vm4093, %v4184, %v4188
        %s4198 = scalar_lea.vmem [#allocation3], 128
        %v4199 = vld [vmem:[%s4198] sm:$0xf]
        %v4200 = vld [vmem:[%s4198 + $0x4] sm:$0xf]
        %v4201 = vld [vmem:[%s4198 + $0x8] sm:$0xf]
        %v4202 = vld [vmem:[%s4198 + $0xc] sm:$0xf]
        %v4203 = vld [vmem:[%s4198 + $0x10] sm:$0xf]
        %v4204 = vld [vmem:[%s4198 + $0x14] sm:$0xf]
        %v4205 = vld [vmem:[%s4198 + $0x18] sm:$0xf]
        %v4206 = vld [vmem:[%s4198 + $0x1c] sm:$0xf]
        %v4207 = vld [vmem:[%s4198 + $0x20] sm:$0xf]
        %v4208 = vld [vmem:[%s4198 + $0x24] sm:$0xf]
        %v4209 = vld [vmem:[%s4198 + $0x28] sm:$0xf]
        %v4210 = vld [vmem:[%s4198 + $0x2c] sm:$0xf]
        %v4211 = vld [vmem:[%s4198 + $0x30] sm:$0xf]
        %v4212 = vld [vmem:[%s4198 + $0x34] sm:$0xf]
        %v4213 = vld [vmem:[%s4198 + $0x38] sm:$0xf]
        %v4214 = vld [vmem:[%s4198 + $0x3c] sm:$0xf]
        %v4231 = vunpack.c.l.b16 %v4199
        %v4232 = vunpack.c.l.b16 %v4200
        %v4233 = vunpack.c.l.b16 %v4201
        %v4234 = vunpack.c.l.b16 %v4202
        %v4235 = vunpack.c.l.b16 %v4203
        %v4236 = vunpack.c.l.b16 %v4204
        %v4237 = vunpack.c.l.b16 %v4205
        %v4238 = vunpack.c.l.b16 %v4206
        %v4239 = vunpack.c.l.b16 %v4207
        %v4240 = vunpack.c.l.b16 %v4208
        %v4241 = vunpack.c.l.b16 %v4209
        %v4242 = vunpack.c.l.b16 %v4210
        %v4243 = vunpack.c.l.b16 %v4211
        %v4244 = vunpack.c.l.b16 %v4212
        %v4245 = vunpack.c.l.b16 %v4213
        %v4246 = vunpack.c.l.b16 %v4214
        %v4247 = vpack.c.b16 %v4232, %v4231
        %v4248 = vpack.c.b16 %v4234, %v4233
        %v4249 = vpack.c.b16 %v4236, %v4235
        %v4250 = vpack.c.b16 %v4238, %v4237
        %v4251 = vpack.c.b16 %v4240, %v4239
        %v4252 = vpack.c.b16 %v4242, %v4241
        %v4253 = vpack.c.b16 %v4244, %v4243
        %v4254 = vpack.c.b16 %v4246, %v4245
        %4263 = vmatprep.subr.bf16.mxu0 0
        %4264 = vmatpush1.bf16.msra.mxu0 %v4247
        %4265 = vmatprep.subr.bf16.mxu0 0
        %4266 = vmatpush1.bf16.msra.mxu0 %v4248
        %4267 = vmatprep.subr.bf16.mxu0 0
        %4268 = vmatpush1.bf16.msra.mxu0 %v4249
        %4269 = vmatprep.subr.bf16.mxu0 0
        %4270 = vmatpush1.bf16.msra.mxu0 %v4250
        %4271 = vmatprep.subr.bf16.mxu0 0
        %4272 = vmatpush1.bf16.msra.mxu0 %v4251
        %4273 = vmatprep.subr.bf16.mxu0 0
        %4274 = vmatpush1.bf16.msra.mxu0 %v4252
        %4275 = vmatprep.subr.bf16.mxu0 0
        %4276 = vmatpush1.bf16.msra.mxu0 %v4253
        %4277 = vmatprep.subr.bf16.mxu0 0
        %4278 = vmatpush1.bf16.msra.mxu0 %v4254
        %4279 = vmatprep.subr.bf16.mxu0 0
        %4280 = vmatpush1.bf16.msra.mxu0 0
        %4281 = vmatprep.subr.bf16.mxu0 0
        %4282 = vmatpush1.bf16.msra.mxu0 0
        %4283 = vmatprep.subr.bf16.mxu0 0
        %4284 = vmatpush1.bf16.msra.mxu0 0
        %4285 = vmatprep.subr.bf16.mxu0 0
        %4286 = vmatpush1.bf16.msra.mxu0 0
        %4287 = vmatprep.subr.bf16.mxu0 0
        %4288 = vmatpush1.bf16.msra.mxu0 0
        %4289 = vmatprep.subr.bf16.mxu0 0
        %4290 = vmatpush1.bf16.msra.mxu0 0
        %4291 = vmatprep.subr.bf16.mxu0 0
        %4292 = vmatpush1.bf16.msra.mxu0 0
        %4293 = vmatprep.subr.bf16.mxu0 0
        %4294 = vmatpush1.bf16.msra.mxu0 0
        %4295 = vmatprep.mubr.bf16.mxu0 0
        %4296 = vmatmul.mubr.bf16.gmra.mrb[0].mxu0 %v4105
        %v4297 = vpop.f32.mrb[0].mxu0
        %v4298 = vadd.f32 0.0, %v4297
        %v4299 = vpop.f32.mrb[0].mxu0
        %v4300 = vpop.f32.mrb[0].mxu0
        %v4301 = vadd.f32 0.0, %v4300
        %v4302 = vpop.f32.mrb[0].mxu0
        %4303 = vmatprep.mubr.bf16.mxu0 0
        %4304 = vmatmul.mubr.bf16.gmra.mrb[0].mxu0 %v4117
        %v4305 = vpop.f32.mrb[0].mxu0
        %v4306 = vadd.f32 0.0, %v4305
        %v4307 = vpop.f32.mrb[0].mxu0
        %v4308 = vpop.f32.mrb[0].mxu0
        %v4309 = vadd.f32 0.0, %v4308
        %v4310 = vpop.f32.mrb[0].mxu0
        %4311 = vmatprep.mubr.bf16.mxu0 0
        %4312 = vmatmul.mubr.bf16.gmra.mrb[0].mxu0 %v4129
        %v4313 = vpop.f32.mrb[0].mxu0
        %v4314 = vadd.f32 0.0, %v4313
        %v4315 = vpop.f32.mrb[0].mxu0
        %v4316 = vpop.f32.mrb[0].mxu0
        %v4317 = vadd.f32 0.0, %v4316
        %v4318 = vpop.f32.mrb[0].mxu0
        %4319 = vmatprep.mubr.bf16.mxu0 0
        %4320 = vmatmul.mubr.bf16.gmra.mrb[0].mxu0 %v4141
        %v4321 = vpop.f32.mrb[0].mxu0
        %v4322 = vadd.f32 0.0, %v4321
        %v4323 = vpop.f32.mrb[0].mxu0
        %v4324 = vpop.f32.mrb[0].mxu0
        %v4325 = vadd.f32 0.0, %v4324
        %v4326 = vpop.f32.mrb[0].mxu0
        %4327 = vmatprep.mubr.bf16.mxu0 0
        %4328 = vmatmul.mubr.bf16.gmra.mrb[0].mxu0 %v4153
        %v4329 = vpop.f32.mrb[0].mxu0
        %v4330 = vadd.f32 0.0, %v4329
        %v4331 = vpop.f32.mrb[0].mxu0
        %v4332 = vpop.f32.mrb[0].mxu0
        %v4333 = vadd.f32 0.0, %v4332
        %v4334 = vpop.f32.mrb[0].mxu0
        %4335 = vmatprep.mubr.bf16.mxu0 0
        %4336 = vmatmul.mubr.bf16.gmra.mrb[0].mxu0 %v4165
        %v4337 = vpop.f32.mrb[0].mxu0
        %v4338 = vadd.f32 0.0, %v4337
        %v4339 = vpop.f32.mrb[0].mxu0
        %v4340 = vpop.f32.mrb[0].mxu0
        %v4341 = vadd.f32 0.0, %v4340
        %v4342 = vpop.f32.mrb[0].mxu0
        %4343 = vmatprep.mubr.bf16.mxu0 0
        %4344 = vmatmul.mubr.bf16.gmra.mrb[0].mxu0 %v4177
        %v4345 = vpop.f32.mrb[0].mxu0
        %v4346 = vadd.f32 0.0, %v4345
        %v4347 = vpop.f32.mrb[0].mxu0
        %v4348 = vpop.f32.mrb[0].mxu0
        %v4349 = vadd.f32 0.0, %v4348
        %v4350 = vpop.f32.mrb[0].mxu0
        %4351 = vmatprep.mubr.bf16.mxu0 0
        %4352 = vmatmul.mubr.bf16.gmra.mrb[0].mxu0 %v4189
        %v4353 = vpop.f32.mrb[0].mxu0
        %v4354 = vadd.f32 0.0, %v4353
        %v4355 = vpop.f32.mrb[0].mxu0
        %v4356 = vpop.f32.mrb[0].mxu0
        %v4357 = vadd.f32 0.0, %v4356
        %v4358 = vpop.f32.mrb[0].mxu0
        %4359 = vdwg.mxu0
        %v4360 = vadd.f32 %v4057, %v4298
        %v4361 = vadd.f32 %v4058, %v4301
        %v4362 = vadd.f32 %v4059, %v4306
        %v4363 = vadd.f32 %v4060, %v4309
        %v4364 = vadd.f32 %v4061, %v4314
        %v4365 = vadd.f32 %v4062, %v4317
        %v4366 = vadd.f32 %v4063, %v4322
        %v4367 = vadd.f32 %v4064, %v4325
        %v4368 = vadd.f32 %v4065, %v4330
        %v4369 = vadd.f32 %v4066, %v4333
        %v4370 = vadd.f32 %v4067, %v4338
        %v4371 = vadd.f32 %v4068, %v4341
        %v4372 = vadd.f32 %v4069, %v4346
        %v4373 = vadd.f32 %v4070, %v4349
        %v4374 = vadd.f32 %v4071, %v4354
        %v4375 = vadd.f32 %v4072, %v4357
        %v4377 = vshrl.u32 %v4089, 16
        %v4379 = vshll.u32 %v4089, 16
        %v4381 = vrot.slane %v4379, 1
        %v4382 = vor.u32 %v4377, %v4381
        %v4384 = vshll.u32 %v4090, 16
        %v4386 = vrot.slane %v4384, 1
        %v4387 = vsel %vm4093, %v4382, %v4386
        %s4389 = scalar_lea.vmem [#allocation3], 320
        %v4390 = vld [vmem:[%s4389] sm:$0xf]
        %v4391 = vld [vmem:[%s4389 + $0x4] sm:$0xf]
        %v4392 = vld [vmem:[%s4389 + $0x8] sm:$0xf]
        %v4393 = vld [vmem:[%s4389 + $0xc] sm:$0xf]
        %v4394 = vld [vmem:[%s4389 + $0x10] sm:$0xf]
        %v4395 = vld [vmem:[%s4389 + $0x14] sm:$0xf]
        %v4396 = vld [vmem:[%s4389 + $0x18] sm:$0xf]
        %v4397 = vld [vmem:[%s4389 + $0x1c] sm:$0xf]
        %v4398 = vld [vmem:[%s4389 + $0x20] sm:$0xf]
        %v4399 = vld [vmem:[%s4389 + $0x24] sm:$0xf]
        %v4400 = vld [vmem:[%s4389 + $0x28] sm:$0xf]
        %v4401 = vld [vmem:[%s4389 + $0x2c] sm:$0xf]
        %v4402 = vld [vmem:[%s4389 + $0x30] sm:$0xf]
        %v4403 = vld [vmem:[%s4389 + $0x34] sm:$0xf]
        %v4404 = vld [vmem:[%s4389 + $0x38] sm:$0xf]
        %v4405 = vld [vmem:[%s4389 + $0x3c] sm:$0xf]
        %v4422 = vunpack.c.l.b16 %v4390
        %v4423 = vunpack.c.l.b16 %v4391
        %v4424 = vunpack.c.l.b16 %v4392
        %v4425 = vunpack.c.l.b16 %v4393
        %v4426 = vunpack.c.l.b16 %v4394
        %v4427 = vunpack.c.l.b16 %v4395
        %v4428 = vunpack.c.l.b16 %v4396
        %v4429 = vunpack.c.l.b16 %v4397
        %v4430 = vunpack.c.l.b16 %v4398
        %v4431 = vunpack.c.l.b16 %v4399
        %v4432 = vunpack.c.l.b16 %v4400
        %v4433 = vunpack.c.l.b16 %v4401
        %v4434 = vunpack.c.l.b16 %v4402
        %v4435 = vunpack.c.l.b16 %v4403
        %v4436 = vunpack.c.l.b16 %v4404
        %v4437 = vunpack.c.l.b16 %v4405
        %v4438 = vpack.c.b16 %v4423, %v4422
        %v4439 = vpack.c.b16 %v4425, %v4424
        %v4440 = vpack.c.b16 %v4427, %v4426
        %v4441 = vpack.c.b16 %v4429, %v4428
        %v4442 = vpack.c.b16 %v4431, %v4430
        %v4443 = vpack.c.b16 %v4433, %v4432
        %v4444 = vpack.c.b16 %v4435, %v4434
        %v4445 = vpack.c.b16 %v4437, %v4436
        %4454 = vmatprep.subr.bf16.mxu0 0
        %4455 = vmatpush1.bf16.msra.mxu0 %v4438
        %4456 = vmatprep.subr.bf16.mxu0 0
        %4457 = vmatpush1.bf16.msra.mxu0 %v4439
        %4458 = vmatprep.subr.bf16.mxu0 0
        %4459 = vmatpush1.bf16.msra.mxu0 %v4440
        %4460 = vmatprep.subr.bf16.mxu0 0
        %4461 = vmatpush1.bf16.msra.mxu0 %v4441
        %4462 = vmatprep.subr.bf16.mxu0 0
        %4463 = vmatpush1.bf16.msra.mxu0 %v4442
        %4464 = vmatprep.subr.bf16.mxu0 0
        %4465 = vmatpush1.bf16.msra.mxu0 %v4443
        %4466 = vmatprep.subr.bf16.mxu0 0
        %4467 = vmatpush1.bf16.msra.mxu0 %v4444
        %4468 = vmatprep.subr.bf16.mxu0 0
        %4469 = vmatpush1.bf16.msra.mxu0 %v4445
        %4470 = vmatprep.subr.bf16.mxu0 0
        %4471 = vmatpush1.bf16.msra.mxu0 0
        %4472 = vmatprep.subr.bf16.mxu0 0
        %4473 = vmatpush1.bf16.msra.mxu0 0
        %4474 = vmatprep.subr.bf16.mxu0 0
        %4475 = vmatpush1.bf16.msra.mxu0 0
        %4476 = vmatprep.subr.bf16.mxu0 0
        %4477 = vmatpush1.bf16.msra.mxu0 0
        %4478 = vmatprep.subr.bf16.mxu0 0
        %4479 = vmatpush1.bf16.msra.mxu0 0
        %4480 = vmatprep.subr.bf16.mxu0 0
        %4481 = vmatpush1.bf16.msra.mxu0 0
        %4482 = vmatprep.subr.bf16.mxu0 0
        %4483 = vmatpush1.bf16.msra.mxu0 0
        %4484 = vmatprep.subr.bf16.mxu0 0
        %4485 = vmatpush1.bf16.msra.mxu0 0
        %4486 = vmatprep.mubr.bf16.mxu0 0
        %4487 = vmatmul.mubr.bf16.gmra.mrb[0].mxu0 %v4117
        %v4488 = vpop.f32.mrb[0].mxu0
        %v4489 = vadd.f32 0.0, %v4488
        %v4490 = vpop.f32.mrb[0].mxu0
        %v4491 = vpop.f32.mrb[0].mxu0
        %v4492 = vadd.f32 0.0, %v4491
        %v4493 = vpop.f32.mrb[0].mxu0
        %4494 = vmatprep.mubr.bf16.mxu0 0
        %4495 = vmatmul.mubr.bf16.gmra.mrb[0].mxu0 %v4129
        %v4496 = vpop.f32.mrb[0].mxu0
        %v4497 = vadd.f32 0.0, %v4496
        %v4498 = vpop.f32.mrb[0].mxu0
        %v4499 = vpop.f32.mrb[0].mxu0
        %v4500 = vadd.f32 0.0, %v4499
        %v4501 = vpop.f32.mrb[0].mxu0
        %4502 = vmatprep.mubr.bf16.mxu0 0
        %4503 = vmatmul.mubr.bf16.gmra.mrb[0].mxu0 %v4141
        %v4504 = vpop.f32.mrb[0].mxu0
        %v4505 = vadd.f32 0.0, %v4504
        %v4506 = vpop.f32.mrb[0].mxu0
        %v4507 = vpop.f32.mrb[0].mxu0
        %v4508 = vadd.f32 0.0, %v4507
        %v4509 = vpop.f32.mrb[0].mxu0
        %4510 = vmatprep.mubr.bf16.mxu0 0
        %4511 = vmatmul.mubr.bf16.gmra.mrb[0].mxu0 %v4153
        %v4512 = vpop.f32.mrb[0].mxu0
        %v4513 = vadd.f32 0.0, %v4512
        %v4514 = vpop.f32.mrb[0].mxu0
        %v4515 = vpop.f32.mrb[0].mxu0
        %v4516 = vadd.f32 0.0, %v4515
        %v4517 = vpop.f32.mrb[0].mxu0
        %4518 = vmatprep.mubr.bf16.mxu0 0
        %4519 = vmatmul.mubr.bf16.gmra.mrb[0].mxu0 %v4165
        %v4520 = vpop.f32.mrb[0].mxu0
        %v4521 = vadd.f32 0.0, %v4520
        %v4522 = vpop.f32.mrb[0].mxu0
        %v4523 = vpop.f32.mrb[0].mxu0
        %v4524 = vadd.f32 0.0, %v4523
        %v4525 = vpop.f32.mrb[0].mxu0
        %4526 = vmatprep.mubr.bf16.mxu0 0
        %4527 = vmatmul.mubr.bf16.gmra.mrb[0].mxu0 %v4177
        %v4528 = vpop.f32.mrb[0].mxu0
        %v4529 = vadd.f32 0.0, %v4528
        %v4530 = vpop.f32.mrb[0].mxu0
        %v4531 = vpop.f32.mrb[0].mxu0
        %v4532 = vadd.f32 0.0, %v4531
        %v4533 = vpop.f32.mrb[0].mxu0
        %4534 = vmatprep.mubr.bf16.mxu0 0
        %4535 = vmatmul.mubr.bf16.gmra.mrb[0].mxu0 %v4189
        %v4536 = vpop.f32.mrb[0].mxu0
        %v4537 = vadd.f32 0.0, %v4536
        %v4538 = vpop.f32.mrb[0].mxu0
        %v4539 = vpop.f32.mrb[0].mxu0
        %v4540 = vadd.f32 0.0, %v4539
        %v4541 = vpop.f32.mrb[0].mxu0
        %4542 = vmatprep.mubr.bf16.mxu0 0
        %4543 = vmatmul.mubr.bf16.gmra.mrb[0].mxu0 %v4387
        %v4544 = vpop.f32.mrb[0].mxu0
        %v4545 = vadd.f32 0.0, %v4544
        %v4546 = vpop.f32.mrb[0].mxu0
        %v4547 = vpop.f32.mrb[0].mxu0
        %v4548 = vadd.f32 0.0, %v4547
        %v4549 = vpop.f32.mrb[0].mxu0
        %4550 = vdwg.mxu0
        %v4551 = vadd.f32 %v4360, %v4489
        %v4552 = vadd.f32 %v4361, %v4492
        %v4553 = vadd.f32 %v4362, %v4497
        %v4554 = vadd.f32 %v4363, %v4500
        %v4555 = vadd.f32 %v4364, %v4505
        %v4556 = vadd.f32 %v4365, %v4508
        %v4557 = vadd.f32 %v4366, %v4513
        %v4558 = vadd.f32 %v4367, %v4516
        %v4559 = vadd.f32 %v4368, %v4521
        %v4560 = vadd.f32 %v4369, %v4524
        %v4561 = vadd.f32 %v4370, %v4529
        %v4562 = vadd.f32 %v4371, %v4532
        %v4563 = vadd.f32 %v4372, %v4537
        %v4564 = vadd.f32 %v4373, %v4540
        %v4565 = vadd.f32 %v4374, %v4545
        %v4566 = vadd.f32 %v4375, %v4548
        %v4568 = vshrl.u32 %v4091, 16
        %v4570 = vshll.u32 %v4091, 16
        %v4572 = vrot.slane %v4570, 1
        %v4573 = vor.u32 %v4568, %v4572
        %v4575 = vshll.u32 %v4092, 16
        %v4577 = vrot.slane %v4575, 1
        %v4578 = vsel %vm4093, %v4573, %v4577
        %s4580 = scalar_lea.vmem [#allocation3], 512
        %v4581 = vld [vmem:[%s4580] sm:$0xf]
        %v4582 = vld [vmem:[%s4580 + $0x4] sm:$0xf]
        %v4583 = vld [vmem:[%s4580 + $0x8] sm:$0xf]
        %v4584 = vld [vmem:[%s4580 + $0xc] sm:$0xf]
        %v4585 = vld [vmem:[%s4580 + $0x10] sm:$0xf]
        %v4586 = vld [vmem:[%s4580 + $0x14] sm:$0xf]
        %v4587 = vld [vmem:[%s4580 + $0x18] sm:$0xf]
        %v4588 = vld [vmem:[%s4580 + $0x1c] sm:$0xf]
        %v4589 = vld [vmem:[%s4580 + $0x20] sm:$0xf]
        %v4590 = vld [vmem:[%s4580 + $0x24] sm:$0xf]
        %v4591 = vld [vmem:[%s4580 + $0x28] sm:$0xf]
        %v4592 = vld [vmem:[%s4580 + $0x2c] sm:$0xf]
        %v4593 = vld [vmem:[%s4580 + $0x30] sm:$0xf]
        %v4594 = vld [vmem:[%s4580 + $0x34] sm:$0xf]
        %v4595 = vld [vmem:[%s4580 + $0x38] sm:$0xf]
        %v4596 = vld [vmem:[%s4580 + $0x3c] sm:$0xf]
        %v4613 = vunpack.c.l.b16 %v4581
        %v4614 = vunpack.c.l.b16 %v4582
        %v4615 = vunpack.c.l.b16 %v4583
        %v4616 = vunpack.c.l.b16 %v4584
        %v4617 = vunpack.c.l.b16 %v4585
        %v4618 = vunpack.c.l.b16 %v4586
        %v4619 = vunpack.c.l.b16 %v4587
        %v4620 = vunpack.c.l.b16 %v4588
        %v4621 = vunpack.c.l.b16 %v4589
        %v4622 = vunpack.c.l.b16 %v4590
        %v4623 = vunpack.c.l.b16 %v4591
        %v4624 = vunpack.c.l.b16 %v4592
        %v4625 = vunpack.c.l.b16 %v4593
        %v4626 = vunpack.c.l.b16 %v4594
        %v4627 = vunpack.c.l.b16 %v4595
        %v4628 = vunpack.c.l.b16 %v4596
        %v4629 = vpack.c.b16 %v4614, %v4613
        %v4630 = vpack.c.b16 %v4616, %v4615
        %v4631 = vpack.c.b16 %v4618, %v4617
        %v4632 = vpack.c.b16 %v4620, %v4619
        %v4633 = vpack.c.b16 %v4622, %v4621
        %v4634 = vpack.c.b16 %v4624, %v4623
        %v4635 = vpack.c.b16 %v4626, %v4625
        %v4636 = vpack.c.b16 %v4628, %v4627
        %4645 = vmatprep.subr.bf16.mxu0 0
        %4646 = vmatpush1.bf16.msra.mxu0 %v4629
        %4647 = vmatprep.subr.bf16.mxu0 0
        %4648 = vmatpush1.bf16.msra.mxu0 %v4630
        %4649 = vmatprep.subr.bf16.mxu0 0
        %4650 = vmatpush1.bf16.msra.mxu0 %v4631
        %4651 = vmatprep.subr.bf16.mxu0 0
        %4652 = vmatpush1.bf16.msra.mxu0 %v4632
        %4653 = vmatprep.subr.bf16.mxu0 0
        %4654 = vmatpush1.bf16.msra.mxu0 %v4633
        %4655 = vmatprep.subr.bf16.mxu0 0
        %4656 = vmatpush1.bf16.msra.mxu0 %v4634
        %4657 = vmatprep.subr.bf16.mxu0 0
        %4658 = vmatpush1.bf16.msra.mxu0 %v4635
        %4659 = vmatprep.subr.bf16.mxu0 0
        %4660 = vmatpush1.bf16.msra.mxu0 %v4636
        %4661 = vmatprep.subr.bf16.mxu0 0
        %4662 = vmatpush1.bf16.msra.mxu0 0
        %4663 = vmatprep.subr.bf16.mxu0 0
        %4664 = vmatpush1.bf16.msra.mxu0 0
        %4665 = vmatprep.subr.bf16.mxu0 0
        %4666 = vmatpush1.bf16.msra.mxu0 0
        %4667 = vmatprep.subr.bf16.mxu0 0
        %4668 = vmatpush1.bf16.msra.mxu0 0
        %4669 = vmatprep.subr.bf16.mxu0 0
        %4670 = vmatpush1.bf16.msra.mxu0 0
        %4671 = vmatprep.subr.bf16.mxu0 0
        %4672 = vmatpush1.bf16.msra.mxu0 0
        %4673 = vmatprep.subr.bf16.mxu0 0
        %4674 = vmatpush1.bf16.msra.mxu0 0
        %4675 = vmatprep.subr.bf16.mxu0 0
        %4676 = vmatpush1.bf16.msra.mxu0 0
        %4677 = vmatprep.mubr.bf16.mxu0 0
        %4678 = vmatmul.mubr.bf16.gmra.mrb[0].mxu0 %v4129
        %v4679 = vpop.f32.mrb[0].mxu0
        %v4680 = vadd.f32 0.0, %v4679
        %v4681 = vpop.f32.mrb[0].mxu0
        %v4682 = vpop.f32.mrb[0].mxu0
        %v4683 = vadd.f32 0.0, %v4682
        %v4684 = vpop.f32.mrb[0].mxu0
        %4685 = vmatprep.mubr.bf16.mxu0 0
        %4686 = vmatmul.mubr.bf16.gmra.mrb[0].mxu0 %v4141
        %v4687 = vpop.f32.mrb[0].mxu0
        %v4688 = vadd.f32 0.0, %v4687
        %v4689 = vpop.f32.mrb[0].mxu0
        %v4690 = vpop.f32.mrb[0].mxu0
        %v4691 = vadd.f32 0.0, %v4690
        %v4692 = vpop.f32.mrb[0].mxu0
        %4693 = vmatprep.mubr.bf16.mxu0 0
        %4694 = vmatmul.mubr.bf16.gmra.mrb[0].mxu0 %v4153
        %v4695 = vpop.f32.mrb[0].mxu0
        %v4696 = vadd.f32 0.0, %v4695
        %v4697 = vpop.f32.mrb[0].mxu0
        %v4698 = vpop.f32.mrb[0].mxu0
        %v4699 = vadd.f32 0.0, %v4698
        %v4700 = vpop.f32.mrb[0].mxu0
        %4701 = vmatprep.mubr.bf16.mxu0 0
        %4702 = vmatmul.mubr.bf16.gmra.mrb[0].mxu0 %v4165
        %v4703 = vpop.f32.mrb[0].mxu0
        %v4704 = vadd.f32 0.0, %v4703
        %v4705 = vpop.f32.mrb[0].mxu0
        %v4706 = vpop.f32.mrb[0].mxu0
        %v4707 = vadd.f32 0.0, %v4706
        %v4708 = vpop.f32.mrb[0].mxu0
        %4709 = vmatprep.mubr.bf16.mxu0 0
        %4710 = vmatmul.mubr.bf16.gmra.mrb[0].mxu0 %v4177
        %v4711 = vpop.f32.mrb[0].mxu0
        %v4712 = vadd.f32 0.0, %v4711
        %v4713 = vpop.f32.mrb[0].mxu0
        %v4714 = vpop.f32.mrb[0].mxu0
        %v4715 = vadd.f32 0.0, %v4714
        %v4716 = vpop.f32.mrb[0].mxu0
        %4717 = vmatprep.mubr.bf16.mxu0 0
        %4718 = vmatmul.mubr.bf16.gmra.mrb[0].mxu0 %v4189
        %v4719 = vpop.f32.mrb[0].mxu0
        %v4720 = vadd.f32 0.0, %v4719
        %v4721 = vpop.f32.mrb[0].mxu0
        %v4722 = vpop.f32.mrb[0].mxu0
        %v4723 = vadd.f32 0.0, %v4722
        %v4724 = vpop.f32.mrb[0].mxu0
        %4725 = vmatprep.mubr.bf16.mxu0 0
        %4726 = vmatmul.mubr.bf16.gmra.mrb[0].mxu0 %v4387
        %v4727 = vpop.f32.mrb[0].mxu0
        %v4728 = vadd.f32 0.0, %v4727
        %v4729 = vpop.f32.mrb[0].mxu0
        %v4730 = vpop.f32.mrb[0].mxu0
        %v4731 = vadd.f32 0.0, %v4730
        %v4732 = vpop.f32.mrb[0].mxu0
        %4733 = vmatprep.mubr.bf16.mxu0 0
        %4734 = vmatmul.mubr.bf16.gmra.mrb[0].mxu0 %v4578
        %v4735 = vpop.f32.mrb[0].mxu0
        %v4736 = vadd.f32 0.0, %v4735
        %v4737 = vpop.f32.mrb[0].mxu0
        %v4738 = vpop.f32.mrb[0].mxu0
        %v4739 = vadd.f32 0.0, %v4738
        %v4740 = vpop.f32.mrb[0].mxu0
        %4741 = vdwg.mxu0
        %v4742 = vadd.f32 %v4551, %v4680
        %v4743 = vadd.f32 %v4552, %v4683
        %v4744 = vadd.f32 %v4553, %v4688
        %v4745 = vadd.f32 %v4554, %v4691
        %v4746 = vadd.f32 %v4555, %v4696
        %v4747 = vadd.f32 %v4556, %v4699
        %v4748 = vadd.f32 %v4557, %v4704
        %v4749 = vadd.f32 %v4558, %v4707
        %v4750 = vadd.f32 %v4559, %v4712
        %v4751 = vadd.f32 %v4560, %v4715
        %v4752 = vadd.f32 %v4561, %v4720
        %v4753 = vadd.f32 %v4562, %v4723
        %v4754 = vadd.f32 %v4563, %v4728
        %v4755 = vadd.f32 %v4564, %v4731
        %v4756 = vadd.f32 %v4565, %v4736
        %v4757 = vadd.f32 %v4566, %v4739
        %s4758 = sadd.s32 %s308, 2
        %s4759 = smul.u32 %s4758, 3
        %s4760 = smul.addr %s4759, 4
        %s4761 = scalar_lea.vmem %s305, %s4760
        %v4762 = vld [vmem:[%s4761] sm:$0xf]
        %v4763 = vld [vmem:[%s4761 + $0x4] sm:$0xf]
        %v4764 = vld [vmem:[%s4761 + $0x8] sm:$0x1]
        %v4765 = vld [vmem:[%s4761 + $0xc] sm:$0xf]
        %v4766 = vld [vmem:[%s4761 + $0x10] sm:$0xf]
        %v4767 = vld [vmem:[%s4761 + $0x14] sm:$0x1]
        %v4768 = vld [vmem:[%s4761 + $0x18] sm:$0xf]
        %v4769 = vld [vmem:[%s4761 + $0x1c] sm:$0xf]
        %v4770 = vld [vmem:[%s4761 + $0x20] sm:$0x1]
        %v4771 = vld [vmem:[%s4761 + $0x24] sm:$0xf]
        %v4772 = vld [vmem:[%s4761 + $0x28] sm:$0xf]
        %v4773 = vld [vmem:[%s4761 + $0x2c] sm:$0x1]
        %v4774 = vld [vmem:[%s4761 + $0x30] sm:$0xf]
        %v4775 = vld [vmem:[%s4761 + $0x34] sm:$0xf]
        %v4776 = vld [vmem:[%s4761 + $0x38] sm:$0x1]
        %v4777 = vld [vmem:[%s4761 + $0x3c] sm:$0xf]
        %v4778 = vld [vmem:[%s4761 + $0x40] sm:$0xf]
        %v4779 = vld [vmem:[%s4761 + $0x44] sm:$0x1]
        %v4780 = vld [vmem:[%s4761 + $0x48] sm:$0xf]
        %v4781 = vld [vmem:[%s4761 + $0x4c] sm:$0xf]
        %v4782 = vld [vmem:[%s4761 + $0x50] sm:$0x1]
        %v4783 = vld [vmem:[%s4761 + $0x54] sm:$0xf]
        %v4784 = vld [vmem:[%s4761 + $0x58] sm:$0xf]
        %v4785 = vld [vmem:[%s4761 + $0x5c] sm:$0x1]
        %v4786 = vunpack.c.l.bf16 %v4762
        %v4787 = vunpack.c.l.bf16 %v4763
        %v4788 = vunpack.c.l.bf16 %v4764
        %v4789 = vunpack.c.l.bf16 %v4765
        %v4790 = vunpack.c.l.bf16 %v4766
        %v4791 = vunpack.c.l.bf16 %v4767
        %v4792 = vunpack.c.l.bf16 %v4768
        %v4793 = vunpack.c.l.bf16 %v4769
        %v4794 = vunpack.c.l.bf16 %v4770
        %v4795 = vunpack.c.l.bf16 %v4771
        %v4796 = vunpack.c.l.bf16 %v4772
        %v4797 = vunpack.c.l.bf16 %v4773
        %v4798 = vunpack.c.l.bf16 %v4774
        %v4799 = vunpack.c.l.bf16 %v4775
        %v4800 = vunpack.c.l.bf16 %v4776
        %v4801 = vunpack.c.l.bf16 %v4777
        %v4802 = vunpack.c.l.bf16 %v4778
        %v4803 = vunpack.c.l.bf16 %v4779
        %v4804 = vunpack.c.l.bf16 %v4780
        %v4805 = vunpack.c.l.bf16 %v4781
        %v4806 = vunpack.c.l.bf16 %v4782
        %v4807 = vunpack.c.l.bf16 %v4783
        %v4808 = vunpack.c.l.bf16 %v4784
        %v4809 = vunpack.c.l.bf16 %v4785
        %vm4834 = vcmask 1046528
        %v4835 = vrot.slane %v4786, 1
        %v4836 = vrot.slane %v4787, 1
        %v4837 = vsel %vm4834, %v4835, %v4836
        %v4838 = vrot.slane %v4788, 1
        %v4839 = vsel %vm4834, %v4836, %v4838
        %v4840 = vrot.slane %v4789, 1
        %v4841 = vrot.slane %v4790, 1
        %v4842 = vsel %vm4834, %v4840, %v4841
        %v4843 = vrot.slane %v4791, 1
        %v4844 = vsel %vm4834, %v4841, %v4843
        %v4845 = vrot.slane %v4792, 1
        %v4846 = vrot.slane %v4793, 1
        %v4847 = vsel %vm4834, %v4845, %v4846
        %v4848 = vrot.slane %v4794, 1
        %v4849 = vsel %vm4834, %v4846, %v4848
        %v4850 = vrot.slane %v4795, 1
        %v4851 = vrot.slane %v4796, 1
        %v4852 = vsel %vm4834, %v4850, %v4851
        %v4853 = vrot.slane %v4797, 1
        %v4854 = vsel %vm4834, %v4851, %v4853
        %v4855 = vrot.slane %v4798, 1
        %v4856 = vrot.slane %v4799, 1
        %v4857 = vsel %vm4834, %v4855, %v4856
        %v4858 = vrot.slane %v4800, 1
        %v4859 = vsel %vm4834, %v4856, %v4858
        %v4860 = vrot.slane %v4801, 1
        %v4861 = vrot.slane %v4802, 1
        %v4862 = vsel %vm4834, %v4860, %v4861
        %v4863 = vrot.slane %v4803, 1
        %v4864 = vsel %vm4834, %v4861, %v4863
        %v4865 = vrot.slane %v4804, 1
        %v4866 = vrot.slane %v4805, 1
        %v4867 = vsel %vm4834, %v4865, %v4866
        %v4868 = vrot.slane %v4806, 1
        %v4869 = vsel %vm4834, %v4866, %v4868
        %v4870 = vrot.slane %v4807, 1
        %v4871 = vrot.slane %v4808, 1
        %v4872 = vsel %vm4834, %v4870, %v4871
        %v4873 = vrot.slane %v4809, 1
        %v4874 = vsel %vm4834, %v4871, %v4873
        %v4891 = vld [vmem:[%s5] sm:$0x1]
        %v4893 = vlaneseq
        %v4894 = vshrl.u32 %v4893, 7
        %v4895 = vsub.s32 0, %v4894
        %v4896 = vrot.slane %v4891, %v4895
        %v4898 = vmul.f32 %v4742, %v4896
        %v4899 = vmul.f32 %v4743, %v4896
        %v4900 = vmul.f32 %v4744, %v4896
        %v4901 = vmul.f32 %v4745, %v4896
        %v4902 = vmul.f32 %v4746, %v4896
        %v4903 = vmul.f32 %v4747, %v4896
        %v4904 = vmul.f32 %v4748, %v4896
        %v4905 = vmul.f32 %v4749, %v4896
        %v4906 = vmul.f32 %v4750, %v4896
        %v4907 = vmul.f32 %v4751, %v4896
        %v4908 = vmul.f32 %v4752, %v4896
        %v4909 = vmul.f32 %v4753, %v4896
        %v4910 = vmul.f32 %v4754, %v4896
        %v4911 = vmul.f32 %v4755, %v4896
        %v4912 = vmul.f32 %v4756, %v4896
        %v4913 = vmul.f32 %v4757, %v4896
        %v4914 = vld [vmem:[%s6] sm:$0x1]
        %v4916 = vlaneseq
        %v4917 = vshrl.u32 %v4916, 7
        %v4918 = vsub.s32 0, %v4917
        %v4919 = vrot.slane %v4914, %v4918
        %v4921 = vadd.f32 %v4898, %v4919
        %v4922 = vadd.f32 %v4899, %v4919
        %v4923 = vadd.f32 %v4900, %v4919
        %v4924 = vadd.f32 %v4901, %v4919
        %v4925 = vadd.f32 %v4902, %v4919
        %v4926 = vadd.f32 %v4903, %v4919
        %v4927 = vadd.f32 %v4904, %v4919
        %v4928 = vadd.f32 %v4905, %v4919
        %v4929 = vadd.f32 %v4906, %v4919
        %v4930 = vadd.f32 %v4907, %v4919
        %v4931 = vadd.f32 %v4908, %v4919
        %v4932 = vadd.f32 %v4909, %v4919
        %v4933 = vadd.f32 %v4910, %v4919
        %v4934 = vadd.f32 %v4911, %v4919
        %v4935 = vadd.f32 %v4912, %v4919
        %v4936 = vadd.f32 %v4913, %v4919
        %v4937 = vadd.f32 %v4921, %v4837
        %v4938 = vadd.f32 %v4922, %v4839
        %v4939 = vadd.f32 %v4923, %v4842
        %v4940 = vadd.f32 %v4924, %v4844
        %v4941 = vadd.f32 %v4925, %v4847
        %v4942 = vadd.f32 %v4926, %v4849
        %v4943 = vadd.f32 %v4927, %v4852
        %v4944 = vadd.f32 %v4928, %v4854
        %v4945 = vadd.f32 %v4929, %v4857
        %v4946 = vadd.f32 %v4930, %v4859
        %v4947 = vadd.f32 %v4931, %v4862
        %v4948 = vadd.f32 %v4932, %v4864
        %v4949 = vadd.f32 %v4933, %v4867
        %v4950 = vadd.f32 %v4934, %v4869
        %v4951 = vadd.f32 %v4935, %v4872
        %v4952 = vadd.f32 %v4936, %v4874
        %v4953 = vmax.f32 %v4937, 0.0
        %v4954 = vmax.f32 %v4938, 0.0
        %v4955 = vmax.f32 %v4939, 0.0
        %v4956 = vmax.f32 %v4940, 0.0
        %v4957 = vmax.f32 %v4941, 0.0
        %v4958 = vmax.f32 %v4942, 0.0
        %v4959 = vmax.f32 %v4943, 0.0
        %v4960 = vmax.f32 %v4944, 0.0
        %v4961 = vmax.f32 %v4945, 0.0
        %v4962 = vmax.f32 %v4946, 0.0
        %v4963 = vmax.f32 %v4947, 0.0
        %v4964 = vmax.f32 %v4948, 0.0
        %v4965 = vmax.f32 %v4949, 0.0
        %v4966 = vmax.f32 %v4950, 0.0
        %v4967 = vmax.f32 %v4951, 0.0
        %v4968 = vmax.f32 %v4952, 0.0
        %4969 = vst [vmem:[%s300] sm:$0xff] %v4953
        %4970 = vst [vmem:[%s300 + $0x8] sm:$0xff] %v4954
        %4971 = vst [vmem:[%s300 + $0x10] sm:$0xff] %v4955
        %4972 = vst [vmem:[%s300 + $0x18] sm:$0xff] %v4956
        %4973 = vst [vmem:[%s300 + $0x20] sm:$0xff] %v4957
        %4974 = vst [vmem:[%s300 + $0x28] sm:$0xff] %v4958
        %4975 = vst [vmem:[%s300 + $0x30] sm:$0xff] %v4959
        %4976 = vst [vmem:[%s300 + $0x38] sm:$0xff] %v4960
        %4977 = vst [vmem:[%s300 + $0x40] sm:$0xff] %v4961
        %4978 = vst [vmem:[%s300 + $0x48] sm:$0xff] %v4962
        %4979 = vst [vmem:[%s300 + $0x50] sm:$0xff] %v4963
        %4980 = vst [vmem:[%s300 + $0x58] sm:$0xff] %v4964
        %4981 = vst [vmem:[%s300 + $0x60] sm:$0xff] %v4965
        %4982 = vst [vmem:[%s300 + $0x68] sm:$0xff] %v4966
        %4983 = vst [vmem:[%s300 + $0x70] sm:$0xff] %v4967
        %4984 = vst [vmem:[%s300 + $0x78] sm:$0xff] %v4968
        %s4985 = sand.u32 %s196, 1
        %s4986 = scalar_lea.sflag [#allocation5], %s4985
        %s4987 = sand.u32 %s196, 1
        %s4988 = smul.addr %s4987, 128
        %s4989 = scalar_lea.vmem [#allocation6], %s4988
        // Predicated region
        $region53: #{tpu_custom_call.1} parent=47 // pred_check
          %p4990 = pneg %p206
        $region54: #{tpu_custom_call.1} parent=47 // pred_check_branch
          %4992 = sbr.rel (%p4990) target = $region56
        $region55: #{tpu_custom_call.1} parent=47 // pred_region
          %s4993 = smul.u32 8, %s27
          %s4995 = ssub.s32 2048, 2048
          %4996 = vsyncadd %s4986, %s4995
          %s4997 = smul.addr %s4993, 2
          %s4998 = smul.addr %s26, 32
          %s4999 = sadd.s32 %s4997, %s4998
          %s5000 = smul.addr %s4999, 128
          %s5001 = scalar_lea.hbm %s7, %s5000
          %s5002 = sshll.u32 %s4989, 4
          %s5003 = int_to_ptr.vmem [resolvable:$true] %s5002
          %5008 = dma.vmem_to_hbm [thread:$0]  %s5003, 2048, %s5001, %s4986, 128, 128, 8
        $region56: #{tpu_custom_call.1} parent=47 // pred_fallthru
          _
      $region48: #{tpu_custom_call.1} parent=5 // pred_fallthru
        _
      %p5009 = scmp.le.s32.totalorder 2, %s17
      // Predicated region
      $region57: #{tpu_custom_call.1} parent=5 // pred_check
        %p5010 = pneg %p5009
      $region58: #{tpu_custom_call.1} parent=5 // pred_check_branch
        %5012 = sbr.rel (%p5010) target = $region60
      $region59: #{tpu_custom_call.1} parent=5 // pred_region
        %s5013 = ssub.s32 %s17, 2
        // Predicated region
        $region61: #{tpu_custom_call.1} parent=59 // pred_check
          %p5014 = pneg %p212
        $region62: #{tpu_custom_call.1} parent=59 // pred_check_branch
          %5016 = sbr.rel (%p5014) target = $region64
        $region63: #{tpu_custom_call.1} parent=59 // pred_region
          %s5017 = sand.u32 %s197, 1
          %s5018 = scalar_lea.sflag [#allocation5], %s5017
          %s5019 = sand.u32 %s197, 1
          %s5020 = smul.addr %s5019, 128
          %s5021 = scalar_lea.vmem [#allocation6], %s5020
          %5022 = dma.done %s5018, 2048
        $region64: #{tpu_custom_call.1} parent=59 // pred_fallthru
          _
      $region60: #{tpu_custom_call.1} parent=5 // pred_fallthru
        _
    $region6: #{tpu_custom_call.1} parent=1 // loop_footer
      %s21 = sadd.s32 1, %s17
    $region7: #{tpu_custom_call.1} parent=1 // loop_footer_branch
      %16 = sbr.rel target = $region3
    $region8: #{tpu_custom_call.1} parent=1 // loop_exit
      _
    %5023 = vsyncpa [#allocation4], 1
    %s5024 = scalar_lea.sflag [#allocation4], 1
    %5025 = vsyncpa %s5024, 1
    %5026 = vsyncpa [#allocation5], 1
    %s5027 = scalar_lea.sflag [#allocation5], 1
    %5028 = vsyncpa %s5027, 1

</llo_original>
